<compile_context>
chip_gen: v6e
topology: v6e:2x2x1
jax: 0.10.0
libtpu: 0.0.40
codegen_flags: <defaults>
</compile_context>

<pallas_src>
import functools

import jax
import jax.numpy as jnp
from jax import lax
from jax.experimental import pallas as pl
from jax.experimental.pallas import tpu as pltpu


def bilstm_fc_kernel(x_ref, wih_ref, whh_ref, b_ref, wfc_ref, bfc_ref, out_ref,
                     gin_ref, hseq_ref, *, Hd):
    """Packed bidirectional LSTM recurrence + output projection.

    Shapes (already padded / packed by the wrapper):
      x_ref:    (T, B, E)       embedded tokens, time-major
      wih_ref:  (E, 4*Hp)       input->gates, gate block k holds fwd lanes [0:Hd],
                                bwd lanes [Hd:2Hd]  (gate order i, f, g, o)
      whh_ref:  (Hp, 4*Hp)      block-diagonal recurrent weights (fwd rows 0:Hd,
                                bwd rows Hd:2Hd)
      b_ref:    (1, 4*Hp)       combined bias (b_ih + b_hh), packed like wih
      wfc_ref:  (Hp, O)         classifier weight (rows 0:Hd fwd, Hd:2Hd bwd)
      bfc_ref:  (1, O)          classifier bias
      out_ref:  (T, B, O)       logits
      gin_ref:  (T, B, 4*Hp)    scratch: precomputed input gates (both directions)
      hseq_ref: (T, B, Hp)      scratch: packed hidden sequence [h_f(t) | h_b(t)]
    """
    T, B, E = x_ref.shape
    Hp = whh_ref.shape[0]
    G = 4 * Hp
    Op = out_ref.shape[2]

    # ---- fused input projection: ONE MXU dot for both directions, bias folded ----
    x_flat = x_ref[...].reshape(T * B, E)
    gin_ref[...] = (jnp.dot(x_flat, wih_ref[...], preferred_element_type=jnp.float32)
                    + b_ref[...]).reshape(T, B, G)

    # Hoist recurrent weights and the direction lane-mask out of the serial loop.
    whh = whh_ref[...]
    col = lax.broadcasted_iota(jnp.int32, (B, G), 1)
    gate_fwd_mask = (col % Hp) < Hd          # True on forward lanes of each gate block

    def sig(v):                              # sigmoid via tanh: 1 EUP op, no divide
        return 0.5 * jnp.tanh(0.5 * v) + 0.5

    def step(t, carry):
        h, c = carry                          # register-resident carries (1 vreg each)
        tb = T - 1 - t
        # Backward lanes consume the time-reversed input projection; this select is
        # independent of h, so it overlaps the previous step's recurrent work.
        gin_use = jnp.where(gate_fwd_mask, gin_ref[t], gin_ref[tb])
        gates = gin_use + jnp.dot(h, whh, preferred_element_type=jnp.float32)
        i = sig(gates[:, 0 * Hp:1 * Hp])
        f = sig(gates[:, 1 * Hp:2 * Hp])
        g = jnp.tanh(gates[:, 2 * Hp:3 * Hp])
        o = sig(gates[:, 3 * Hp:4 * Hp])
        c_new = f * c + i * g
        h_new = o * jnp.tanh(c_new)
        # fwd half belongs to sequence position t, bwd half to position T-1-t.
        hseq_ref[t, :, 0:Hd] = h_new[:, 0:Hd]
        hseq_ref[tb, :, Hd:Hp] = h_new[:, Hd:Hp]   # padded lanes (>=2Hd) are exactly 0
        return (h_new, c_new)

    h0 = jnp.zeros((B, Hp), jnp.float32)
    c0 = jnp.zeros((B, Hp), jnp.float32)
    lax.fori_loop(0, T, step, (h0, c0), unroll=min(T, 8))

    # ---- single lane-dense FC pass over all timesteps ----
    h_flat = hseq_ref[...].reshape(T * B, Hp)
    logits = jnp.dot(h_flat, wfc_ref[...], preferred_element_type=jnp.float32) + bfc_ref[...]
    out_ref[...] = logits.reshape(T, B, Op)


def _round_up(x, m):
    return ((x + m - 1) // m) * m


def _pack_gate_lanes(w_f, w_b, H, Hp):
    """(R, 4H) fwd & bwd -> (R, 4*Hp): gate block k holds fwd in [0:H], bwd in [H:2H]."""
    R = w_f.shape[0]
    out = jnp.zeros((R, 4 * Hp), jnp.float32)
    for k in range(4):
        out = out.at[:, k * Hp:k * Hp + H].set(w_f[:, k * H:(k + 1) * H])
        out = out.at[:, k * Hp + H:k * Hp + 2 * H].set(w_b[:, k * H:(k + 1) * H])
    return out


def bilstm_pos_tagger_forward(tokens, params):
    """tokens: (B, T) int32. Returns logits (B, T, output_dim) float32."""
    B, T = tokens.shape
    E = params["embedding"].shape[1]
    H = params["whh_f"].shape[0]            # per-direction hidden (hidden_dim // 2)
    O = params["wfc"].shape[1]

    f32 = jnp.float32
    E_pad = _round_up(E, 128)
    Hp = _round_up(2 * H, 128)              # packed hidden lanes (fwd | bwd | zero-pad)
    O_pad = _round_up(O, 128)
    B_pad = _round_up(max(B, 8), 8)

    # ---- pack weights: both directions share one 128-lane group per gate ----
    wih_p = _pack_gate_lanes(params["wih_f"].astype(f32), params["wih_b"].astype(f32), H, Hp)
    wih_p = jnp.pad(wih_p, ((0, E_pad - E), (0, 0)))

    whh_f = params["whh_f"].astype(f32)
    whh_b = params["whh_b"].astype(f32)
    whh_p = jnp.zeros((Hp, 4 * Hp), f32)    # block-diagonal per gate block
    for k in range(4):
        whh_p = whh_p.at[0:H, k * Hp:k * Hp + H].set(whh_f[:, k * H:(k + 1) * H])
        whh_p = whh_p.at[H:2 * H, k * Hp + H:k * Hp + 2 * H].set(whh_b[:, k * H:(k + 1) * H])

    b_p = _pack_gate_lanes(params["b_f"].astype(f32), params["b_b"].astype(f32), H, Hp)

    wfc = params["wfc"].astype(f32)
    wfc_p = jnp.zeros((Hp, O_pad), f32)
    wfc_p = wfc_p.at[0:H, 0:O].set(wfc[0:H])
    wfc_p = wfc_p.at[H:2 * H, 0:O].set(wfc[H:2 * H])
    bfc_p = jnp.pad(params["bfc"].astype(f32), ((0, 0), (0, O_pad - O)))

    # Embedding lookup (glue, plain JAX gather). padding_idx row is zero in the table.
    emb_table = jnp.pad(params["embedding"].astype(f32), ((0, 0), (0, E_pad - E)))
    embedded = jnp.take(emb_table, tokens, axis=0)                   # (B, T, E_pad)
    x = jnp.transpose(embedded, (1, 0, 2))                           # (T, B, E_pad)
    x = jnp.pad(x, ((0, 0), (0, B_pad - B), (0, 0)))                 # (T, B_pad, E_pad)

    vmem = pl.BlockSpec(memory_space=pltpu.MemorySpace.VMEM)
    out_tbo = pl.pallas_call(
        functools.partial(bilstm_fc_kernel, Hd=H),
        out_shape=jax.ShapeDtypeStruct((T, B_pad, O_pad), f32),
        in_specs=[vmem] * 6,
        out_specs=vmem,
        scratch_shapes=[
            pltpu.VMEM((T, B_pad, 4 * Hp), f32),   # packed input-gate precompute
            pltpu.VMEM((T, B_pad, Hp), f32),       # packed hidden sequence
        ],
    )(x, wih_p, whh_p, b_p, wfc_p, bfc_p)

    out = jnp.transpose(out_tbo, (1, 0, 2))                           # (B_pad, T, O_pad)
    return out[:B, :, :O]                                             # (B, T, O)


def reference_forward(tokens, params):
    """Pure-JAX reference replicating nn.Embedding -> nn.LSTM(bidirectional) -> nn.Linear."""
    emb = jnp.take(params["embedding"], tokens, axis=0)               # (B, T, E)
    B, T, E = emb.shape
    H = params["whh_f"].shape[0]

    def run_dir(x_seq, wih, whh, b):
        def step(carry, x_t):
            h, c = carry
            gates = x_t @ wih + h @ whh + b[0]
            i = jax.nn.sigmoid(gates[:, :H])
            f = jax.nn.sigmoid(gates[:, H:2 * H])
            g = jnp.tanh(gates[:, 2 * H:3 * H])
            o = jax.nn.sigmoid(gates[:, 3 * H:])
            c = f * c + i * g
            h = o * jnp.tanh(c)
            return (h, c), h

        h0 = jnp.zeros((B, H), jnp.float32)
        c0 = jnp.zeros((B, H), jnp.float32)
        _, hs = lax.scan(step, (h0, c0), jnp.transpose(x_seq, (1, 0, 2)))
        return jnp.transpose(hs, (1, 0, 2))                           # (B, T, H)

    hf = run_dir(emb, params["wih_f"], params["whh_f"], params["b_f"])
    hb = run_dir(emb[:, ::-1], params["wih_b"], params["whh_b"], params["b_b"])[:, ::-1]
    outputs = jnp.concatenate([hf, hb], axis=-1)                      # (B, T, 2H)
    return outputs @ params["wfc"] + params["bfc"][0]


def init_params(key, vocab_size, embedding_dim, hidden_dim, output_dim, pad_idx):
    H = hidden_dim // 2
    E = embedding_dim
    ks = jax.random.split(key, 12)
    s = 1.0 / jnp.sqrt(jnp.float32(H))

    def u(k, shape, scale):
        return jax.random.uniform(k, shape, jnp.float32, -scale, scale)

    embedding = jax.random.normal(ks[0], (vocab_size, E), jnp.float32)
    embedding = embedding.at[pad_idx].set(0.0)                        # padding_idx row = 0

    params = {
        "embedding": embedding,
        # forward-direction LSTM (weights stored transposed, gate order [i, f, g, o])
        "wih_f": u(ks[1], (E, 4 * H), s),
        "whh_f": u(ks[2], (H, 4 * H), s),
        "b_f":   u(ks[3], (1, 4 * H), s) + u(ks[4], (1, 4 * H), s),   # b_ih + b_hh
        # backward-direction LSTM
        "wih_b": u(ks[5], (E, 4 * H), s),
        "whh_b": u(ks[6], (H, 4 * H), s),
        "b_b":   u(ks[7], (1, 4 * H), s) + u(ks[8], (1, 4 * H), s),
        # final linear (hidden_dim -> output_dim), stored transposed
        "wfc": u(ks[9], (2 * H, output_dim), 1.0 / jnp.sqrt(jnp.float32(2 * H))),
        "bfc": u(ks[10], (1, output_dim), 1.0 / jnp.sqrt(jnp.float32(2 * H))),
    }
    return params


if __name__ == "__main__":
    vocab_size = 50
    embedding_dim = 100
    hidden_dim = 128      # bidirectional -> per-direction hidden = 64
    output_dim = 12       # number of POS tags
    pad_idx = 0
    B, T = 2, 8

    key = jax.random.PRNGKey(0)
    pkey, tkey = jax.random.split(key)
    params = init_params(pkey, vocab_size, embedding_dim, hidden_dim, output_dim, pad_idx)
    tokens = jax.random.randint(tkey, (B, T), 0, vocab_size, dtype=jnp.int32)

    out = bilstm_pos_tagger_forward(tokens, params)
    out = jax.block_until_ready(out)

    ref = jax.block_until_ready(reference_forward(tokens, params))
    assert out.shape == (B, T, output_dim), out.shape
    assert jnp.allclose(out, ref, atol=1e-4, rtol=1e-4), float(jnp.max(jnp.abs(out - ref)))

    print("KERNEL_OK")
</pallas_src>

<mosaic_0001>
module attributes {stable_mosaic.version = 11 : i64} {
  func.func @bilstm_fc_kernel(%arg0: memref<8x8x128xf32, #tpu.memory_space<vmem>>, %arg1: memref<128x512xf32, #tpu.memory_space<vmem>>, %arg2: memref<128x512xf32, #tpu.memory_space<vmem>>, %arg3: memref<1x512xf32, #tpu.memory_space<vmem>>, %arg4: memref<128x128xf32, #tpu.memory_space<vmem>>, %arg5: memref<1x128xf32, #tpu.memory_space<vmem>>, %arg6: memref<8x8x128xf32, #tpu.memory_space<vmem>>, %arg7: memref<8x8x512xf32, #tpu.memory_space<vmem>>, %arg8: memref<8x8x128xf32, #tpu.memory_space<vmem>>) attributes {dimension_semantics = [], scalar_prefetch = 0 : i64, scratch_operands = 2 : i64, tpu.core_type = #tpu.core_type<tc>} {
    %c0 = arith.constant 0 : index
    %c0_0 = arith.constant 0 : index
    %c0_1 = arith.constant 0 : index
    %0 = vector.load %arg0[%c0, %c0_0, %c0_1] : memref<8x8x128xf32, #tpu.memory_space<vmem>>, vector<8x8x128xf32>
    %1 = vector.shape_cast %0 : vector<8x8x128xf32> to vector<64x128xf32>
    %c0_2 = arith.constant 0 : index
    %c0_3 = arith.constant 0 : index
    %2 = vector.load %arg1[%c0_2, %c0_3] : memref<128x512xf32, #tpu.memory_space<vmem>>, vector<128x512xf32>
    %cst = arith.constant dense<0.000000e+00> : vector<64x512xf32>
    %3 = tpu.matmul %1, %2, %cst {dimension_numbers = #tpu.dot_dimension_numbers<[1], [0], [0], [1], [0, 0, 1, 1], [], []>} : vector<64x128xf32>, vector<128x512xf32>, vector<64x512xf32> -> vector<64x512xf32>
    %c0_4 = arith.constant 0 : index
    %c0_5 = arith.constant 0 : index
    %4 = vector.load %arg3[%c0_4, %c0_5] : memref<1x512xf32, #tpu.memory_space<vmem>>, vector<1x512xf32>
    %5 = vector.broadcast %4 : vector<1x512xf32> to vector<64x512xf32>
    %6 = arith.addf %3, %5 : vector<64x512xf32>
    %7 = vector.shape_cast %6 : vector<64x512xf32> to vector<8x8x512xf32>
    %c0_6 = arith.constant 0 : index
    %c0_7 = arith.constant 0 : index
    %c0_8 = arith.constant 0 : index
    %8 = vector.load %arg7[%c0_6, %c0_7, %c0_8] : memref<8x8x512xf32, #tpu.memory_space<vmem>>, vector<8x8x512xf32>
    tpu.vector_store %arg7[%c0_6, %c0_7, %c0_8], %7 {strides = array<i32>} : memref<8x8x512xf32, #tpu.memory_space<vmem>>, vector<8x8x512xf32>,
    %c0_9 = arith.constant 0 : index
    %c0_10 = arith.constant 0 : index
    %9 = vector.load %arg2[%c0_9, %c0_10] : memref<128x512xf32, #tpu.memory_space<vmem>>, vector<128x512xf32>
    %10 = tpu.iota {dimensions = array<i32: 1>} : vector<8x512xi32>
    %c128_i32 = arith.constant 128 : i32
    %c0_i32 = arith.constant 0 : i32
    %11 = arith.cmpi eq, %c128_i32, %c0_i32 : i32
    %c1_i32 = arith.constant 1 : i32
    %12 = arith.select %11, %c1_i32, %c128_i32 : i32
    %13 = vector.broadcast %12 : i32 to vector<8x512xi32>
    %14 = arith.remsi %10, %13 : vector<8x512xi32>
    %c0_i32_11 = arith.constant 0 : i32
    %15 = vector.broadcast %c0_i32_11 : i32 to vector<8x512xi32>
    %16 = arith.cmpi ne, %14, %15 : vector<8x512xi32>
    %c0_i32_12 = arith.constant 0 : i32
    %17 = vector.broadcast %c0_i32_12 : i32 to vector<8x512xi32>
    %18 = arith.cmpi slt, %14, %17 : vector<8x512xi32>
    %c0_i32_13 = arith.constant 0 : i32
    %19 = arith.cmpi slt, %12, %c0_i32_13 : i32
    %20 = vector.broadcast %19 : i1 to vector<8x512xi1>
    %21 = vector.broadcast %20 : vector<8x512xi1> to vector<8x512xi1>
    %22 = arith.xori %18, %21 : vector<8x512xi1>
    %23 = arith.andi %22, %16 : vector<8x512xi1>
    %24 = vector.broadcast %12 : i32 to vector<8x512xi32>
    %25 = arith.addi %14, %24 : vector<8x512xi32>
    %26 = arith.select %23, %25, %14 : vector<8x512xi1>, vector<8x512xi32>
    %c64_i32 = arith.constant 64 : i32
    %27 = vector.broadcast %c64_i32 : i32 to vector<8x512xi32>
    %28 = arith.cmpi slt, %26, %27 : vector<8x512xi32>
    %cst_14 = arith.constant 0.000000e+00 : f32
    %29 = vector.broadcast %cst_14 : f32 to vector<8x128xf32>
    %cst_15 = arith.constant 0.000000e+00 : f32
    %30 = vector.broadcast %cst_15 : f32 to vector<8x128xf32>
    %c0_i32_16 = arith.constant 0 : i32
    %c7_i32 = arith.constant 7 : i32
    %31 = arith.subi %c7_i32, %c0_i32_16 : i32
    %32 = arith.index_cast %c0_i32_16 : i32 to index
    %c0_17 = arith.constant 0 : index
    %c0_18 = arith.constant 0 : index
    %33 = vector.load %arg7[%32, %c0_17, %c0_18] : memref<8x8x512xf32, #tpu.memory_space<vmem>>, vector<1x8x512xf32>
    %34 = vector.shape_cast %33 : vector<1x8x512xf32> to vector<8x512xf32>
    %35 = arith.index_cast %31 : i32 to index
    %c0_19 = arith.constant 0 : index
    %c0_20 = arith.constant 0 : index
    %36 = vector.load %arg7[%35, %c0_19, %c0_20] : memref<8x8x512xf32, #tpu.memory_space<vmem>>, vector<1x8x512xf32>
    %37 = vector.shape_cast %36 : vector<1x8x512xf32> to vector<8x512xf32>
    %38 = arith.select %28, %34, %37 : vector<8x512xi1>, vector<8x512xf32>
    %cst_21 = arith.constant dense<0.000000e+00> : vector<8x512xf32>
    %39 = tpu.matmul %29, %9, %cst_21 {dimension_numbers = #tpu.dot_dimension_numbers<[1], [0], [0], [1], [0, 0, 1, 1], [], []>} : vector<8x128xf32>, vector<128x512xf32>, vector<8x512xf32> -> vector<8x512xf32>
    %40 = arith.addf %38, %39 : vector<8x512xf32>
    %41 = vector.extract_strided_slice %40 {offsets = [0, 0], sizes = [8, 128], strides = [1, 1]} : vector<8x512xf32> to vector<8x128xf32>
    %cst_22 = arith.constant 5.000000e-01 : f32
    %42 = vector.broadcast %cst_22 : f32 to vector<8x128xf32>
    %43 = arith.mulf %42, %41 : vector<8x128xf32>
    %44 = math.tanh %43 : vector<8x128xf32>
    %cst_23 = arith.constant 5.000000e-01 : f32
    %45 = vector.broadcast %cst_23 : f32 to vector<8x128xf32>
    %46 = arith.mulf %45, %44 : vector<8x128xf32>
    %cst_24 = arith.constant 5.000000e-01 : f32
    %47 = vector.broadcast %cst_24 : f32 to vector<8x128xf32>
    %48 = arith.addf %46, %47 : vector<8x128xf32>
    %49 = vector.extract_strided_slice %40 {offsets = [0, 128], sizes = [8, 128], strides = [1, 1]} : vector<8x512xf32> to vector<8x128xf32>
    %cst_25 = arith.constant 5.000000e-01 : f32
    %50 = vector.broadcast %cst_25 : f32 to vector<8x128xf32>
    %51 = arith.mulf %50, %49 : vector<8x128xf32>
    %52 = math.tanh %51 : vector<8x128xf32>
    %cst_26 = arith.constant 5.000000e-01 : f32
    %53 = vector.broadcast %cst_26 : f32 to vector<8x128xf32>
    %54 = arith.mulf %53, %52 : vector<8x128xf32>
    %cst_27 = arith.constant 5.000000e-01 : f32
    %55 = vector.broadcast %cst_27 : f32 to vector<8x128xf32>
    %56 = arith.addf %54, %55 : vector<8x128xf32>
    %57 = vector.extract_strided_slice %40 {offsets = [0, 256], sizes = [8, 128], strides = [1, 1]} : vector<8x512xf32> to vector<8x128xf32>
    %58 = math.tanh %57 : vector<8x128xf32>
    %59 = vector.extract_strided_slice %40 {offsets = [0, 384], sizes = [8, 128], strides = [1, 1]} : vector<8x512xf32> to vector<8x128xf32>
    %cst_28 = arith.constant 5.000000e-01 : f32
    %60 = vector.broadcast %cst_28 : f32 to vector<8x128xf32>
    %61 = arith.mulf %60, %59 : vector<8x128xf32>
    %62 = math.tanh %61 : vector<8x128xf32>
    %cst_29 = arith.constant 5.000000e-01 : f32
    %63 = vector.broadcast %cst_29 : f32 to vector<8x128xf32>
    %64 = arith.mulf %63, %62 : vector<8x128xf32>
    %cst_30 = arith.constant 5.000000e-01 : f32
    %65 = vector.broadcast %cst_30 : f32 to vector<8x128xf32>
    %66 = arith.addf %64, %65 : vector<8x128xf32>
    %67 = arith.mulf %56, %30 : vector<8x128xf32>
    %68 = arith.mulf %48, %58 : vector<8x128xf32>
    %69 = arith.addf %67, %68 : vector<8x128xf32>
    %70 = math.tanh %69 : vector<8x128xf32>
    %71 = arith.mulf %66, %70 : vector<8x128xf32>
    %72 = vector.extract_strided_slice %71 {offsets = [0, 0], sizes = [8, 64], strides = [1, 1]} : vector<8x128xf32> to vector<8x64xf32>
    %73 = arith.index_cast %c0_i32_16 : i32 to index
    %c0_31 = arith.constant 0 : index
    %c0_32 = arith.constant 0 : index
    %74 = vector.load %arg8[%73, %c0_31, %c0_32] : memref<8x8x128xf32, #tpu.memory_space<vmem>>, vector<1x8x64xf32>
    %75 = vector.shape_cast %74 : vector<1x8x64xf32> to vector<8x64xf32>
    %76 = vector.shape_cast %72 : vector<8x64xf32> to vector<1x8x64xf32>
    tpu.vector_store %arg8[%73, %c0_31, %c0_32], %76 {strides = array<i32>} : memref<8x8x128xf32, #tpu.memory_space<vmem>>, vector<1x8x64xf32>,
    %77 = vector.extract_strided_slice %71 {offsets = [0, 64], sizes = [8, 64], strides = [1, 1]} : vector<8x128xf32> to vector<8x64xf32>
    %78 = arith.index_cast %31 : i32 to index
    %c0_33 = arith.constant 0 : index
    %c64 = arith.constant 64 : index
    %79 = vector.load %arg8[%78, %c0_33, %c64] : memref<8x8x128xf32, #tpu.memory_space<vmem>>, vector<1x8x64xf32>
    %80 = vector.shape_cast %79 : vector<1x8x64xf32> to vector<8x64xf32>
    %81 = vector.shape_cast %77 : vector<8x64xf32> to vector<1x8x64xf32>
    tpu.vector_store %arg8[%78, %c0_33, %c64], %81 {strides = array<i32>} : memref<8x8x128xf32, #tpu.memory_space<vmem>>, vector<1x8x64xf32>,
    %c1_i32_34 = arith.constant 1 : i32
    %c7_i32_35 = arith.constant 7 : i32
    %82 = arith.subi %c7_i32_35, %c1_i32_34 : i32
    %83 = arith.index_cast %c1_i32_34 : i32 to index
    %c0_36 = arith.constant 0 : index
    %c0_37 = arith.constant 0 : index
    %84 = vector.load %arg7[%83, %c0_36, %c0_37] : memref<8x8x512xf32, #tpu.memory_space<vmem>>, vector<1x8x512xf32>
    %85 = vector.shape_cast %84 : vector<1x8x512xf32> to vector<8x512xf32>
    %86 = arith.index_cast %82 : i32 to index
    %c0_38 = arith.constant 0 : index
    %c0_39 = arith.constant 0 : index
    %87 = vector.load %arg7[%86, %c0_38, %c0_39] : memref<8x8x512xf32, #tpu.memory_space<vmem>>, vector<1x8x512xf32>
    %88 = vector.shape_cast %87 : vector<1x8x512xf32> to vector<8x512xf32>
    %89 = arith.select %28, %85, %88 : vector<8x512xi1>, vector<8x512xf32>
    %cst_40 = arith.constant dense<0.000000e+00> : vector<8x512xf32>
    %90 = tpu.matmul %71, %9, %cst_40 {dimension_numbers = #tpu.dot_dimension_numbers<[1], [0], [0], [1], [0, 0, 1, 1], [], []>} : vector<8x128xf32>, vector<128x512xf32>, vector<8x512xf32> -> vector<8x512xf32>
    %91 = arith.addf %89, %90 : vector<8x512xf32>
    %92 = vector.extract_strided_slice %91 {offsets = [0, 0], sizes = [8, 128], strides = [1, 1]} : vector<8x512xf32> to vector<8x128xf32>
    %cst_41 = arith.constant 5.000000e-01 : f32
    %93 = vector.broadcast %cst_41 : f32 to vector<8x128xf32>
    %94 = arith.mulf %93, %92 : vector<8x128xf32>
    %95 = math.tanh %94 : vector<8x128xf32>
    %cst_42 = arith.constant 5.000000e-01 : f32
    %96 = vector.broadcast %cst_42 : f32 to vector<8x128xf32>
    %97 = arith.mulf %96, %95 : vector<8x128xf32>
    %cst_43 = arith.constant 5.000000e-01 : f32
    %98 = vector.broadcast %cst_43 : f32 to vector<8x128xf32>
    %99 = arith.addf %97, %98 : vector<8x128xf32>
    %100 = vector.extract_strided_slice %91 {offsets = [0, 128], sizes = [8, 128], strides = [1, 1]} : vector<8x512xf32> to vector<8x128xf32>
    %cst_44 = arith.constant 5.000000e-01 : f32
    %101 = vector.broadcast %cst_44 : f32 to vector<8x128xf32>
    %102 = arith.mulf %101, %100 : vector<8x128xf32>
    %103 = math.tanh %102 : vector<8x128xf32>
    %cst_45 = arith.constant 5.000000e-01 : f32
    %104 = vector.broadcast %cst_45 : f32 to vector<8x128xf32>
    %105 = arith.mulf %104, %103 : vector<8x128xf32>
    %cst_46 = arith.constant 5.000000e-01 : f32
    %106 = vector.broadcast %cst_46 : f32 to vector<8x128xf32>
    %107 = arith.addf %105, %106 : vector<8x128xf32>
    %108 = vector.extract_strided_slice %91 {offsets = [0, 256], sizes = [8, 128], strides = [1, 1]} : vector<8x512xf32> to vector<8x128xf32>
    %109 = math.tanh %108 : vector<8x128xf32>
    %110 = vector.extract_strided_slice %91 {offsets = [0, 384], sizes = [8, 128], strides = [1, 1]} : vector<8x512xf32> to vector<8x128xf32>
    %cst_47 = arith.constant 5.000000e-01 : f32
    %111 = vector.broadcast %cst_47 : f32 to vector<8x128xf32>
    %112 = arith.mulf %111, %110 : vector<8x128xf32>
    %113 = math.tanh %112 : vector<8x128xf32>
    %cst_48 = arith.constant 5.000000e-01 : f32
    %114 = vector.broadcast %cst_48 : f32 to vector<8x128xf32>
    %115 = arith.mulf %114, %113 : vector<8x128xf32>
    %cst_49 = arith.constant 5.000000e-01 : f32
    %116 = vector.broadcast %cst_49 : f32 to vector<8x128xf32>
    %117 = arith.addf %115, %116 : vector<8x128xf32>
    %118 = arith.mulf %107, %69 : vector<8x128xf32>
    %119 = arith.mulf %99, %109 : vector<8x128xf32>
    %120 = arith.addf %118, %119 : vector<8x128xf32>
    %121 = math.tanh %120 : vector<8x128xf32>
    %122 = arith.mulf %117, %121 : vector<8x128xf32>
    %123 = vector.extract_strided_slice %122 {offsets = [0, 0], sizes = [8, 64], strides = [1, 1]} : vector<8x128xf32> to vector<8x64xf32>
    %124 = arith.index_cast %c1_i32_34 : i32 to index
    %c0_50 = arith.constant 0 : index
    %c0_51 = arith.constant 0 : index
    %125 = vector.load %arg8[%124, %c0_50, %c0_51] : memref<8x8x128xf32, #tpu.memory_space<vmem>>, vector<1x8x64xf32>
    %126 = vector.shape_cast %125 : vector<1x8x64xf32> to vector<8x64xf32>
    %127 = vector.shape_cast %123 : vector<8x64xf32> to vector<1x8x64xf32>
    tpu.vector_store %arg8[%124, %c0_50, %c0_51], %127 {strides = array<i32>} : memref<8x8x128xf32, #tpu.memory_space<vmem>>, vector<1x8x64xf32>,
    %128 = vector.extract_strided_slice %122 {offsets = [0, 64], sizes = [8, 64], strides = [1, 1]} : vector<8x128xf32> to vector<8x64xf32>
    %129 = arith.index_cast %82 : i32 to index
    %c0_52 = arith.constant 0 : index
    %c64_53 = arith.constant 64 : index
    %130 = vector.load %arg8[%129, %c0_52, %c64_53] : memref<8x8x128xf32, #tpu.memory_space<vmem>>, vector<1x8x64xf32>
    %131 = vector.shape_cast %130 : vector<1x8x64xf32> to vector<8x64xf32>
    %132 = vector.shape_cast %128 : vector<8x64xf32> to vector<1x8x64xf32>
    tpu.vector_store %arg8[%129, %c0_52, %c64_53], %132 {strides = array<i32>} : memref<8x8x128xf32, #tpu.memory_space<vmem>>, vector<1x8x64xf32>,
    %c2_i32 = arith.constant 2 : i32
    %c7_i32_54 = arith.constant 7 : i32
    %133 = arith.subi %c7_i32_54, %c2_i32 : i32
    %134 = arith.index_cast %c2_i32 : i32 to index
    %c0_55 = arith.constant 0 : index
    %c0_56 = arith.constant 0 : index
    %135 = vector.load %arg7[%134, %c0_55, %c0_56] : memref<8x8x512xf32, #tpu.memory_space<vmem>>, vector<1x8x512xf32>
    %136 = vector.shape_cast %135 : vector<1x8x512xf32> to vector<8x512xf32>
    %137 = arith.index_cast %133 : i32 to index
    %c0_57 = arith.constant 0 : index
    %c0_58 = arith.constant 0 : index
    %138 = vector.load %arg7[%137, %c0_57, %c0_58] : memref<8x8x512xf32, #tpu.memory_space<vmem>>, vector<1x8x512xf32>
    %139 = vector.shape_cast %138 : vector<1x8x512xf32> to vector<8x512xf32>
    %140 = arith.select %28, %136, %139 : vector<8x512xi1>, vector<8x512xf32>
    %cst_59 = arith.constant dense<0.000000e+00> : vector<8x512xf32>
    %141 = tpu.matmul %122, %9, %cst_59 {dimension_numbers = #tpu.dot_dimension_numbers<[1], [0], [0], [1], [0, 0, 1, 1], [], []>} : vector<8x128xf32>, vector<128x512xf32>, vector<8x512xf32> -> vector<8x512xf32>
    %142 = arith.addf %140, %141 : vector<8x512xf32>
    %143 = vector.extract_strided_slice %142 {offsets = [0, 0], sizes = [8, 128], strides = [1, 1]} : vector<8x512xf32> to vector<8x128xf32>
    %cst_60 = arith.constant 5.000000e-01 : f32
    %144 = vector.broadcast %cst_60 : f32 to vector<8x128xf32>
    %145 = arith.mulf %144, %143 : vector<8x128xf32>
    %146 = math.tanh %145 : vector<8x128xf32>
    %cst_61 = arith.constant 5.000000e-01 : f32
    %147 = vector.broadcast %cst_61 : f32 to vector<8x128xf32>
    %148 = arith.mulf %147, %146 : vector<8x128xf32>
    %cst_62 = arith.constant 5.000000e-01 : f32
    %149 = vector.broadcast %cst_62 : f32 to vector<8x128xf32>
    %150 = arith.addf %148, %149 : vector<8x128xf32>
    %151 = vector.extract_strided_slice %142 {offsets = [0, 128], sizes = [8, 128], strides = [1, 1]} : vector<8x512xf32> to vector<8x128xf32>
    %cst_63 = arith.constant 5.000000e-01 : f32
    %152 = vector.broadcast %cst_63 : f32 to vector<8x128xf32>
    %153 = arith.mulf %152, %151 : vector<8x128xf32>
    %154 = math.tanh %153 : vector<8x128xf32>
    %cst_64 = arith.constant 5.000000e-01 : f32
    %155 = vector.broadcast %cst_64 : f32 to vector<8x128xf32>
    %156 = arith.mulf %155, %154 : vector<8x128xf32>
    %cst_65 = arith.constant 5.000000e-01 : f32
    %157 = vector.broadcast %cst_65 : f32 to vector<8x128xf32>
    %158 = arith.addf %156, %157 : vector<8x128xf32>
    %159 = vector.extract_strided_slice %142 {offsets = [0, 256], sizes = [8, 128], strides = [1, 1]} : vector<8x512xf32> to vector<8x128xf32>
    %160 = math.tanh %159 : vector<8x128xf32>
    %161 = vector.extract_strided_slice %142 {offsets = [0, 384], sizes = [8, 128], strides = [1, 1]} : vector<8x512xf32> to vector<8x128xf32>
    %cst_66 = arith.constant 5.000000e-01 : f32
    %162 = vector.broadcast %cst_66 : f32 to vector<8x128xf32>
    %163 = arith.mulf %162, %161 : vector<8x128xf32>
    %164 = math.tanh %163 : vector<8x128xf32>
    %cst_67 = arith.constant 5.000000e-01 : f32
    %165 = vector.broadcast %cst_67 : f32 to vector<8x128xf32>
    %166 = arith.mulf %165, %164 : vector<8x128xf32>
    %cst_68 = arith.constant 5.000000e-01 : f32
    %167 = vector.broadcast %cst_68 : f32 to vector<8x128xf32>
    %168 = arith.addf %166, %167 : vector<8x128xf32>
    %169 = arith.mulf %158, %120 : vector<8x128xf32>
    %170 = arith.mulf %150, %160 : vector<8x128xf32>
    %171 = arith.addf %169, %170 : vector<8x128xf32>
    %172 = math.tanh %171 : vector<8x128xf32>
    %173 = arith.mulf %168, %172 : vector<8x128xf32>
    %174 = vector.extract_strided_slice %173 {offsets = [0, 0], sizes = [8, 64], strides = [1, 1]} : vector<8x128xf32> to vector<8x64xf32>
    %175 = arith.index_cast %c2_i32 : i32 to index
    %c0_69 = arith.constant 0 : index
    %c0_70 = arith.constant 0 : index
    %176 = vector.load %arg8[%175, %c0_69, %c0_70] : memref<8x8x128xf32, #tpu.memory_space<vmem>>, vector<1x8x64xf32>
    %177 = vector.shape_cast %176 : vector<1x8x64xf32> to vector<8x64xf32>
    %178 = vector.shape_cast %174 : vector<8x64xf32> to vector<1x8x64xf32>
    tpu.vector_store %arg8[%175, %c0_69, %c0_70], %178 {strides = array<i32>} : memref<8x8x128xf32, #tpu.memory_space<vmem>>, vector<1x8x64xf32>,
    %179 = vector.extract_strided_slice %173 {offsets = [0, 64], sizes = [8, 64], strides = [1, 1]} : vector<8x128xf32> to vector<8x64xf32>
    %180 = arith.index_cast %133 : i32 to index
    %c0_71 = arith.constant 0 : index
    %c64_72 = arith.constant 64 : index
    %181 = vector.load %arg8[%180, %c0_71, %c64_72] : memref<8x8x128xf32, #tpu.memory_space<vmem>>, vector<1x8x64xf32>
    %182 = vector.shape_cast %181 : vector<1x8x64xf32> to vector<8x64xf32>
    %183 = vector.shape_cast %179 : vector<8x64xf32> to vector<1x8x64xf32>
    tpu.vector_store %arg8[%180, %c0_71, %c64_72], %183 {strides = array<i32>} : memref<8x8x128xf32, #tpu.memory_space<vmem>>, vector<1x8x64xf32>,
    %c3_i32 = arith.constant 3 : i32
    %c7_i32_73 = arith.constant 7 : i32
    %184 = arith.subi %c7_i32_73, %c3_i32 : i32
    %185 = arith.index_cast %c3_i32 : i32 to index
    %c0_74 = arith.constant 0 : index
    %c0_75 = arith.constant 0 : index
    %186 = vector.load %arg7[%185, %c0_74, %c0_75] : memref<8x8x512xf32, #tpu.memory_space<vmem>>, vector<1x8x512xf32>
    %187 = vector.shape_cast %186 : vector<1x8x512xf32> to vector<8x512xf32>
    %188 = arith.index_cast %184 : i32 to index
    %c0_76 = arith.constant 0 : index
    %c0_77 = arith.constant 0 : index
    %189 = vector.load %arg7[%188, %c0_76, %c0_77] : memref<8x8x512xf32, #tpu.memory_space<vmem>>, vector<1x8x512xf32>
    %190 = vector.shape_cast %189 : vector<1x8x512xf32> to vector<8x512xf32>
    %191 = arith.select %28, %187, %190 : vector<8x512xi1>, vector<8x512xf32>
    %cst_78 = arith.constant dense<0.000000e+00> : vector<8x512xf32>
    %192 = tpu.matmul %173, %9, %cst_78 {dimension_numbers = #tpu.dot_dimension_numbers<[1], [0], [0], [1], [0, 0, 1, 1], [], []>} : vector<8x128xf32>, vector<128x512xf32>, vector<8x512xf32> -> vector<8x512xf32>
    %193 = arith.addf %191, %192 : vector<8x512xf32>
    %194 = vector.extract_strided_slice %193 {offsets = [0, 0], sizes = [8, 128], strides = [1, 1]} : vector<8x512xf32> to vector<8x128xf32>
    %cst_79 = arith.constant 5.000000e-01 : f32
    %195 = vector.broadcast %cst_79 : f32 to vector<8x128xf32>
    %196 = arith.mulf %195, %194 : vector<8x128xf32>
    %197 = math.tanh %196 : vector<8x128xf32>
    %cst_80 = arith.constant 5.000000e-01 : f32
    %198 = vector.broadcast %cst_80 : f32 to vector<8x128xf32>
    %199 = arith.mulf %198, %197 : vector<8x128xf32>
    %cst_81 = arith.constant 5.000000e-01 : f32
    %200 = vector.broadcast %cst_81 : f32 to vector<8x128xf32>
    %201 = arith.addf %199, %200 : vector<8x128xf32>
    %202 = vector.extract_strided_slice %193 {offsets = [0, 128], sizes = [8, 128], strides = [1, 1]} : vector<8x512xf32> to vector<8x128xf32>
    %cst_82 = arith.constant 5.000000e-01 : f32
    %203 = vector.broadcast %cst_82 : f32 to vector<8x128xf32>
    %204 = arith.mulf %203, %202 : vector<8x128xf32>
    %205 = math.tanh %204 : vector<8x128xf32>
    %cst_83 = arith.constant 5.000000e-01 : f32
    %206 = vector.broadcast %cst_83 : f32 to vector<8x128xf32>
    %207 = arith.mulf %206, %205 : vector<8x128xf32>
    %cst_84 = arith.constant 5.000000e-01 : f32
    %208 = vector.broadcast %cst_84 : f32 to vector<8x128xf32>
    %209 = arith.addf %207, %208 : vector<8x128xf32>
    %210 = vector.extract_strided_slice %193 {offsets = [0, 256], sizes = [8, 128], strides = [1, 1]} : vector<8x512xf32> to vector<8x128xf32>
    %211 = math.tanh %210 : vector<8x128xf32>
    %212 = vector.extract_strided_slice %193 {offsets = [0, 384], sizes = [8, 128], strides = [1, 1]} : vector<8x512xf32> to vector<8x128xf32>
    %cst_85 = arith.constant 5.000000e-01 : f32
    %213 = vector.broadcast %cst_85 : f32 to vector<8x128xf32>
    %214 = arith.mulf %213, %212 : vector<8x128xf32>
    %215 = math.tanh %214 : vector<8x128xf32>
    %cst_86 = arith.constant 5.000000e-01 : f32
    %216 = vector.broadcast %cst_86 : f32 to vector<8x128xf32>
    %217 = arith.mulf %216, %215 : vector<8x128xf32>
    %cst_87 = arith.constant 5.000000e-01 : f32
    %218 = vector.broadcast %cst_87 : f32 to vector<8x128xf32>
    %219 = arith.addf %217, %218 : vector<8x128xf32>
    %220 = arith.mulf %209, %171 : vector<8x128xf32>
    %221 = arith.mulf %201, %211 : vector<8x128xf32>
    %222 = arith.addf %220, %221 : vector<8x128xf32>
    %223 = math.tanh %222 : vector<8x128xf32>
    %224 = arith.mulf %219, %223 : vector<8x128xf32>
    %225 = vector.extract_strided_slice %224 {offsets = [0, 0], sizes = [8, 64], strides = [1, 1]} : vector<8x128xf32> to vector<8x64xf32>
    %226 = arith.index_cast %c3_i32 : i32 to index
    %c0_88 = arith.constant 0 : index
    %c0_89 = arith.constant 0 : index
    %227 = vector.load %arg8[%226, %c0_88, %c0_89] : memref<8x8x128xf32, #tpu.memory_space<vmem>>, vector<1x8x64xf32>
    %228 = vector.shape_cast %227 : vector<1x8x64xf32> to vector<8x64xf32>
    %229 = vector.shape_cast %225 : vector<8x64xf32> to vector<1x8x64xf32>
    tpu.vector_store %arg8[%226, %c0_88, %c0_89], %229 {strides = array<i32>} : memref<8x8x128xf32, #tpu.memory_space<vmem>>, vector<1x8x64xf32>,
    %230 = vector.extract_strided_slice %224 {offsets = [0, 64], sizes = [8, 64], strides = [1, 1]} : vector<8x128xf32> to vector<8x64xf32>
    %231 = arith.index_cast %184 : i32 to index
    %c0_90 = arith.constant 0 : index
    %c64_91 = arith.constant 64 : index
    %232 = vector.load %arg8[%231, %c0_90, %c64_91] : memref<8x8x128xf32, #tpu.memory_space<vmem>>, vector<1x8x64xf32>
    %233 = vector.shape_cast %232 : vector<1x8x64xf32> to vector<8x64xf32>
    %234 = vector.shape_cast %230 : vector<8x64xf32> to vector<1x8x64xf32>
    tpu.vector_store %arg8[%231, %c0_90, %c64_91], %234 {strides = array<i32>} : memref<8x8x128xf32, #tpu.memory_space<vmem>>, vector<1x8x64xf32>,
    %c4_i32 = arith.constant 4 : i32
    %c7_i32_92 = arith.constant 7 : i32
    %235 = arith.subi %c7_i32_92, %c4_i32 : i32
    %236 = arith.index_cast %c4_i32 : i32 to index
    %c0_93 = arith.constant 0 : index
    %c0_94 = arith.constant 0 : index
    %237 = vector.load %arg7[%236, %c0_93, %c0_94] : memref<8x8x512xf32, #tpu.memory_space<vmem>>, vector<1x8x512xf32>
    %238 = vector.shape_cast %237 : vector<1x8x512xf32> to vector<8x512xf32>
    %239 = arith.index_cast %235 : i32 to index
    %c0_95 = arith.constant 0 : index
    %c0_96 = arith.constant 0 : index
    %240 = vector.load %arg7[%239, %c0_95, %c0_96] : memref<8x8x512xf32, #tpu.memory_space<vmem>>, vector<1x8x512xf32>
    %241 = vector.shape_cast %240 : vector<1x8x512xf32> to vector<8x512xf32>
    %242 = arith.select %28, %238, %241 : vector<8x512xi1>, vector<8x512xf32>
    %cst_97 = arith.constant dense<0.000000e+00> : vector<8x512xf32>
    %243 = tpu.matmul %224, %9, %cst_97 {dimension_numbers = #tpu.dot_dimension_numbers<[1], [0], [0], [1], [0, 0, 1, 1], [], []>} : vector<8x128xf32>, vector<128x512xf32>, vector<8x512xf32> -> vector<8x512xf32>
    %244 = arith.addf %242, %243 : vector<8x512xf32>
    %245 = vector.extract_strided_slice %244 {offsets = [0, 0], sizes = [8, 128], strides = [1, 1]} : vector<8x512xf32> to vector<8x128xf32>
    %cst_98 = arith.constant 5.000000e-01 : f32
    %246 = vector.broadcast %cst_98 : f32 to vector<8x128xf32>
    %247 = arith.mulf %246, %245 : vector<8x128xf32>
    %248 = math.tanh %247 : vector<8x128xf32>
    %cst_99 = arith.constant 5.000000e-01 : f32
    %249 = vector.broadcast %cst_99 : f32 to vector<8x128xf32>
    %250 = arith.mulf %249, %248 : vector<8x128xf32>
    %cst_100 = arith.constant 5.000000e-01 : f32
    %251 = vector.broadcast %cst_100 : f32 to vector<8x128xf32>
    %252 = arith.addf %250, %251 : vector<8x128xf32>
    %253 = vector.extract_strided_slice %244 {offsets = [0, 128], sizes = [8, 128], strides = [1, 1]} : vector<8x512xf32> to vector<8x128xf32>
    %cst_101 = arith.constant 5.000000e-01 : f32
    %254 = vector.broadcast %cst_101 : f32 to vector<8x128xf32>
    %255 = arith.mulf %254, %253 : vector<8x128xf32>
    %256 = math.tanh %255 : vector<8x128xf32>
    %cst_102 = arith.constant 5.000000e-01 : f32
    %257 = vector.broadcast %cst_102 : f32 to vector<8x128xf32>
    %258 = arith.mulf %257, %256 : vector<8x128xf32>
    %cst_103 = arith.constant 5.000000e-01 : f32
    %259 = vector.broadcast %cst_103 : f32 to vector<8x128xf32>
    %260 = arith.addf %258, %259 : vector<8x128xf32>
    %261 = vector.extract_strided_slice %244 {offsets = [0, 256], sizes = [8, 128], strides = [1, 1]} : vector<8x512xf32> to vector<8x128xf32>
    %262 = math.tanh %261 : vector<8x128xf32>
    %263 = vector.extract_strided_slice %244 {offsets = [0, 384], sizes = [8, 128], strides = [1, 1]} : vector<8x512xf32> to vector<8x128xf32>
    %cst_104 = arith.constant 5.000000e-01 : f32
    %264 = vector.broadcast %cst_104 : f32 to vector<8x128xf32>
    %265 = arith.mulf %264, %263 : vector<8x128xf32>
    %266 = math.tanh %265 : vector<8x128xf32>
    %cst_105 = arith.constant 5.000000e-01 : f32
    %267 = vector.broadcast %cst_105 : f32 to vector<8x128xf32>
    %268 = arith.mulf %267, %266 : vector<8x128xf32>
    %cst_106 = arith.constant 5.000000e-01 : f32
    %269 = vector.broadcast %cst_106 : f32 to vector<8x128xf32>
    %270 = arith.addf %268, %269 : vector<8x128xf32>
    %271 = arith.mulf %260, %222 : vector<8x128xf32>
    %272 = arith.mulf %252, %262 : vector<8x128xf32>
    %273 = arith.addf %271, %272 : vector<8x128xf32>
    %274 = math.tanh %273 : vector<8x128xf32>
    %275 = arith.mulf %270, %274 : vector<8x128xf32>
    %276 = vector.extract_strided_slice %275 {offsets = [0, 0], sizes = [8, 64], strides = [1, 1]} : vector<8x128xf32> to vector<8x64xf32>
    %277 = arith.index_cast %c4_i32 : i32 to index
    %c0_107 = arith.constant 0 : index
    %c0_108 = arith.constant 0 : index
    %278 = vector.load %arg8[%277, %c0_107, %c0_108] : memref<8x8x128xf32, #tpu.memory_space<vmem>>, vector<1x8x64xf32>
    %279 = vector.shape_cast %278 : vector<1x8x64xf32> to vector<8x64xf32>
    %280 = vector.shape_cast %276 : vector<8x64xf32> to vector<1x8x64xf32>
    tpu.vector_store %arg8[%277, %c0_107, %c0_108], %280 {strides = array<i32>} : memref<8x8x128xf32, #tpu.memory_space<vmem>>, vector<1x8x64xf32>,
    %281 = vector.extract_strided_slice %275 {offsets = [0, 64], sizes = [8, 64], strides = [1, 1]} : vector<8x128xf32> to vector<8x64xf32>
    %282 = arith.index_cast %235 : i32 to index
    %c0_109 = arith.constant 0 : index
    %c64_110 = arith.constant 64 : index
    %283 = vector.load %arg8[%282, %c0_109, %c64_110] : memref<8x8x128xf32, #tpu.memory_space<vmem>>, vector<1x8x64xf32>
    %284 = vector.shape_cast %283 : vector<1x8x64xf32> to vector<8x64xf32>
    %285 = vector.shape_cast %281 : vector<8x64xf32> to vector<1x8x64xf32>
    tpu.vector_store %arg8[%282, %c0_109, %c64_110], %285 {strides = array<i32>} : memref<8x8x128xf32, #tpu.memory_space<vmem>>, vector<1x8x64xf32>,
    %c5_i32 = arith.constant 5 : i32
    %c7_i32_111 = arith.constant 7 : i32
    %286 = arith.subi %c7_i32_111, %c5_i32 : i32
    %287 = arith.index_cast %c5_i32 : i32 to index
    %c0_112 = arith.constant 0 : index
    %c0_113 = arith.constant 0 : index
    %288 = vector.load %arg7[%287, %c0_112, %c0_113] : memref<8x8x512xf32, #tpu.memory_space<vmem>>, vector<1x8x512xf32>
    %289 = vector.shape_cast %288 : vector<1x8x512xf32> to vector<8x512xf32>
    %290 = arith.index_cast %286 : i32 to index
    %c0_114 = arith.constant 0 : index
    %c0_115 = arith.constant 0 : index
    %291 = vector.load %arg7[%290, %c0_114, %c0_115] : memref<8x8x512xf32, #tpu.memory_space<vmem>>, vector<1x8x512xf32>
    %292 = vector.shape_cast %291 : vector<1x8x512xf32> to vector<8x512xf32>
    %293 = arith.select %28, %289, %292 : vector<8x512xi1>, vector<8x512xf32>
    %cst_116 = arith.constant dense<0.000000e+00> : vector<8x512xf32>
    %294 = tpu.matmul %275, %9, %cst_116 {dimension_numbers = #tpu.dot_dimension_numbers<[1], [0], [0], [1], [0, 0, 1, 1], [], []>} : vector<8x128xf32>, vector<128x512xf32>, vector<8x512xf32> -> vector<8x512xf32>
    %295 = arith.addf %293, %294 : vector<8x512xf32>
    %296 = vector.extract_strided_slice %295 {offsets = [0, 0], sizes = [8, 128], strides = [1, 1]} : vector<8x512xf32> to vector<8x128xf32>
    %cst_117 = arith.constant 5.000000e-01 : f32
    %297 = vector.broadcast %cst_117 : f32 to vector<8x128xf32>
    %298 = arith.mulf %297, %296 : vector<8x128xf32>
    %299 = math.tanh %298 : vector<8x128xf32>
    %cst_118 = arith.constant 5.000000e-01 : f32
    %300 = vector.broadcast %cst_118 : f32 to vector<8x128xf32>
    %301 = arith.mulf %300, %299 : vector<8x128xf32>
    %cst_119 = arith.constant 5.000000e-01 : f32
    %302 = vector.broadcast %cst_119 : f32 to vector<8x128xf32>
    %303 = arith.addf %301, %302 : vector<8x128xf32>
    %304 = vector.extract_strided_slice %295 {offsets = [0, 128], sizes = [8, 128], strides = [1, 1]} : vector<8x512xf32> to vector<8x128xf32>
    %cst_120 = arith.constant 5.000000e-01 : f32
    %305 = vector.broadcast %cst_120 : f32 to vector<8x128xf32>
    %306 = arith.mulf %305, %304 : vector<8x128xf32>
    %307 = math.tanh %306 : vector<8x128xf32>
    %cst_121 = arith.constant 5.000000e-01 : f32
    %308 = vector.broadcast %cst_121 : f32 to vector<8x128xf32>
    %309 = arith.mulf %308, %307 : vector<8x128xf32>
    %cst_122 = arith.constant 5.000000e-01 : f32
    %310 = vector.broadcast %cst_122 : f32 to vector<8x128xf32>
    %311 = arith.addf %309, %310 : vector<8x128xf32>
    %312 = vector.extract_strided_slice %295 {offsets = [0, 256], sizes = [8, 128], strides = [1, 1]} : vector<8x512xf32> to vector<8x128xf32>
    %313 = math.tanh %312 : vector<8x128xf32>
    %314 = vector.extract_strided_slice %295 {offsets = [0, 384], sizes = [8, 128], strides = [1, 1]} : vector<8x512xf32> to vector<8x128xf32>
    %cst_123 = arith.constant 5.000000e-01 : f32
    %315 = vector.broadcast %cst_123 : f32 to vector<8x128xf32>
    %316 = arith.mulf %315, %314 : vector<8x128xf32>
    %317 = math.tanh %316 : vector<8x128xf32>
    %cst_124 = arith.constant 5.000000e-01 : f32
    %318 = vector.broadcast %cst_124 : f32 to vector<8x128xf32>
    %319 = arith.mulf %318, %317 : vector<8x128xf32>
    %cst_125 = arith.constant 5.000000e-01 : f32
    %320 = vector.broadcast %cst_125 : f32 to vector<8x128xf32>
    %321 = arith.addf %319, %320 : vector<8x128xf32>
    %322 = arith.mulf %311, %273 : vector<8x128xf32>
    %323 = arith.mulf %303, %313 : vector<8x128xf32>
    %324 = arith.addf %322, %323 : vector<8x128xf32>
    %325 = math.tanh %324 : vector<8x128xf32>
    %326 = arith.mulf %321, %325 : vector<8x128xf32>
    %327 = vector.extract_strided_slice %326 {offsets = [0, 0], sizes = [8, 64], strides = [1, 1]} : vector<8x128xf32> to vector<8x64xf32>
    %328 = arith.index_cast %c5_i32 : i32 to index
    %c0_126 = arith.constant 0 : index
    %c0_127 = arith.constant 0 : index
    %329 = vector.load %arg8[%328, %c0_126, %c0_127] : memref<8x8x128xf32, #tpu.memory_space<vmem>>, vector<1x8x64xf32>
    %330 = vector.shape_cast %329 : vector<1x8x64xf32> to vector<8x64xf32>
    %331 = vector.shape_cast %327 : vector<8x64xf32> to vector<1x8x64xf32>
    tpu.vector_store %arg8[%328, %c0_126, %c0_127], %331 {strides = array<i32>} : memref<8x8x128xf32, #tpu.memory_space<vmem>>, vector<1x8x64xf32>,
    %332 = vector.extract_strided_slice %326 {offsets = [0, 64], sizes = [8, 64], strides = [1, 1]} : vector<8x128xf32> to vector<8x64xf32>
    %333 = arith.index_cast %286 : i32 to index
    %c0_128 = arith.constant 0 : index
    %c64_129 = arith.constant 64 : index
    %334 = vector.load %arg8[%333, %c0_128, %c64_129] : memref<8x8x128xf32, #tpu.memory_space<vmem>>, vector<1x8x64xf32>
    %335 = vector.shape_cast %334 : vector<1x8x64xf32> to vector<8x64xf32>
    %336 = vector.shape_cast %332 : vector<8x64xf32> to vector<1x8x64xf32>
    tpu.vector_store %arg8[%333, %c0_128, %c64_129], %336 {strides = array<i32>} : memref<8x8x128xf32, #tpu.memory_space<vmem>>, vector<1x8x64xf32>,
    %c6_i32 = arith.constant 6 : i32
    %c7_i32_130 = arith.constant 7 : i32
    %337 = arith.subi %c7_i32_130, %c6_i32 : i32
    %338 = arith.index_cast %c6_i32 : i32 to index
    %c0_131 = arith.constant 0 : index
    %c0_132 = arith.constant 0 : index
    %339 = vector.load %arg7[%338, %c0_131, %c0_132] : memref<8x8x512xf32, #tpu.memory_space<vmem>>, vector<1x8x512xf32>
    %340 = vector.shape_cast %339 : vector<1x8x512xf32> to vector<8x512xf32>
    %341 = arith.index_cast %337 : i32 to index
    %c0_133 = arith.constant 0 : index
    %c0_134 = arith.constant 0 : index
    %342 = vector.load %arg7[%341, %c0_133, %c0_134] : memref<8x8x512xf32, #tpu.memory_space<vmem>>, vector<1x8x512xf32>
    %343 = vector.shape_cast %342 : vector<1x8x512xf32> to vector<8x512xf32>
    %344 = arith.select %28, %340, %343 : vector<8x512xi1>, vector<8x512xf32>
    %cst_135 = arith.constant dense<0.000000e+00> : vector<8x512xf32>
    %345 = tpu.matmul %326, %9, %cst_135 {dimension_numbers = #tpu.dot_dimension_numbers<[1], [0], [0], [1], [0, 0, 1, 1], [], []>} : vector<8x128xf32>, vector<128x512xf32>, vector<8x512xf32> -> vector<8x512xf32>
    %346 = arith.addf %344, %345 : vector<8x512xf32>
    %347 = vector.extract_strided_slice %346 {offsets = [0, 0], sizes = [8, 128], strides = [1, 1]} : vector<8x512xf32> to vector<8x128xf32>
    %cst_136 = arith.constant 5.000000e-01 : f32
    %348 = vector.broadcast %cst_136 : f32 to vector<8x128xf32>
    %349 = arith.mulf %348, %347 : vector<8x128xf32>
    %350 = math.tanh %349 : vector<8x128xf32>
    %cst_137 = arith.constant 5.000000e-01 : f32
    %351 = vector.broadcast %cst_137 : f32 to vector<8x128xf32>
    %352 = arith.mulf %351, %350 : vector<8x128xf32>
    %cst_138 = arith.constant 5.000000e-01 : f32
    %353 = vector.broadcast %cst_138 : f32 to vector<8x128xf32>
    %354 = arith.addf %352, %353 : vector<8x128xf32>
    %355 = vector.extract_strided_slice %346 {offsets = [0, 128], sizes = [8, 128], strides = [1, 1]} : vector<8x512xf32> to vector<8x128xf32>
    %cst_139 = arith.constant 5.000000e-01 : f32
    %356 = vector.broadcast %cst_139 : f32 to vector<8x128xf32>
    %357 = arith.mulf %356, %355 : vector<8x128xf32>
    %358 = math.tanh %357 : vector<8x128xf32>
    %cst_140 = arith.constant 5.000000e-01 : f32
    %359 = vector.broadcast %cst_140 : f32 to vector<8x128xf32>
    %360 = arith.mulf %359, %358 : vector<8x128xf32>
    %cst_141 = arith.constant 5.000000e-01 : f32
    %361 = vector.broadcast %cst_141 : f32 to vector<8x128xf32>
    %362 = arith.addf %360, %361 : vector<8x128xf32>
    %363 = vector.extract_strided_slice %346 {offsets = [0, 256], sizes = [8, 128], strides = [1, 1]} : vector<8x512xf32> to vector<8x128xf32>
    %364 = math.tanh %363 : vector<8x128xf32>
    %365 = vector.extract_strided_slice %346 {offsets = [0, 384], sizes = [8, 128], strides = [1, 1]} : vector<8x512xf32> to vector<8x128xf32>
    %cst_142 = arith.constant 5.000000e-01 : f32
    %366 = vector.broadcast %cst_142 : f32 to vector<8x128xf32>
    %367 = arith.mulf %366, %365 : vector<8x128xf32>
    %368 = math.tanh %367 : vector<8x128xf32>
    %cst_143 = arith.constant 5.000000e-01 : f32
    %369 = vector.broadcast %cst_143 : f32 to vector<8x128xf32>
    %370 = arith.mulf %369, %368 : vector<8x128xf32>
    %cst_144 = arith.constant 5.000000e-01 : f32
    %371 = vector.broadcast %cst_144 : f32 to vector<8x128xf32>
    %372 = arith.addf %370, %371 : vector<8x128xf32>
    %373 = arith.mulf %362, %324 : vector<8x128xf32>
    %374 = arith.mulf %354, %364 : vector<8x128xf32>
    %375 = arith.addf %373, %374 : vector<8x128xf32>
    %376 = math.tanh %375 : vector<8x128xf32>
    %377 = arith.mulf %372, %376 : vector<8x128xf32>
    %378 = vector.extract_strided_slice %377 {offsets = [0, 0], sizes = [8, 64], strides = [1, 1]} : vector<8x128xf32> to vector<8x64xf32>
    %379 = arith.index_cast %c6_i32 : i32 to index
    %c0_145 = arith.constant 0 : index
    %c0_146 = arith.constant 0 : index
    %380 = vector.load %arg8[%379, %c0_145, %c0_146] : memref<8x8x128xf32, #tpu.memory_space<vmem>>, vector<1x8x64xf32>
    %381 = vector.shape_cast %380 : vector<1x8x64xf32> to vector<8x64xf32>
    %382 = vector.shape_cast %378 : vector<8x64xf32> to vector<1x8x64xf32>
    tpu.vector_store %arg8[%379, %c0_145, %c0_146], %382 {strides = array<i32>} : memref<8x8x128xf32, #tpu.memory_space<vmem>>, vector<1x8x64xf32>,
    %383 = vector.extract_strided_slice %377 {offsets = [0, 64], sizes = [8, 64], strides = [1, 1]} : vector<8x128xf32> to vector<8x64xf32>
    %384 = arith.index_cast %337 : i32 to index
    %c0_147 = arith.constant 0 : index
    %c64_148 = arith.constant 64 : index
    %385 = vector.load %arg8[%384, %c0_147, %c64_148] : memref<8x8x128xf32, #tpu.memory_space<vmem>>, vector<1x8x64xf32>
    %386 = vector.shape_cast %385 : vector<1x8x64xf32> to vector<8x64xf32>
    %387 = vector.shape_cast %383 : vector<8x64xf32> to vector<1x8x64xf32>
    tpu.vector_store %arg8[%384, %c0_147, %c64_148], %387 {strides = array<i32>} : memref<8x8x128xf32, #tpu.memory_space<vmem>>, vector<1x8x64xf32>,
    %c7_i32_149 = arith.constant 7 : i32
    %c7_i32_150 = arith.constant 7 : i32
    %388 = arith.subi %c7_i32_150, %c7_i32_149 : i32
    %389 = arith.index_cast %c7_i32_149 : i32 to index
    %c0_151 = arith.constant 0 : index
    %c0_152 = arith.constant 0 : index
    %390 = vector.load %arg7[%389, %c0_151, %c0_152] : memref<8x8x512xf32, #tpu.memory_space<vmem>>, vector<1x8x512xf32>
    %391 = vector.shape_cast %390 : vector<1x8x512xf32> to vector<8x512xf32>
    %392 = arith.index_cast %388 : i32 to index
    %c0_153 = arith.constant 0 : index
    %c0_154 = arith.constant 0 : index
    %393 = vector.load %arg7[%392, %c0_153, %c0_154] : memref<8x8x512xf32, #tpu.memory_space<vmem>>, vector<1x8x512xf32>
    %394 = vector.shape_cast %393 : vector<1x8x512xf32> to vector<8x512xf32>
    %395 = arith.select %28, %391, %394 : vector<8x512xi1>, vector<8x512xf32>
    %cst_155 = arith.constant dense<0.000000e+00> : vector<8x512xf32>
    %396 = tpu.matmul %377, %9, %cst_155 {dimension_numbers = #tpu.dot_dimension_numbers<[1], [0], [0], [1], [0, 0, 1, 1], [], []>} : vector<8x128xf32>, vector<128x512xf32>, vector<8x512xf32> -> vector<8x512xf32>
    %397 = arith.addf %395, %396 : vector<8x512xf32>
    %398 = vector.extract_strided_slice %397 {offsets = [0, 0], sizes = [8, 128], strides = [1, 1]} : vector<8x512xf32> to vector<8x128xf32>
    %cst_156 = arith.constant 5.000000e-01 : f32
    %399 = vector.broadcast %cst_156 : f32 to vector<8x128xf32>
    %400 = arith.mulf %399, %398 : vector<8x128xf32>
    %401 = math.tanh %400 : vector<8x128xf32>
    %cst_157 = arith.constant 5.000000e-01 : f32
    %402 = vector.broadcast %cst_157 : f32 to vector<8x128xf32>
    %403 = arith.mulf %402, %401 : vector<8x128xf32>
    %cst_158 = arith.constant 5.000000e-01 : f32
    %404 = vector.broadcast %cst_158 : f32 to vector<8x128xf32>
    %405 = arith.addf %403, %404 : vector<8x128xf32>
    %406 = vector.extract_strided_slice %397 {offsets = [0, 128], sizes = [8, 128], strides = [1, 1]} : vector<8x512xf32> to vector<8x128xf32>
    %cst_159 = arith.constant 5.000000e-01 : f32
    %407 = vector.broadcast %cst_159 : f32 to vector<8x128xf32>
    %408 = arith.mulf %407, %406 : vector<8x128xf32>
    %409 = math.tanh %408 : vector<8x128xf32>
    %cst_160 = arith.constant 5.000000e-01 : f32
    %410 = vector.broadcast %cst_160 : f32 to vector<8x128xf32>
    %411 = arith.mulf %410, %409 : vector<8x128xf32>
    %cst_161 = arith.constant 5.000000e-01 : f32
    %412 = vector.broadcast %cst_161 : f32 to vector<8x128xf32>
    %413 = arith.addf %411, %412 : vector<8x128xf32>
    %414 = vector.extract_strided_slice %397 {offsets = [0, 256], sizes = [8, 128], strides = [1, 1]} : vector<8x512xf32> to vector<8x128xf32>
    %415 = math.tanh %414 : vector<8x128xf32>
    %416 = vector.extract_strided_slice %397 {offsets = [0, 384], sizes = [8, 128], strides = [1, 1]} : vector<8x512xf32> to vector<8x128xf32>
    %cst_162 = arith.constant 5.000000e-01 : f32
    %417 = vector.broadcast %cst_162 : f32 to vector<8x128xf32>
    %418 = arith.mulf %417, %416 : vector<8x128xf32>
    %419 = math.tanh %418 : vector<8x128xf32>
    %cst_163 = arith.constant 5.000000e-01 : f32
    %420 = vector.broadcast %cst_163 : f32 to vector<8x128xf32>
    %421 = arith.mulf %420, %419 : vector<8x128xf32>
    %cst_164 = arith.constant 5.000000e-01 : f32
    %422 = vector.broadcast %cst_164 : f32 to vector<8x128xf32>
    %423 = arith.addf %421, %422 : vector<8x128xf32>
    %424 = arith.mulf %413, %375 : vector<8x128xf32>
    %425 = arith.mulf %405, %415 : vector<8x128xf32>
    %426 = arith.addf %424, %425 : vector<8x128xf32>
    %427 = math.tanh %426 : vector<8x128xf32>
    %428 = arith.mulf %423, %427 : vector<8x128xf32>
    %429 = vector.extract_strided_slice %428 {offsets = [0, 0], sizes = [8, 64], strides = [1, 1]} : vector<8x128xf32> to vector<8x64xf32>
    %430 = arith.index_cast %c7_i32_149 : i32 to index
    %c0_165 = arith.constant 0 : index
    %c0_166 = arith.constant 0 : index
    %431 = vector.load %arg8[%430, %c0_165, %c0_166] : memref<8x8x128xf32, #tpu.memory_space<vmem>>, vector<1x8x64xf32>
    %432 = vector.shape_cast %431 : vector<1x8x64xf32> to vector<8x64xf32>
    %433 = vector.shape_cast %429 : vector<8x64xf32> to vector<1x8x64xf32>
    tpu.vector_store %arg8[%430, %c0_165, %c0_166], %433 {strides = array<i32>} : memref<8x8x128xf32, #tpu.memory_space<vmem>>, vector<1x8x64xf32>,
    %434 = vector.extract_strided_slice %428 {offsets = [0, 64], sizes = [8, 64], strides = [1, 1]} : vector<8x128xf32> to vector<8x64xf32>
    %435 = arith.index_cast %388 : i32 to index
    %c0_167 = arith.constant 0 : index
    %c64_168 = arith.constant 64 : index
    %436 = vector.load %arg8[%435, %c0_167, %c64_168] : memref<8x8x128xf32, #tpu.memory_space<vmem>>, vector<1x8x64xf32>
    %437 = vector.shape_cast %436 : vector<1x8x64xf32> to vector<8x64xf32>
    %438 = vector.shape_cast %434 : vector<8x64xf32> to vector<1x8x64xf32>
    tpu.vector_store %arg8[%435, %c0_167, %c64_168], %438 {strides = array<i32>} : memref<8x8x128xf32, #tpu.memory_space<vmem>>, vector<1x8x64xf32>,
    %c8_i32 = arith.constant 8 : i32
    %c0_169 = arith.constant 0 : index
    %c0_170 = arith.constant 0 : index
    %c0_171 = arith.constant 0 : index
    %439 = vector.load %arg8[%c0_169, %c0_170, %c0_171] : memref<8x8x128xf32, #tpu.memory_space<vmem>>, vector<8x8x128xf32>
    %440 = vector.shape_cast %439 : vector<8x8x128xf32> to vector<64x128xf32>
    %c0_172 = arith.constant 0 : index
    %c0_173 = arith.constant 0 : index
    %441 = vector.load %arg4[%c0_172, %c0_173] : memref<128x128xf32, #tpu.memory_space<vmem>>, vector<128x128xf32>
    %cst_174 = arith.constant dense<0.000000e+00> : vector<64x128xf32>
    %442 = tpu.matmul %440, %441, %cst_174 {dimension_numbers = #tpu.dot_dimension_numbers<[1], [0], [0], [1], [0, 0, 1, 1], [], []>} : vector<64x128xf32>, vector<128x128xf32>, vector<64x128xf32> -> vector<64x128xf32>
    %c0_175 = arith.constant 0 : index
    %c0_176 = arith.constant 0 : index
    %443 = vector.load %arg5[%c0_175, %c0_176] : memref<1x128xf32, #tpu.memory_space<vmem>>, vector<1x128xf32>
    %444 = vector.broadcast %443 : vector<1x128xf32> to vector<64x128xf32>
    %445 = arith.addf %442, %444 : vector<64x128xf32>
    %446 = vector.shape_cast %445 : vector<64x128xf32> to vector<8x8x128xf32>
    %c0_177 = arith.constant 0 : index
    %c0_178 = arith.constant 0 : index
    %c0_179 = arith.constant 0 : index
    %447 = vector.load %arg6[%c0_177, %c0_178, %c0_179] : memref<8x8x128xf32, #tpu.memory_space<vmem>>, vector<8x8x128xf32>
    tpu.vector_store %arg6[%c0_177, %c0_178, %c0_179], %446 {strides = array<i32>} : memref<8x8x128xf32, #tpu.memory_space<vmem>>, vector<8x8x128xf32>,
    return
  }
}

</mosaic_0001>

<llo_original>
// kernel: tpu_custom_call.1
$region0: #{tpu_custom_call.1}
  #allocation0 [shape = 'u32[]', space=smem, size = 0x4, offset = 0x4, fixed_abs, tag = 'smem constant byte address 0x4 - core index']
  #allocation1 [shape = 'u32[144,128]{1,0:T(1,128)}', space=vmem, size = 0x12000, scoped, tag = 'internal scratch']
  #allocation2 [shape = 'f32[8,8,512]{2,1,0:T(8,128)}', space=vmem, size = 0x20000, scoped, tag = 'scratch operand']
  #allocation3 [shape = 'f32[8,8,128]{2,1,0:T(8,128)}', space=vmem, size = 0x8000, scoped, tag = 'scratch operand']
  %s0 = inlined_call_operand.hbm [shape: f32[8,8,128], index: 0, kind: input, shape index: {}]
  %s1 = inlined_call_operand.hbm [shape: f32[128,512], index: 1, kind: input, shape index: {}]
  %s2 = inlined_call_operand.hbm [shape: f32[128,512], index: 2, kind: input, shape index: {}]
  %s3 = inlined_call_operand.vmem [shape: f32[1,512], index: 3, kind: input, shape index: {}]
  %s4 = inlined_call_operand.hbm [shape: f32[128,128], index: 4, kind: input, shape index: {}]
  %s5 = inlined_call_operand.vmem [shape: f32[1,128], index: 5, kind: input, shape index: {}]
  %s6 = inlined_call_operand.hbm [shape: f32[8,8,128], index: 6, kind: output, shape index: {}]
  %s7 = sld [smem:[#allocation0]]
  $region50: #{tpu_custom_call.1} parent=0
    _
  %s9 = ssub.s32 1, %s7
  %s10 = scalar_select 0, %s9, %s7
  $region1: #{tpu_custom_call.1} parent=0
    #allocation4 [shape = 'u8[32768]{0}', space=vmem, size = 0x8000, scoped, tag = 'input window, operand 0, single buffered']
    #allocation5 [shape = 's32[1]{0}', space=sflag, size = 0x4, scoped, tag = 'scoped memory for tpu_custom_call.1']
    #allocation6 [shape = 's32[1]{0}', space=sflag, size = 0x4, scoped, tag = 'scoped memory for tpu_custom_call.1']
    #allocation7 [shape = 'u8[262144]{0}', space=vmem, size = 0x40000, scoped, tag = 'input window, operand 1, single buffered']
    #allocation8 [shape = 's32[1]{0}', space=sflag, size = 0x4, scoped, tag = 'scoped memory for tpu_custom_call.1']
    #allocation9 [shape = 'u8[262144]{0}', space=vmem, size = 0x40000, scoped, tag = 'input window, operand 2, single buffered']
    #allocation10 [shape = 'u8[65536]{0}', space=vmem, size = 0x10000, scoped, tag = 'input window, operand 4, single buffered']
    #allocation11 [shape = 's32[1]{0}', space=sflag, size = 0x4, scoped, tag = 'scoped memory for tpu_custom_call.1']
    #allocation12 [shape = 'u8[32768]{0}', space=vmem, size = 0x8000, scoped, tag = 'output window, operand 0, single buffered']
    %11 = vsyncpa [#allocation5], 0
    %12 = vsyncpa [#allocation8], 0
    %13 = vsyncpa [#allocation11], 0
    %14 = vsyncpa [#allocation6], 0
    // Predicated region
    $region2: #{tpu_custom_call.1} parent=1 // pred_check
      _
    $region3: #{tpu_custom_call.1} parent=1 // pred_check_branch
      %16 = sbr.rel (0) target = $region5
    $region4: #{tpu_custom_call.1} parent=1 // pred_region
      %s18 = ssub.s32 1024, 1024
      %19 = vsyncadd [#allocation5], %s18
      %s20 = sshll.u32 [#allocation4], 4
      %s21 = int_to_ptr.vmem [resolvable:$true] %s20
      %26 = dma.hbm_to_vmem [thread:$0]  %s0, 1024, %s21, [#allocation5], 128, 128, 8
    $region5: #{tpu_custom_call.1} parent=1 // pred_fallthru
      _
    // Predicated region
    $region6: #{tpu_custom_call.1} parent=1 // pred_check
      _
    $region7: #{tpu_custom_call.1} parent=1 // pred_check_branch
      %28 = sbr.rel (0) target = $region9
    $region8: #{tpu_custom_call.1} parent=1 // pred_region
      %s30 = ssub.s32 8192, 8192
      %31 = vsyncadd [#allocation8], %s30
      %s32 = sshll.u32 [#allocation7], 4
      %s33 = int_to_ptr.vmem [resolvable:$true] %s32
      %38 = dma.hbm_to_vmem [thread:$0]  %s1, 8192, %s33, [#allocation8], 512, 512, 32
    $region9: #{tpu_custom_call.1} parent=1 // pred_fallthru
      _
    // Predicated region
    $region10: #{tpu_custom_call.1} parent=1 // pred_check
      _
    $region11: #{tpu_custom_call.1} parent=1 // pred_check_branch
      %40 = sbr.rel (0) target = $region13
    $region12: #{tpu_custom_call.1} parent=1 // pred_region
      %s42 = ssub.s32 8192, 8192
      %43 = vsyncadd [#allocation8], %s42
      %s44 = sshll.u32 [#allocation9], 4
      %s45 = int_to_ptr.vmem [resolvable:$true] %s44
      %50 = dma.hbm_to_vmem [thread:$0]  %s2, 8192, %s45, [#allocation8], 512, 512, 32
    $region13: #{tpu_custom_call.1} parent=1 // pred_fallthru
      _
    // Predicated region
    $region14: #{tpu_custom_call.1} parent=1 // pred_check
      _
    $region15: #{tpu_custom_call.1} parent=1 // pred_check_branch
      %52 = sbr.rel (0) target = $region17
    $region16: #{tpu_custom_call.1} parent=1 // pred_region
      _
    $region17: #{tpu_custom_call.1} parent=1 // pred_fallthru
      _
    // Predicated region
    $region18: #{tpu_custom_call.1} parent=1 // pred_check
      _
    $region19: #{tpu_custom_call.1} parent=1 // pred_check_branch
      %54 = sbr.rel (0) target = $region21
    $region20: #{tpu_custom_call.1} parent=1 // pred_region
      %s56 = ssub.s32 2048, 2048
      %57 = vsyncadd [#allocation11], %s56
      %s58 = sshll.u32 [#allocation10], 4
      %s59 = int_to_ptr.vmem [resolvable:$true] %s58
      %64 = dma.hbm_to_vmem [thread:$0]  %s4, 2048, %s59, [#allocation11], 128, 128, 8
    $region21: #{tpu_custom_call.1} parent=1 // pred_fallthru
      _
    // Predicated region
    $region22: #{tpu_custom_call.1} parent=1 // pred_check
      _
    $region23: #{tpu_custom_call.1} parent=1 // pred_check_branch
      %66 = sbr.rel (0) target = $region25
    $region24: #{tpu_custom_call.1} parent=1 // pred_region
      _
    $region25: #{tpu_custom_call.1} parent=1 // pred_fallthru
      _
    // Predicated region
    $region26: #{tpu_custom_call.1} parent=1 // pred_check
      _
    $region27: #{tpu_custom_call.1} parent=1 // pred_check_branch
      %68 = sbr.rel (0) target = $region29
    $region28: #{tpu_custom_call.1} parent=1 // pred_region
      %69 = dma.done [#allocation5], 1024
    $region29: #{tpu_custom_call.1} parent=1 // pred_fallthru
      _
    // Predicated region
    $region30: #{tpu_custom_call.1} parent=1 // pred_check
      _
    $region31: #{tpu_custom_call.1} parent=1 // pred_check_branch
      %71 = sbr.rel (0) target = $region33
    $region32: #{tpu_custom_call.1} parent=1 // pred_region
      %72 = dma.done [#allocation8], 8192
    $region33: #{tpu_custom_call.1} parent=1 // pred_fallthru
      _
    // Predicated region
    $region34: #{tpu_custom_call.1} parent=1 // pred_check
      _
    $region35: #{tpu_custom_call.1} parent=1 // pred_check_branch
      %74 = sbr.rel (0) target = $region37
    $region36: #{tpu_custom_call.1} parent=1 // pred_region
      %75 = dma.done [#allocation8], 8192
    $region37: #{tpu_custom_call.1} parent=1 // pred_fallthru
      _
    // Predicated region
    $region38: #{tpu_custom_call.1} parent=1 // pred_check
      _
    $region39: #{tpu_custom_call.1} parent=1 // pred_check_branch
      %77 = sbr.rel (0) target = $region41
    $region40: #{tpu_custom_call.1} parent=1 // pred_region
      %78 = dma.done [#allocation11], 2048
    $region41: #{tpu_custom_call.1} parent=1 // pred_fallthru
      _
    %v79 = vld [vmem:[#allocation4] sm:$0xff]
    %v80 = vld [vmem:[#allocation4 + $0x8] sm:$0xff]
    %v81 = vld [vmem:[#allocation4 + $0x10] sm:$0xff]
    %v82 = vld [vmem:[#allocation4 + $0x18] sm:$0xff]
    %v83 = vld [vmem:[#allocation4 + $0x20] sm:$0xff]
    %v84 = vld [vmem:[#allocation4 + $0x28] sm:$0xff]
    %v85 = vld [vmem:[#allocation4 + $0x30] sm:$0xff]
    %v86 = vld [vmem:[#allocation4 + $0x38] sm:$0xff]
    %v87 = vld [vmem:[#allocation7] sm:$0xff]
    %v88 = vld [vmem:[#allocation7 + $0x8] sm:$0xff]
    %v89 = vld [vmem:[#allocation7 + $0x10] sm:$0xff]
    %v90 = vld [vmem:[#allocation7 + $0x18] sm:$0xff]
    %v91 = vld [vmem:[#allocation7 + $0x20] sm:$0xff]
    %v92 = vld [vmem:[#allocation7 + $0x28] sm:$0xff]
    %v93 = vld [vmem:[#allocation7 + $0x30] sm:$0xff]
    %v94 = vld [vmem:[#allocation7 + $0x38] sm:$0xff]
    %v95 = vld [vmem:[#allocation7 + $0x40] sm:$0xff]
    %v96 = vld [vmem:[#allocation7 + $0x48] sm:$0xff]
    %v97 = vld [vmem:[#allocation7 + $0x50] sm:$0xff]
    %v98 = vld [vmem:[#allocation7 + $0x58] sm:$0xff]
    %v99 = vld [vmem:[#allocation7 + $0x60] sm:$0xff]
    %v100 = vld [vmem:[#allocation7 + $0x68] sm:$0xff]
    %v101 = vld [vmem:[#allocation7 + $0x70] sm:$0xff]
    %v102 = vld [vmem:[#allocation7 + $0x78] sm:$0xff]
    %v103 = vld [vmem:[#allocation7 + $0x80] sm:$0xff]
    %v104 = vld [vmem:[#allocation7 + $0x88] sm:$0xff]
    %v105 = vld [vmem:[#allocation7 + $0x90] sm:$0xff]
    %v106 = vld [vmem:[#allocation7 + $0x98] sm:$0xff]
    %v107 = vld [vmem:[#allocation7 + $0xa0] sm:$0xff]
    %v108 = vld [vmem:[#allocation7 + $0xa8] sm:$0xff]
    %v109 = vld [vmem:[#allocation7 + $0xb0] sm:$0xff]
    %v110 = vld [vmem:[#allocation7 + $0xb8] sm:$0xff]
    %v111 = vld [vmem:[#allocation7 + $0xc0] sm:$0xff]
    %v112 = vld [vmem:[#allocation7 + $0xc8] sm:$0xff]
    %v113 = vld [vmem:[#allocation7 + $0xd0] sm:$0xff]
    %v114 = vld [vmem:[#allocation7 + $0xd8] sm:$0xff]
    %v115 = vld [vmem:[#allocation7 + $0xe0] sm:$0xff]
    %v116 = vld [vmem:[#allocation7 + $0xe8] sm:$0xff]
    %v117 = vld [vmem:[#allocation7 + $0xf0] sm:$0xff]
    %v118 = vld [vmem:[#allocation7 + $0xf8] sm:$0xff]
    %v119 = vld [vmem:[#allocation7 + $0x100] sm:$0xff]
    %v120 = vld [vmem:[#allocation7 + $0x108] sm:$0xff]
    %v121 = vld [vmem:[#allocation7 + $0x110] sm:$0xff]
    %v122 = vld [vmem:[#allocation7 + $0x118] sm:$0xff]
    %v123 = vld [vmem:[#allocation7 + $0x120] sm:$0xff]
    %v124 = vld [vmem:[#allocation7 + $0x128] sm:$0xff]
    %v125 = vld [vmem:[#allocation7 + $0x130] sm:$0xff]
    %v126 = vld [vmem:[#allocation7 + $0x138] sm:$0xff]
    %v127 = vld [vmem:[#allocation7 + $0x140] sm:$0xff]
    %v128 = vld [vmem:[#allocation7 + $0x148] sm:$0xff]
    %v129 = vld [vmem:[#allocation7 + $0x150] sm:$0xff]
    %v130 = vld [vmem:[#allocation7 + $0x158] sm:$0xff]
    %v131 = vld [vmem:[#allocation7 + $0x160] sm:$0xff]
    %v132 = vld [vmem:[#allocation7 + $0x168] sm:$0xff]
    %v133 = vld [vmem:[#allocation7 + $0x170] sm:$0xff]
    %v134 = vld [vmem:[#allocation7 + $0x178] sm:$0xff]
    %v135 = vld [vmem:[#allocation7 + $0x180] sm:$0xff]
    %v136 = vld [vmem:[#allocation7 + $0x188] sm:$0xff]
    %v137 = vld [vmem:[#allocation7 + $0x190] sm:$0xff]
    %v138 = vld [vmem:[#allocation7 + $0x198] sm:$0xff]
    %v139 = vld [vmem:[#allocation7 + $0x1a0] sm:$0xff]
    %v140 = vld [vmem:[#allocation7 + $0x1a8] sm:$0xff]
    %v141 = vld [vmem:[#allocation7 + $0x1b0] sm:$0xff]
    %v142 = vld [vmem:[#allocation7 + $0x1b8] sm:$0xff]
    %v143 = vld [vmem:[#allocation7 + $0x1c0] sm:$0xff]
    %v144 = vld [vmem:[#allocation7 + $0x1c8] sm:$0xff]
    %v145 = vld [vmem:[#allocation7 + $0x1d0] sm:$0xff]
    %v146 = vld [vmem:[#allocation7 + $0x1d8] sm:$0xff]
    %v147 = vld [vmem:[#allocation7 + $0x1e0] sm:$0xff]
    %v148 = vld [vmem:[#allocation7 + $0x1e8] sm:$0xff]
    %v149 = vld [vmem:[#allocation7 + $0x1f0] sm:$0xff]
    %v150 = vld [vmem:[#allocation7 + $0x1f8] sm:$0xff]
    %v151 = vld [vmem:[%s3] sm:$0xf]
    %v153 = vlaneseq
    %v154 = vshrl.u32 %v153, 7
    %v155 = vsub.s32 0, %v154
    %v156 = vrot.slane %v151, %v155
    %v157 = vlaneseq
    %v158 = vshrl.u32 %v157, 7
    %v159 = vsub.s32 1, %v158
    %v160 = vrot.slane %v151, %v159
    %v161 = vlaneseq
    %v162 = vshrl.u32 %v161, 7
    %v163 = vsub.s32 2, %v162
    %v164 = vrot.slane %v151, %v163
    %v165 = vlaneseq
    %v166 = vshrl.u32 %v165, 7
    %v167 = vsub.s32 3, %v166
    %v168 = vrot.slane %v151, %v167
    %173 = vmatprep.subr.mxu0 %v148
    %174 = vmatpush1.msra.mxu0 %v147
    %175 = vmatprep.subr.mxu0 %v144
    %176 = vmatpush1.msra.mxu0 %v143
    %177 = vmatprep.subr.mxu0 %v140
    %178 = vmatpush1.msra.mxu0 %v139
    %179 = vmatprep.subr.mxu0 %v136
    %180 = vmatpush1.msra.mxu0 %v135
    %181 = vmatprep.subr.mxu0 %v132
    %182 = vmatpush1.msra.mxu0 %v131
    %183 = vmatprep.subr.mxu0 %v128
    %184 = vmatpush1.msra.mxu0 %v127
    %185 = vmatprep.subr.mxu0 %v124
    %186 = vmatpush1.msra.mxu0 %v123
    %187 = vmatprep.subr.mxu0 %v120
    %188 = vmatpush1.msra.mxu0 %v119
    %189 = vmatprep.subr.mxu0 %v116
    %190 = vmatpush1.msra.mxu0 %v115
    %191 = vmatprep.subr.mxu0 %v112
    %192 = vmatpush1.msra.mxu0 %v111
    %193 = vmatprep.subr.mxu0 %v108
    %194 = vmatpush1.msra.mxu0 %v107
    %195 = vmatprep.subr.mxu0 %v104
    %196 = vmatpush1.msra.mxu0 %v103
    %197 = vmatprep.subr.mxu0 %v100
    %198 = vmatpush1.msra.mxu0 %v99
    %199 = vmatprep.subr.mxu0 %v96
    %200 = vmatpush1.msra.mxu0 %v95
    %201 = vmatprep.subr.mxu0 %v92
    %202 = vmatpush1.msra.mxu0 %v91
    %203 = vmatprep.subr.mxu0 %v88
    %204 = vmatpush1.msra.mxu0 %v87
    %205 = vmatprep.subr.mxu0 0.0
    %206 = vmatpush2.msra.mxu0 0.0
    %207 = vmatprep.subr.mxu0 0.0
    %208 = vmatpush2.msra.mxu0 0.0
    %209 = vmatprep.subr.mxu0 0.0
    %210 = vmatpush2.msra.mxu0 0.0
    %211 = vmatprep.subr.mxu0 0.0
    %212 = vmatpush2.msra.mxu0 0.0
    %213 = vmatprep.subr.mxu0 0.0
    %214 = vmatpush2.msra.mxu0 0.0
    %215 = vmatprep.subr.mxu0 0.0
    %216 = vmatpush2.msra.mxu0 0.0
    %217 = vmatprep.subr.mxu0 0.0
    %218 = vmatpush2.msra.mxu0 0.0
    %219 = vmatprep.subr.mxu0 0.0
    %220 = vmatpush2.msra.mxu0 0.0
    %221 = vmatprep.subr.mxu0 0.0
    %222 = vmatpush2.msra.mxu0 0.0
    %223 = vmatprep.subr.mxu0 0.0
    %224 = vmatpush2.msra.mxu0 0.0
    %225 = vmatprep.subr.mxu0 0.0
    %226 = vmatpush2.msra.mxu0 0.0
    %227 = vmatprep.subr.mxu0 0.0
    %228 = vmatpush2.msra.mxu0 0.0
    %229 = vmatprep.subr.mxu0 0.0
    %230 = vmatpush2.msra.mxu0 0.0
    %231 = vmatprep.subr.mxu0 0.0
    %232 = vmatpush2.msra.mxu0 0.0
    %233 = vmatprep.subr.mxu0 0.0
    %234 = vmatpush2.msra.mxu0 0.0
    %235 = vmatprep.subr.mxu0 0.0
    %236 = vmatpush2.msra.mxu0 0.0
    %237 = vmatprep.mubr.f32.mxu0 0.0
    %238 = vmatmul.mubr.f32.gmra.mxu0 %v79
    %v239 = vpop.f32.mrf.mxu0
    %v240 = vadd.f32 %v156, %v239
    %v241 = vpop.f32.mrf.mxu0
    %v242 = vadd.f32 %v160, %v241
    %243 = vmatprep.mubr.f32.mxu0 0.0
    %244 = vmatmul.mubr.f32.gmra.mxu0 %v80
    %v245 = vpop.f32.mrf.mxu0
    %v246 = vadd.f32 %v156, %v245
    %v247 = vpop.f32.mrf.mxu0
    %v248 = vadd.f32 %v160, %v247
    %249 = vmatprep.mubr.f32.mxu0 0.0
    %250 = vmatmul.mubr.f32.gmra.mxu0 %v81
    %v251 = vpop.f32.mrf.mxu0
    %v252 = vadd.f32 %v156, %v251
    %v253 = vpop.f32.mrf.mxu0
    %v254 = vadd.f32 %v160, %v253
    %255 = vmatprep.mubr.f32.mxu0 0.0
    %256 = vmatmul.mubr.f32.gmra.mxu0 %v82
    %v257 = vpop.f32.mrf.mxu0
    %v258 = vadd.f32 %v156, %v257
    %v259 = vpop.f32.mrf.mxu0
    %v260 = vadd.f32 %v160, %v259
    %261 = vmatprep.mubr.f32.mxu0 0.0
    %262 = vmatmul.mubr.f32.gmra.mxu0 %v83
    %v263 = vpop.f32.mrf.mxu0
    %v264 = vadd.f32 %v156, %v263
    %v265 = vpop.f32.mrf.mxu0
    %v266 = vadd.f32 %v160, %v265
    %267 = vmatprep.mubr.f32.mxu0 0.0
    %268 = vmatmul.mubr.f32.gmra.mxu0 %v84
    %v269 = vpop.f32.mrf.mxu0
    %v270 = vadd.f32 %v156, %v269
    %v271 = vpop.f32.mrf.mxu0
    %v272 = vadd.f32 %v160, %v271
    %273 = vmatprep.mubr.f32.mxu0 0.0
    %274 = vmatmul.mubr.f32.gmra.mxu0 %v85
    %v275 = vpop.f32.mrf.mxu0
    %v276 = vadd.f32 %v156, %v275
    %v277 = vpop.f32.mrf.mxu0
    %v278 = vadd.f32 %v160, %v277
    %279 = vmatprep.mubr.f32.mxu0 0.0
    %280 = vmatmul.mubr.f32.gmra.mxu0 %v86
    %v281 = vpop.f32.mrf.mxu0
    %v282 = vadd.f32 %v156, %v281
    %v283 = vpop.f32.mrf.mxu0
    %v284 = vadd.f32 %v160, %v283
    %285 = vdwg.mxu0
    %286 = vmatprep.subr.mxu0 %v150
    %287 = vmatpush1.msra.mxu0 %v149
    %288 = vmatprep.subr.mxu0 %v146
    %289 = vmatpush1.msra.mxu0 %v145
    %290 = vmatprep.subr.mxu0 %v142
    %291 = vmatpush1.msra.mxu0 %v141
    %292 = vmatprep.subr.mxu0 %v138
    %293 = vmatpush1.msra.mxu0 %v137
    %294 = vmatprep.subr.mxu0 %v134
    %295 = vmatpush1.msra.mxu0 %v133
    %296 = vmatprep.subr.mxu0 %v130
    %297 = vmatpush1.msra.mxu0 %v129
    %298 = vmatprep.subr.mxu0 %v126
    %299 = vmatpush1.msra.mxu0 %v125
    %300 = vmatprep.subr.mxu0 %v122
    %301 = vmatpush1.msra.mxu0 %v121
    %302 = vmatprep.subr.mxu0 %v118
    %303 = vmatpush1.msra.mxu0 %v117
    %304 = vmatprep.subr.mxu0 %v114
    %305 = vmatpush1.msra.mxu0 %v113
    %306 = vmatprep.subr.mxu0 %v110
    %307 = vmatpush1.msra.mxu0 %v109
    %308 = vmatprep.subr.mxu0 %v106
    %309 = vmatpush1.msra.mxu0 %v105
    %310 = vmatprep.subr.mxu0 %v102
    %311 = vmatpush1.msra.mxu0 %v101
    %312 = vmatprep.subr.mxu0 %v98
    %313 = vmatpush1.msra.mxu0 %v97
    %314 = vmatprep.subr.mxu0 %v94
    %315 = vmatpush1.msra.mxu0 %v93
    %316 = vmatprep.subr.mxu0 %v90
    %317 = vmatpush1.msra.mxu0 %v89
    %318 = vmatprep.subr.mxu0 0.0
    %319 = vmatpush2.msra.mxu0 0.0
    %320 = vmatprep.subr.mxu0 0.0
    %321 = vmatpush2.msra.mxu0 0.0
    %322 = vmatprep.subr.mxu0 0.0
    %323 = vmatpush2.msra.mxu0 0.0
    %324 = vmatprep.subr.mxu0 0.0
    %325 = vmatpush2.msra.mxu0 0.0
    %326 = vmatprep.subr.mxu0 0.0
    %327 = vmatpush2.msra.mxu0 0.0
    %328 = vmatprep.subr.mxu0 0.0
    %329 = vmatpush2.msra.mxu0 0.0
    %330 = vmatprep.subr.mxu0 0.0
    %331 = vmatpush2.msra.mxu0 0.0
    %332 = vmatprep.subr.mxu0 0.0
    %333 = vmatpush2.msra.mxu0 0.0
    %334 = vmatprep.subr.mxu0 0.0
    %335 = vmatpush2.msra.mxu0 0.0
    %336 = vmatprep.subr.mxu0 0.0
    %337 = vmatpush2.msra.mxu0 0.0
    %338 = vmatprep.subr.mxu0 0.0
    %339 = vmatpush2.msra.mxu0 0.0
    %340 = vmatprep.subr.mxu0 0.0
    %341 = vmatpush2.msra.mxu0 0.0
    %342 = vmatprep.subr.mxu0 0.0
    %343 = vmatpush2.msra.mxu0 0.0
    %344 = vmatprep.subr.mxu0 0.0
    %345 = vmatpush2.msra.mxu0 0.0
    %346 = vmatprep.subr.mxu0 0.0
    %347 = vmatpush2.msra.mxu0 0.0
    %348 = vmatprep.subr.mxu0 0.0
    %349 = vmatpush2.msra.mxu0 0.0
    %350 = vmatprep.mubr.f32.mxu0 0.0
    %351 = vmatmul.mubr.f32.gmra.mxu0 %v79
    %v352 = vpop.f32.mrf.mxu0
    %v353 = vadd.f32 %v164, %v352
    %v354 = vpop.f32.mrf.mxu0
    %v355 = vadd.f32 %v168, %v354
    %356 = vmatprep.mubr.f32.mxu0 0.0
    %357 = vmatmul.mubr.f32.gmra.mxu0 %v80
    %v358 = vpop.f32.mrf.mxu0
    %v359 = vadd.f32 %v164, %v358
    %v360 = vpop.f32.mrf.mxu0
    %v361 = vadd.f32 %v168, %v360
    %362 = vmatprep.mubr.f32.mxu0 0.0
    %363 = vmatmul.mubr.f32.gmra.mxu0 %v81
    %v364 = vpop.f32.mrf.mxu0
    %v365 = vadd.f32 %v164, %v364
    %v366 = vpop.f32.mrf.mxu0
    %v367 = vadd.f32 %v168, %v366
    %368 = vmatprep.mubr.f32.mxu0 0.0
    %369 = vmatmul.mubr.f32.gmra.mxu0 %v82
    %v370 = vpop.f32.mrf.mxu0
    %v371 = vadd.f32 %v164, %v370
    %v372 = vpop.f32.mrf.mxu0
    %v373 = vadd.f32 %v168, %v372
    %374 = vmatprep.mubr.f32.mxu0 0.0
    %375 = vmatmul.mubr.f32.gmra.mxu0 %v83
    %v376 = vpop.f32.mrf.mxu0
    %v377 = vadd.f32 %v164, %v376
    %v378 = vpop.f32.mrf.mxu0
    %v379 = vadd.f32 %v168, %v378
    %380 = vmatprep.mubr.f32.mxu0 0.0
    %381 = vmatmul.mubr.f32.gmra.mxu0 %v84
    %v382 = vpop.f32.mrf.mxu0
    %v383 = vadd.f32 %v164, %v382
    %v384 = vpop.f32.mrf.mxu0
    %v385 = vadd.f32 %v168, %v384
    %386 = vmatprep.mubr.f32.mxu0 0.0
    %387 = vmatmul.mubr.f32.gmra.mxu0 %v85
    %v388 = vpop.f32.mrf.mxu0
    %v389 = vadd.f32 %v164, %v388
    %v390 = vpop.f32.mrf.mxu0
    %v391 = vadd.f32 %v168, %v390
    %392 = vmatprep.mubr.f32.mxu0 0.0
    %393 = vmatmul.mubr.f32.gmra.mxu0 %v86
    %v394 = vpop.f32.mrf.mxu0
    %v395 = vadd.f32 %v164, %v394
    %v396 = vpop.f32.mrf.mxu0
    %v397 = vadd.f32 %v168, %v396
    %398 = vdwg.mxu0
    %399 = vst [vmem:[#allocation2] sm:$0xff] %v240
    %400 = vst [vmem:[#allocation2 + $0x8] sm:$0xff] %v242
    %401 = vst [vmem:[#allocation2 + $0x10] sm:$0xff] %v353
    %402 = vst [vmem:[#allocation2 + $0x18] sm:$0xff] %v355
    %403 = vst [vmem:[#allocation2 + $0x20] sm:$0xff] %v246
    %404 = vst [vmem:[#allocation2 + $0x28] sm:$0xff] %v248
    %405 = vst [vmem:[#allocation2 + $0x30] sm:$0xff] %v359
    %406 = vst [vmem:[#allocation2 + $0x38] sm:$0xff] %v361
    %407 = vst [vmem:[#allocation2 + $0x40] sm:$0xff] %v252
    %408 = vst [vmem:[#allocation2 + $0x48] sm:$0xff] %v254
    %409 = vst [vmem:[#allocation2 + $0x50] sm:$0xff] %v365
    %410 = vst [vmem:[#allocation2 + $0x58] sm:$0xff] %v367
    %411 = vst [vmem:[#allocation2 + $0x60] sm:$0xff] %v258
    %412 = vst [vmem:[#allocation2 + $0x68] sm:$0xff] %v260
    %413 = vst [vmem:[#allocation2 + $0x70] sm:$0xff] %v371
    %414 = vst [vmem:[#allocation2 + $0x78] sm:$0xff] %v373
    %415 = vst [vmem:[#allocation2 + $0x80] sm:$0xff] %v264
    %416 = vst [vmem:[#allocation2 + $0x88] sm:$0xff] %v266
    %417 = vst [vmem:[#allocation2 + $0x90] sm:$0xff] %v377
    %418 = vst [vmem:[#allocation2 + $0x98] sm:$0xff] %v379
    %419 = vst [vmem:[#allocation2 + $0xa0] sm:$0xff] %v270
    %420 = vst [vmem:[#allocation2 + $0xa8] sm:$0xff] %v272
    %421 = vst [vmem:[#allocation2 + $0xb0] sm:$0xff] %v383
    %422 = vst [vmem:[#allocation2 + $0xb8] sm:$0xff] %v385
    %423 = vst [vmem:[#allocation2 + $0xc0] sm:$0xff] %v276
    %424 = vst [vmem:[#allocation2 + $0xc8] sm:$0xff] %v278
    %425 = vst [vmem:[#allocation2 + $0xd0] sm:$0xff] %v389
    %426 = vst [vmem:[#allocation2 + $0xd8] sm:$0xff] %v391
    %427 = vst [vmem:[#allocation2 + $0xe0] sm:$0xff] %v282
    %428 = vst [vmem:[#allocation2 + $0xe8] sm:$0xff] %v284
    %429 = vst [vmem:[#allocation2 + $0xf0] sm:$0xff] %v395
    %430 = vst [vmem:[#allocation2 + $0xf8] sm:$0xff] %v397
    %v431 = vld [vmem:[#allocation9] sm:$0xff]
    %v432 = vld [vmem:[#allocation9 + $0x8] sm:$0xff]
    %v433 = vld [vmem:[#allocation9 + $0x10] sm:$0xff]
    %v434 = vld [vmem:[#allocation9 + $0x18] sm:$0xff]
    %v435 = vld [vmem:[#allocation9 + $0x20] sm:$0xff]
    %v436 = vld [vmem:[#allocation9 + $0x28] sm:$0xff]
    %v437 = vld [vmem:[#allocation9 + $0x30] sm:$0xff]
    %v438 = vld [vmem:[#allocation9 + $0x38] sm:$0xff]
    %v439 = vld [vmem:[#allocation9 + $0x40] sm:$0xff]
    %v440 = vld [vmem:[#allocation9 + $0x48] sm:$0xff]
    %v441 = vld [vmem:[#allocation9 + $0x50] sm:$0xff]
    %v442 = vld [vmem:[#allocation9 + $0x58] sm:$0xff]
    %v443 = vld [vmem:[#allocation9 + $0x60] sm:$0xff]
    %v444 = vld [vmem:[#allocation9 + $0x68] sm:$0xff]
    %v445 = vld [vmem:[#allocation9 + $0x70] sm:$0xff]
    %v446 = vld [vmem:[#allocation9 + $0x78] sm:$0xff]
    %v447 = vld [vmem:[#allocation9 + $0x80] sm:$0xff]
    %v448 = vld [vmem:[#allocation9 + $0x88] sm:$0xff]
    %v449 = vld [vmem:[#allocation9 + $0x90] sm:$0xff]
    %v450 = vld [vmem:[#allocation9 + $0x98] sm:$0xff]
    %v451 = vld [vmem:[#allocation9 + $0xa0] sm:$0xff]
    %v452 = vld [vmem:[#allocation9 + $0xa8] sm:$0xff]
    %v453 = vld [vmem:[#allocation9 + $0xb0] sm:$0xff]
    %v454 = vld [vmem:[#allocation9 + $0xb8] sm:$0xff]
    %v455 = vld [vmem:[#allocation9 + $0xc0] sm:$0xff]
    %v456 = vld [vmem:[#allocation9 + $0xc8] sm:$0xff]
    %v457 = vld [vmem:[#allocation9 + $0xd0] sm:$0xff]
    %v458 = vld [vmem:[#allocation9 + $0xd8] sm:$0xff]
    %v459 = vld [vmem:[#allocation9 + $0xe0] sm:$0xff]
    %v460 = vld [vmem:[#allocation9 + $0xe8] sm:$0xff]
    %v461 = vld [vmem:[#allocation9 + $0xf0] sm:$0xff]
    %v462 = vld [vmem:[#allocation9 + $0xf8] sm:$0xff]
    %v463 = vld [vmem:[#allocation9 + $0x100] sm:$0xff]
    %v464 = vld [vmem:[#allocation9 + $0x108] sm:$0xff]
    %v465 = vld [vmem:[#allocation9 + $0x110] sm:$0xff]
    %v466 = vld [vmem:[#allocation9 + $0x118] sm:$0xff]
    %v467 = vld [vmem:[#allocation9 + $0x120] sm:$0xff]
    %v468 = vld [vmem:[#allocation9 + $0x128] sm:$0xff]
    %v469 = vld [vmem:[#allocation9 + $0x130] sm:$0xff]
    %v470 = vld [vmem:[#allocation9 + $0x138] sm:$0xff]
    %v471 = vld [vmem:[#allocation9 + $0x140] sm:$0xff]
    %v472 = vld [vmem:[#allocation9 + $0x148] sm:$0xff]
    %v473 = vld [vmem:[#allocation9 + $0x150] sm:$0xff]
    %v474 = vld [vmem:[#allocation9 + $0x158] sm:$0xff]
    %v475 = vld [vmem:[#allocation9 + $0x160] sm:$0xff]
    %v476 = vld [vmem:[#allocation9 + $0x168] sm:$0xff]
    %v477 = vld [vmem:[#allocation9 + $0x170] sm:$0xff]
    %v478 = vld [vmem:[#allocation9 + $0x178] sm:$0xff]
    %v479 = vld [vmem:[#allocation9 + $0x180] sm:$0xff]
    %v480 = vld [vmem:[#allocation9 + $0x188] sm:$0xff]
    %v481 = vld [vmem:[#allocation9 + $0x190] sm:$0xff]
    %v482 = vld [vmem:[#allocation9 + $0x198] sm:$0xff]
    %v483 = vld [vmem:[#allocation9 + $0x1a0] sm:$0xff]
    %v484 = vld [vmem:[#allocation9 + $0x1a8] sm:$0xff]
    %v485 = vld [vmem:[#allocation9 + $0x1b0] sm:$0xff]
    %v486 = vld [vmem:[#allocation9 + $0x1b8] sm:$0xff]
    %v487 = vld [vmem:[#allocation9 + $0x1c0] sm:$0xff]
    %v488 = vld [vmem:[#allocation9 + $0x1c8] sm:$0xff]
    %v489 = vld [vmem:[#allocation9 + $0x1d0] sm:$0xff]
    %v490 = vld [vmem:[#allocation9 + $0x1d8] sm:$0xff]
    %v491 = vld [vmem:[#allocation9 + $0x1e0] sm:$0xff]
    %v492 = vld [vmem:[#allocation9 + $0x1e8] sm:$0xff]
    %v493 = vld [vmem:[#allocation9 + $0x1f0] sm:$0xff]
    %v494 = vld [vmem:[#allocation9 + $0x1f8] sm:$0xff]
    %v495 = vlaneseq
    %v496 = vand.u32 %v495, 127
    %v497 = vadd.s32 %v496, 128
    %v498 = vadd.s32 %v496, 256
    %v499 = vadd.s32 %v496, 384
    %vm500 = vcmp.lt.s32.totalorder %v496, 0
    %v501 = vsub.s32 0, %v496
    %v502 = vsel %vm500, %v501, %v496
    %v503 = vshrl.u32 %v502, 7
    %v504 = vand.u32 %v502, 127
    %v505 = vsub.s32 0, %v504
    %v506 = vsel %vm500, %v505, %v504
    %vm507 = vcmp.lt.s32.totalorder %v497, 0
    %v508 = vsub.s32 0, %v497
    %v509 = vsel %vm507, %v508, %v497
    %v510 = vshrl.u32 %v509, 7
    %v511 = vand.u32 %v509, 127
    %v512 = vsub.s32 0, %v511
    %v513 = vsel %vm507, %v512, %v511
    %vm514 = vcmp.lt.s32.totalorder %v498, 0
    %v515 = vsub.s32 0, %v498
    %v516 = vsel %vm514, %v515, %v498
    %v517 = vshrl.u32 %v516, 7
    %v518 = vand.u32 %v516, 127
    %v519 = vsub.s32 0, %v518
    %v520 = vsel %vm514, %v519, %v518
    %vm521 = vcmp.lt.s32.totalorder %v499, 0
    %v522 = vsub.s32 0, %v499
    %v523 = vsel %vm521, %v522, %v499
    %v524 = vshrl.u32 %v523, 7
    %v525 = vand.u32 %v523, 127
    %v526 = vsub.s32 0, %v525
    %v527 = vsel %vm521, %v526, %v525
    %vm528 = vcmp.ne.s32.totalorder %v506, 0
    %vm529 = vcmp.ne.s32.totalorder %v513, 0
    %vm530 = vcmp.ne.s32.totalorder %v520, 0
    %vm531 = vcmp.ne.s32.totalorder %v527, 0
    %vm532 = vcmp.lt.s32.totalorder %v506, 0
    %vm533 = vcmp.lt.s32.totalorder %v513, 0
    %vm534 = vcmp.lt.s32.totalorder %v520, 0
    %vm535 = vcmp.lt.s32.totalorder %v527, 0
    %vm536 = vmand %vm532, %vm528
    %vm537 = vmand %vm533, %vm529
    %vm538 = vmand %vm534, %vm530
    %vm539 = vmand %vm535, %vm531
    %v540 = vadd.s32 %v506, 128
    %v541 = vadd.s32 %v513, 128
    %v542 = vadd.s32 %v520, 128
    %v543 = vadd.s32 %v527, 128
    %v544 = vsel %vm536, %v540, %v506
    %v545 = vsel %vm537, %v541, %v513
    %v546 = vsel %vm538, %v542, %v520
    %v547 = vsel %vm539, %v543, %v527
    %vm548 = vcmp.lt.s32.totalorder %v544, 64
    %vm549 = vcmp.lt.s32.totalorder %v545, 64
    %vm550 = vcmp.lt.s32.totalorder %v546, 64
    %vm551 = vcmp.lt.s32.totalorder %v547, 64
    %v552 = vld [vmem:[#allocation2] sm:$0xff]
    %v553 = vld [vmem:[#allocation2 + $0x8] sm:$0xff]
    %v554 = vld [vmem:[#allocation2 + $0x10] sm:$0xff]
    %v555 = vld [vmem:[#allocation2 + $0x18] sm:$0xff]
    %s556 = scalar_lea.vmem [#allocation2], 224
    %v557 = vld [vmem:[%s556] sm:$0xff]
    %v558 = vld [vmem:[%s556 + $0x8] sm:$0xff]
    %v559 = vld [vmem:[%s556 + $0x10] sm:$0xff]
    %v560 = vld [vmem:[%s556 + $0x18] sm:$0xff]
    %v561 = vsel %vm548, %v552, %v557
    %v562 = vsel %vm549, %v553, %v558
    %v563 = vsel %vm550, %v554, %v559
    %v564 = vsel %vm551, %v555, %v560
    %565 = vmatprep.subr.mxu0 %v492
    %566 = vmatpush1.msra.mxu0 %v491
    %567 = vmatprep.subr.mxu0 %v488
    %568 = vmatpush1.msra.mxu0 %v487
    %569 = vmatprep.subr.mxu0 %v484
    %570 = vmatpush1.msra.mxu0 %v483
    %571 = vmatprep.subr.mxu0 %v480
    %572 = vmatpush1.msra.mxu0 %v479
    %573 = vmatprep.subr.mxu0 %v476
    %574 = vmatpush1.msra.mxu0 %v475
    %575 = vmatprep.subr.mxu0 %v472
    %576 = vmatpush1.msra.mxu0 %v471
    %577 = vmatprep.subr.mxu0 %v468
    %578 = vmatpush1.msra.mxu0 %v467
    %579 = vmatprep.subr.mxu0 %v464
    %580 = vmatpush1.msra.mxu0 %v463
    %581 = vmatprep.subr.mxu0 %v460
    %582 = vmatpush1.msra.mxu0 %v459
    %583 = vmatprep.subr.mxu0 %v456
    %584 = vmatpush1.msra.mxu0 %v455
    %585 = vmatprep.subr.mxu0 %v452
    %586 = vmatpush1.msra.mxu0 %v451
    %587 = vmatprep.subr.mxu0 %v448
    %588 = vmatpush1.msra.mxu0 %v447
    %589 = vmatprep.subr.mxu0 %v444
    %590 = vmatpush1.msra.mxu0 %v443
    %591 = vmatprep.subr.mxu0 %v440
    %592 = vmatpush1.msra.mxu0 %v439
    %593 = vmatprep.subr.mxu0 %v436
    %594 = vmatpush1.msra.mxu0 %v435
    %595 = vmatprep.subr.mxu0 %v432
    %596 = vmatpush1.msra.mxu0 %v431
    %597 = vmatprep.subr.mxu0 0.0
    %598 = vmatpush2.msra.mxu0 0.0
    %599 = vmatprep.subr.mxu0 0.0
    %600 = vmatpush2.msra.mxu0 0.0
    %601 = vmatprep.subr.mxu0 0.0
    %602 = vmatpush2.msra.mxu0 0.0
    %603 = vmatprep.subr.mxu0 0.0
    %604 = vmatpush2.msra.mxu0 0.0
    %605 = vmatprep.subr.mxu0 0.0
    %606 = vmatpush2.msra.mxu0 0.0
    %607 = vmatprep.subr.mxu0 0.0
    %608 = vmatpush2.msra.mxu0 0.0
    %609 = vmatprep.subr.mxu0 0.0
    %610 = vmatpush2.msra.mxu0 0.0
    %611 = vmatprep.subr.mxu0 0.0
    %612 = vmatpush2.msra.mxu0 0.0
    %613 = vmatprep.subr.mxu0 0.0
    %614 = vmatpush2.msra.mxu0 0.0
    %615 = vmatprep.subr.mxu0 0.0
    %616 = vmatpush2.msra.mxu0 0.0
    %617 = vmatprep.subr.mxu0 0.0
    %618 = vmatpush2.msra.mxu0 0.0
    %619 = vmatprep.subr.mxu0 0.0
    %620 = vmatpush2.msra.mxu0 0.0
    %621 = vmatprep.subr.mxu0 0.0
    %622 = vmatpush2.msra.mxu0 0.0
    %623 = vmatprep.subr.mxu0 0.0
    %624 = vmatpush2.msra.mxu0 0.0
    %625 = vmatprep.subr.mxu0 0.0
    %626 = vmatpush2.msra.mxu0 0.0
    %627 = vmatprep.subr.mxu0 0.0
    %628 = vmatpush2.msra.mxu0 0.0
    %629 = vmatprep.mubr.f32.mxu0 0.0
    %630 = vmatmul.mubr.f32.gmra.mxu0 0.0
    %v631 = vpop.f32.mrf.mxu0
    %v632 = vadd.f32 0.0, %v631
    %v633 = vpop.f32.mrf.mxu0
    %v634 = vadd.f32 0.0, %v633
    %635 = vdwg.mxu0
    %636 = vmatprep.subr.mxu0 %v494
    %637 = vmatpush1.msra.mxu0 %v493
    %638 = vmatprep.subr.mxu0 %v490
    %639 = vmatpush1.msra.mxu0 %v489
    %640 = vmatprep.subr.mxu0 %v486
    %641 = vmatpush1.msra.mxu0 %v485
    %642 = vmatprep.subr.mxu0 %v482
    %643 = vmatpush1.msra.mxu0 %v481
    %644 = vmatprep.subr.mxu0 %v478
    %645 = vmatpush1.msra.mxu0 %v477
    %646 = vmatprep.subr.mxu0 %v474
    %647 = vmatpush1.msra.mxu0 %v473
    %648 = vmatprep.subr.mxu0 %v470
    %649 = vmatpush1.msra.mxu0 %v469
    %650 = vmatprep.subr.mxu0 %v466
    %651 = vmatpush1.msra.mxu0 %v465
    %652 = vmatprep.subr.mxu0 %v462
    %653 = vmatpush1.msra.mxu0 %v461
    %654 = vmatprep.subr.mxu0 %v458
    %655 = vmatpush1.msra.mxu0 %v457
    %656 = vmatprep.subr.mxu0 %v454
    %657 = vmatpush1.msra.mxu0 %v453
    %658 = vmatprep.subr.mxu0 %v450
    %659 = vmatpush1.msra.mxu0 %v449
    %660 = vmatprep.subr.mxu0 %v446
    %661 = vmatpush1.msra.mxu0 %v445
    %662 = vmatprep.subr.mxu0 %v442
    %663 = vmatpush1.msra.mxu0 %v441
    %664 = vmatprep.subr.mxu0 %v438
    %665 = vmatpush1.msra.mxu0 %v437
    %666 = vmatprep.subr.mxu0 %v434
    %667 = vmatpush1.msra.mxu0 %v433
    %668 = vmatprep.subr.mxu0 0.0
    %669 = vmatpush2.msra.mxu0 0.0
    %670 = vmatprep.subr.mxu0 0.0
    %671 = vmatpush2.msra.mxu0 0.0
    %672 = vmatprep.subr.mxu0 0.0
    %673 = vmatpush2.msra.mxu0 0.0
    %674 = vmatprep.subr.mxu0 0.0
    %675 = vmatpush2.msra.mxu0 0.0
    %676 = vmatprep.subr.mxu0 0.0
    %677 = vmatpush2.msra.mxu0 0.0
    %678 = vmatprep.subr.mxu0 0.0
    %679 = vmatpush2.msra.mxu0 0.0
    %680 = vmatprep.subr.mxu0 0.0
    %681 = vmatpush2.msra.mxu0 0.0
    %682 = vmatprep.subr.mxu0 0.0
    %683 = vmatpush2.msra.mxu0 0.0
    %684 = vmatprep.subr.mxu0 0.0
    %685 = vmatpush2.msra.mxu0 0.0
    %686 = vmatprep.subr.mxu0 0.0
    %687 = vmatpush2.msra.mxu0 0.0
    %688 = vmatprep.subr.mxu0 0.0
    %689 = vmatpush2.msra.mxu0 0.0
    %690 = vmatprep.subr.mxu0 0.0
    %691 = vmatpush2.msra.mxu0 0.0
    %692 = vmatprep.subr.mxu0 0.0
    %693 = vmatpush2.msra.mxu0 0.0
    %694 = vmatprep.subr.mxu0 0.0
    %695 = vmatpush2.msra.mxu0 0.0
    %696 = vmatprep.subr.mxu0 0.0
    %697 = vmatpush2.msra.mxu0 0.0
    %698 = vmatprep.subr.mxu0 0.0
    %699 = vmatpush2.msra.mxu0 0.0
    %700 = vmatprep.mubr.f32.mxu0 0.0
    %701 = vmatmul.mubr.f32.gmra.mxu0 0.0
    %v702 = vpop.f32.mrf.mxu0
    %v703 = vadd.f32 0.0, %v702
    %v704 = vpop.f32.mrf.mxu0
    %v705 = vadd.f32 0.0, %v704
    %706 = vdwg.mxu0
    %v707 = vadd.f32 %v561, %v632
    %v708 = vadd.f32 %v562, %v634
    %v709 = vadd.f32 %v563, %v703
    %v710 = vadd.f32 %v564, %v705
    %v711 = vmul.f32 %v707, 0.5
    %v712 = vtanh.pop %v711
    %v713 = vmul.f32 %v712, 0.5
    %v714 = vadd.f32 %v713, 0.5
    %v715 = vmul.f32 %v708, 0.5
    %v716 = vtanh.pop %v715
    %v717 = vmul.f32 %v716, 0.5
    %v718 = vadd.f32 %v717, 0.5
    %v719 = vtanh.pop %v709
    %v720 = vmul.f32 %v710, 0.5
    %v721 = vtanh.pop %v720
    %v722 = vmul.f32 %v721, 0.5
    %v723 = vadd.f32 %v722, 0.5
    %v724 = vmul.f32 %v718, 0.0
    %v725 = vmul.f32 %v714, %v719
    %v726 = vadd.f32 %v724, %v725
    %v727 = vtanh.pop %v726
    %v728 = vmul.f32 %v723, %v727
    %vm729 = vcmask 523264
    %730 = vst.msk [vmem:[#allocation3] sm:$0xff] %vm729, %v728
    %s731 = scalar_lea.vmem [#allocation3], 56
    %vm732 = vcmask 1048064
    %733 = vst.msk [vmem:[%s731] sm:$0xff] %vm732, %v728
    %s734 = scalar_lea.vmem [#allocation2], 32
    %v735 = vld [vmem:[%s734] sm:$0xff]
    %v736 = vld [vmem:[%s734 + $0x8] sm:$0xff]
    %v737 = vld [vmem:[%s734 + $0x10] sm:$0xff]
    %v738 = vld [vmem:[%s734 + $0x18] sm:$0xff]
    %s739 = scalar_lea.vmem [#allocation2], 192
    %v740 = vld [vmem:[%s739] sm:$0xff]
    %v741 = vld [vmem:[%s739 + $0x8] sm:$0xff]
    %v742 = vld [vmem:[%s739 + $0x10] sm:$0xff]
    %v743 = vld [vmem:[%s739 + $0x18] sm:$0xff]
    %v744 = vsel %vm548, %v735, %v740
    %v745 = vsel %vm549, %v736, %v741
    %v746 = vsel %vm550, %v737, %v742
    %v747 = vsel %vm551, %v738, %v743
    %748 = vmatprep.subr.mxu0 %v492
    %749 = vmatpush1.msra.mxu0 %v491
    %750 = vmatprep.subr.mxu0 %v488
    %751 = vmatpush1.msra.mxu0 %v487
    %752 = vmatprep.subr.mxu0 %v484
    %753 = vmatpush1.msra.mxu0 %v483
    %754 = vmatprep.subr.mxu0 %v480
    %755 = vmatpush1.msra.mxu0 %v479
    %756 = vmatprep.subr.mxu0 %v476
    %757 = vmatpush1.msra.mxu0 %v475
    %758 = vmatprep.subr.mxu0 %v472
    %759 = vmatpush1.msra.mxu0 %v471
    %760 = vmatprep.subr.mxu0 %v468
    %761 = vmatpush1.msra.mxu0 %v467
    %762 = vmatprep.subr.mxu0 %v464
    %763 = vmatpush1.msra.mxu0 %v463
    %764 = vmatprep.subr.mxu0 %v460
    %765 = vmatpush1.msra.mxu0 %v459
    %766 = vmatprep.subr.mxu0 %v456
    %767 = vmatpush1.msra.mxu0 %v455
    %768 = vmatprep.subr.mxu0 %v452
    %769 = vmatpush1.msra.mxu0 %v451
    %770 = vmatprep.subr.mxu0 %v448
    %771 = vmatpush1.msra.mxu0 %v447
    %772 = vmatprep.subr.mxu0 %v444
    %773 = vmatpush1.msra.mxu0 %v443
    %774 = vmatprep.subr.mxu0 %v440
    %775 = vmatpush1.msra.mxu0 %v439
    %776 = vmatprep.subr.mxu0 %v436
    %777 = vmatpush1.msra.mxu0 %v435
    %778 = vmatprep.subr.mxu0 %v432
    %779 = vmatpush1.msra.mxu0 %v431
    %780 = vmatprep.subr.mxu0 0.0
    %781 = vmatpush2.msra.mxu0 0.0
    %782 = vmatprep.subr.mxu0 0.0
    %783 = vmatpush2.msra.mxu0 0.0
    %784 = vmatprep.subr.mxu0 0.0
    %785 = vmatpush2.msra.mxu0 0.0
    %786 = vmatprep.subr.mxu0 0.0
    %787 = vmatpush2.msra.mxu0 0.0
    %788 = vmatprep.subr.mxu0 0.0
    %789 = vmatpush2.msra.mxu0 0.0
    %790 = vmatprep.subr.mxu0 0.0
    %791 = vmatpush2.msra.mxu0 0.0
    %792 = vmatprep.subr.mxu0 0.0
    %793 = vmatpush2.msra.mxu0 0.0
    %794 = vmatprep.subr.mxu0 0.0
    %795 = vmatpush2.msra.mxu0 0.0
    %796 = vmatprep.subr.mxu0 0.0
    %797 = vmatpush2.msra.mxu0 0.0
    %798 = vmatprep.subr.mxu0 0.0
    %799 = vmatpush2.msra.mxu0 0.0
    %800 = vmatprep.subr.mxu0 0.0
    %801 = vmatpush2.msra.mxu0 0.0
    %802 = vmatprep.subr.mxu0 0.0
    %803 = vmatpush2.msra.mxu0 0.0
    %804 = vmatprep.subr.mxu0 0.0
    %805 = vmatpush2.msra.mxu0 0.0
    %806 = vmatprep.subr.mxu0 0.0
    %807 = vmatpush2.msra.mxu0 0.0
    %808 = vmatprep.subr.mxu0 0.0
    %809 = vmatpush2.msra.mxu0 0.0
    %810 = vmatprep.subr.mxu0 0.0
    %811 = vmatpush2.msra.mxu0 0.0
    %812 = vmatprep.mubr.f32.mxu0 0.0
    %813 = vmatmul.mubr.f32.gmra.mxu0 %v728
    %v814 = vpop.f32.mrf.mxu0
    %v815 = vadd.f32 0.0, %v814
    %v816 = vpop.f32.mrf.mxu0
    %v817 = vadd.f32 0.0, %v816
    %818 = vdwg.mxu0
    %819 = vmatprep.subr.mxu0 %v494
    %820 = vmatpush1.msra.mxu0 %v493
    %821 = vmatprep.subr.mxu0 %v490
    %822 = vmatpush1.msra.mxu0 %v489
    %823 = vmatprep.subr.mxu0 %v486
    %824 = vmatpush1.msra.mxu0 %v485
    %825 = vmatprep.subr.mxu0 %v482
    %826 = vmatpush1.msra.mxu0 %v481
    %827 = vmatprep.subr.mxu0 %v478
    %828 = vmatpush1.msra.mxu0 %v477
    %829 = vmatprep.subr.mxu0 %v474
    %830 = vmatpush1.msra.mxu0 %v473
    %831 = vmatprep.subr.mxu0 %v470
    %832 = vmatpush1.msra.mxu0 %v469
    %833 = vmatprep.subr.mxu0 %v466
    %834 = vmatpush1.msra.mxu0 %v465
    %835 = vmatprep.subr.mxu0 %v462
    %836 = vmatpush1.msra.mxu0 %v461
    %837 = vmatprep.subr.mxu0 %v458
    %838 = vmatpush1.msra.mxu0 %v457
    %839 = vmatprep.subr.mxu0 %v454
    %840 = vmatpush1.msra.mxu0 %v453
    %841 = vmatprep.subr.mxu0 %v450
    %842 = vmatpush1.msra.mxu0 %v449
    %843 = vmatprep.subr.mxu0 %v446
    %844 = vmatpush1.msra.mxu0 %v445
    %845 = vmatprep.subr.mxu0 %v442
    %846 = vmatpush1.msra.mxu0 %v441
    %847 = vmatprep.subr.mxu0 %v438
    %848 = vmatpush1.msra.mxu0 %v437
    %849 = vmatprep.subr.mxu0 %v434
    %850 = vmatpush1.msra.mxu0 %v433
    %851 = vmatprep.subr.mxu0 0.0
    %852 = vmatpush2.msra.mxu0 0.0
    %853 = vmatprep.subr.mxu0 0.0
    %854 = vmatpush2.msra.mxu0 0.0
    %855 = vmatprep.subr.mxu0 0.0
    %856 = vmatpush2.msra.mxu0 0.0
    %857 = vmatprep.subr.mxu0 0.0
    %858 = vmatpush2.msra.mxu0 0.0
    %859 = vmatprep.subr.mxu0 0.0
    %860 = vmatpush2.msra.mxu0 0.0
    %861 = vmatprep.subr.mxu0 0.0
    %862 = vmatpush2.msra.mxu0 0.0
    %863 = vmatprep.subr.mxu0 0.0
    %864 = vmatpush2.msra.mxu0 0.0
    %865 = vmatprep.subr.mxu0 0.0
    %866 = vmatpush2.msra.mxu0 0.0
    %867 = vmatprep.subr.mxu0 0.0
    %868 = vmatpush2.msra.mxu0 0.0
    %869 = vmatprep.subr.mxu0 0.0
    %870 = vmatpush2.msra.mxu0 0.0
    %871 = vmatprep.subr.mxu0 0.0
    %872 = vmatpush2.msra.mxu0 0.0
    %873 = vmatprep.subr.mxu0 0.0
    %874 = vmatpush2.msra.mxu0 0.0
    %875 = vmatprep.subr.mxu0 0.0
    %876 = vmatpush2.msra.mxu0 0.0
    %877 = vmatprep.subr.mxu0 0.0
    %878 = vmatpush2.msra.mxu0 0.0
    %879 = vmatprep.subr.mxu0 0.0
    %880 = vmatpush2.msra.mxu0 0.0
    %881 = vmatprep.subr.mxu0 0.0
    %882 = vmatpush2.msra.mxu0 0.0
    %883 = vmatprep.mubr.f32.mxu0 0.0
    %884 = vmatmul.mubr.f32.gmra.mxu0 %v728
    %v885 = vpop.f32.mrf.mxu0
    %v886 = vadd.f32 0.0, %v885
    %v887 = vpop.f32.mrf.mxu0
    %v888 = vadd.f32 0.0, %v887
    %889 = vdwg.mxu0
    %v890 = vadd.f32 %v744, %v815
    %v891 = vadd.f32 %v745, %v817
    %v892 = vadd.f32 %v746, %v886
    %v893 = vadd.f32 %v747, %v888
    %v894 = vmul.f32 %v890, 0.5
    %v895 = vtanh.pop %v894
    %v896 = vmul.f32 %v895, 0.5
    %v897 = vadd.f32 %v896, 0.5
    %v898 = vmul.f32 %v891, 0.5
    %v899 = vtanh.pop %v898
    %v900 = vmul.f32 %v899, 0.5
    %v901 = vadd.f32 %v900, 0.5
    %v902 = vtanh.pop %v892
    %v903 = vmul.f32 %v893, 0.5
    %v904 = vtanh.pop %v903
    %v905 = vmul.f32 %v904, 0.5
    %v906 = vadd.f32 %v905, 0.5
    %v907 = vmul.f32 %v901, %v726
    %v908 = vmul.f32 %v897, %v902
    %v909 = vadd.f32 %v907, %v908
    %v910 = vtanh.pop %v909
    %v911 = vmul.f32 %v906, %v910
    %s912 = scalar_lea.vmem [#allocation3], 8
    %913 = vst.msk [vmem:[%s912] sm:$0xff] %vm729, %v911
    %s914 = scalar_lea.vmem [#allocation3], 48
    %915 = vst.msk [vmem:[%s914] sm:$0xff] %vm732, %v911
    %s916 = scalar_lea.vmem [#allocation2], 64
    %v917 = vld [vmem:[%s916] sm:$0xff]
    %v918 = vld [vmem:[%s916 + $0x8] sm:$0xff]
    %v919 = vld [vmem:[%s916 + $0x10] sm:$0xff]
    %v920 = vld [vmem:[%s916 + $0x18] sm:$0xff]
    %s921 = scalar_lea.vmem [#allocation2], 160
    %v922 = vld [vmem:[%s921] sm:$0xff]
    %v923 = vld [vmem:[%s921 + $0x8] sm:$0xff]
    %v924 = vld [vmem:[%s921 + $0x10] sm:$0xff]
    %v925 = vld [vmem:[%s921 + $0x18] sm:$0xff]
    %v926 = vsel %vm548, %v917, %v922
    %v927 = vsel %vm549, %v918, %v923
    %v928 = vsel %vm550, %v919, %v924
    %v929 = vsel %vm551, %v920, %v925
    %930 = vmatprep.subr.mxu0 %v492
    %931 = vmatpush1.msra.mxu0 %v491
    %932 = vmatprep.subr.mxu0 %v488
    %933 = vmatpush1.msra.mxu0 %v487
    %934 = vmatprep.subr.mxu0 %v484
    %935 = vmatpush1.msra.mxu0 %v483
    %936 = vmatprep.subr.mxu0 %v480
    %937 = vmatpush1.msra.mxu0 %v479
    %938 = vmatprep.subr.mxu0 %v476
    %939 = vmatpush1.msra.mxu0 %v475
    %940 = vmatprep.subr.mxu0 %v472
    %941 = vmatpush1.msra.mxu0 %v471
    %942 = vmatprep.subr.mxu0 %v468
    %943 = vmatpush1.msra.mxu0 %v467
    %944 = vmatprep.subr.mxu0 %v464
    %945 = vmatpush1.msra.mxu0 %v463
    %946 = vmatprep.subr.mxu0 %v460
    %947 = vmatpush1.msra.mxu0 %v459
    %948 = vmatprep.subr.mxu0 %v456
    %949 = vmatpush1.msra.mxu0 %v455
    %950 = vmatprep.subr.mxu0 %v452
    %951 = vmatpush1.msra.mxu0 %v451
    %952 = vmatprep.subr.mxu0 %v448
    %953 = vmatpush1.msra.mxu0 %v447
    %954 = vmatprep.subr.mxu0 %v444
    %955 = vmatpush1.msra.mxu0 %v443
    %956 = vmatprep.subr.mxu0 %v440
    %957 = vmatpush1.msra.mxu0 %v439
    %958 = vmatprep.subr.mxu0 %v436
    %959 = vmatpush1.msra.mxu0 %v435
    %960 = vmatprep.subr.mxu0 %v432
    %961 = vmatpush1.msra.mxu0 %v431
    %962 = vmatprep.subr.mxu0 0.0
    %963 = vmatpush2.msra.mxu0 0.0
    %964 = vmatprep.subr.mxu0 0.0
    %965 = vmatpush2.msra.mxu0 0.0
    %966 = vmatprep.subr.mxu0 0.0
    %967 = vmatpush2.msra.mxu0 0.0
    %968 = vmatprep.subr.mxu0 0.0
    %969 = vmatpush2.msra.mxu0 0.0
    %970 = vmatprep.subr.mxu0 0.0
    %971 = vmatpush2.msra.mxu0 0.0
    %972 = vmatprep.subr.mxu0 0.0
    %973 = vmatpush2.msra.mxu0 0.0
    %974 = vmatprep.subr.mxu0 0.0
    %975 = vmatpush2.msra.mxu0 0.0
    %976 = vmatprep.subr.mxu0 0.0
    %977 = vmatpush2.msra.mxu0 0.0
    %978 = vmatprep.subr.mxu0 0.0
    %979 = vmatpush2.msra.mxu0 0.0
    %980 = vmatprep.subr.mxu0 0.0
    %981 = vmatpush2.msra.mxu0 0.0
    %982 = vmatprep.subr.mxu0 0.0
    %983 = vmatpush2.msra.mxu0 0.0
    %984 = vmatprep.subr.mxu0 0.0
    %985 = vmatpush2.msra.mxu0 0.0
    %986 = vmatprep.subr.mxu0 0.0
    %987 = vmatpush2.msra.mxu0 0.0
    %988 = vmatprep.subr.mxu0 0.0
    %989 = vmatpush2.msra.mxu0 0.0
    %990 = vmatprep.subr.mxu0 0.0
    %991 = vmatpush2.msra.mxu0 0.0
    %992 = vmatprep.subr.mxu0 0.0
    %993 = vmatpush2.msra.mxu0 0.0
    %994 = vmatprep.mubr.f32.mxu0 0.0
    %995 = vmatmul.mubr.f32.gmra.mxu0 %v911
    %v996 = vpop.f32.mrf.mxu0
    %v997 = vadd.f32 0.0, %v996
    %v998 = vpop.f32.mrf.mxu0
    %v999 = vadd.f32 0.0, %v998
    %1000 = vdwg.mxu0
    %1001 = vmatprep.subr.mxu0 %v494
    %1002 = vmatpush1.msra.mxu0 %v493
    %1003 = vmatprep.subr.mxu0 %v490
    %1004 = vmatpush1.msra.mxu0 %v489
    %1005 = vmatprep.subr.mxu0 %v486
    %1006 = vmatpush1.msra.mxu0 %v485
    %1007 = vmatprep.subr.mxu0 %v482
    %1008 = vmatpush1.msra.mxu0 %v481
    %1009 = vmatprep.subr.mxu0 %v478
    %1010 = vmatpush1.msra.mxu0 %v477
    %1011 = vmatprep.subr.mxu0 %v474
    %1012 = vmatpush1.msra.mxu0 %v473
    %1013 = vmatprep.subr.mxu0 %v470
    %1014 = vmatpush1.msra.mxu0 %v469
    %1015 = vmatprep.subr.mxu0 %v466
    %1016 = vmatpush1.msra.mxu0 %v465
    %1017 = vmatprep.subr.mxu0 %v462
    %1018 = vmatpush1.msra.mxu0 %v461
    %1019 = vmatprep.subr.mxu0 %v458
    %1020 = vmatpush1.msra.mxu0 %v457
    %1021 = vmatprep.subr.mxu0 %v454
    %1022 = vmatpush1.msra.mxu0 %v453
    %1023 = vmatprep.subr.mxu0 %v450
    %1024 = vmatpush1.msra.mxu0 %v449
    %1025 = vmatprep.subr.mxu0 %v446
    %1026 = vmatpush1.msra.mxu0 %v445
    %1027 = vmatprep.subr.mxu0 %v442
    %1028 = vmatpush1.msra.mxu0 %v441
    %1029 = vmatprep.subr.mxu0 %v438
    %1030 = vmatpush1.msra.mxu0 %v437
    %1031 = vmatprep.subr.mxu0 %v434
    %1032 = vmatpush1.msra.mxu0 %v433
    %1033 = vmatprep.subr.mxu0 0.0
    %1034 = vmatpush2.msra.mxu0 0.0
    %1035 = vmatprep.subr.mxu0 0.0
    %1036 = vmatpush2.msra.mxu0 0.0
    %1037 = vmatprep.subr.mxu0 0.0
    %1038 = vmatpush2.msra.mxu0 0.0
    %1039 = vmatprep.subr.mxu0 0.0
    %1040 = vmatpush2.msra.mxu0 0.0
    %1041 = vmatprep.subr.mxu0 0.0
    %1042 = vmatpush2.msra.mxu0 0.0
    %1043 = vmatprep.subr.mxu0 0.0
    %1044 = vmatpush2.msra.mxu0 0.0
    %1045 = vmatprep.subr.mxu0 0.0
    %1046 = vmatpush2.msra.mxu0 0.0
    %1047 = vmatprep.subr.mxu0 0.0
    %1048 = vmatpush2.msra.mxu0 0.0
    %1049 = vmatprep.subr.mxu0 0.0
    %1050 = vmatpush2.msra.mxu0 0.0
    %1051 = vmatprep.subr.mxu0 0.0
    %1052 = vmatpush2.msra.mxu0 0.0
    %1053 = vmatprep.subr.mxu0 0.0
    %1054 = vmatpush2.msra.mxu0 0.0
    %1055 = vmatprep.subr.mxu0 0.0
    %1056 = vmatpush2.msra.mxu0 0.0
    %1057 = vmatprep.subr.mxu0 0.0
    %1058 = vmatpush2.msra.mxu0 0.0
    %1059 = vmatprep.subr.mxu0 0.0
    %1060 = vmatpush2.msra.mxu0 0.0
    %1061 = vmatprep.subr.mxu0 0.0
    %1062 = vmatpush2.msra.mxu0 0.0
    %1063 = vmatprep.subr.mxu0 0.0
    %1064 = vmatpush2.msra.mxu0 0.0
    %1065 = vmatprep.mubr.f32.mxu0 0.0
    %1066 = vmatmul.mubr.f32.gmra.mxu0 %v911
    %v1067 = vpop.f32.mrf.mxu0
    %v1068 = vadd.f32 0.0, %v1067
    %v1069 = vpop.f32.mrf.mxu0
    %v1070 = vadd.f32 0.0, %v1069
    %1071 = vdwg.mxu0
    %v1072 = vadd.f32 %v926, %v997
    %v1073 = vadd.f32 %v927, %v999
    %v1074 = vadd.f32 %v928, %v1068
    %v1075 = vadd.f32 %v929, %v1070
    %v1076 = vmul.f32 %v1072, 0.5
    %v1077 = vtanh.pop %v1076
    %v1078 = vmul.f32 %v1077, 0.5
    %v1079 = vadd.f32 %v1078, 0.5
    %v1080 = vmul.f32 %v1073, 0.5
    %v1081 = vtanh.pop %v1080
    %v1082 = vmul.f32 %v1081, 0.5
    %v1083 = vadd.f32 %v1082, 0.5
    %v1084 = vtanh.pop %v1074
    %v1085 = vmul.f32 %v1075, 0.5
    %v1086 = vtanh.pop %v1085
    %v1087 = vmul.f32 %v1086, 0.5
    %v1088 = vadd.f32 %v1087, 0.5
    %v1089 = vmul.f32 %v1083, %v909
    %v1090 = vmul.f32 %v1079, %v1084
    %v1091 = vadd.f32 %v1089, %v1090
    %v1092 = vtanh.pop %v1091
    %v1093 = vmul.f32 %v1088, %v1092
    %s1094 = scalar_lea.vmem [#allocation3], 16
    %1095 = vst.msk [vmem:[%s1094] sm:$0xff] %vm729, %v1093
    %s1096 = scalar_lea.vmem [#allocation3], 40
    %1097 = vst.msk [vmem:[%s1096] sm:$0xff] %vm732, %v1093
    %s1098 = scalar_lea.vmem [#allocation2], 96
    %v1099 = vld [vmem:[%s1098] sm:$0xff]
    %v1100 = vld [vmem:[%s1098 + $0x8] sm:$0xff]
    %v1101 = vld [vmem:[%s1098 + $0x10] sm:$0xff]
    %v1102 = vld [vmem:[%s1098 + $0x18] sm:$0xff]
    %s1103 = scalar_lea.vmem [#allocation2], 128
    %v1104 = vld [vmem:[%s1103] sm:$0xff]
    %v1105 = vld [vmem:[%s1103 + $0x8] sm:$0xff]
    %v1106 = vld [vmem:[%s1103 + $0x10] sm:$0xff]
    %v1107 = vld [vmem:[%s1103 + $0x18] sm:$0xff]
    %v1108 = vsel %vm548, %v1099, %v1104
    %v1109 = vsel %vm549, %v1100, %v1105
    %v1110 = vsel %vm550, %v1101, %v1106
    %v1111 = vsel %vm551, %v1102, %v1107
    %1112 = vmatprep.subr.mxu0 %v492
    %1113 = vmatpush1.msra.mxu0 %v491
    %1114 = vmatprep.subr.mxu0 %v488
    %1115 = vmatpush1.msra.mxu0 %v487
    %1116 = vmatprep.subr.mxu0 %v484
    %1117 = vmatpush1.msra.mxu0 %v483
    %1118 = vmatprep.subr.mxu0 %v480
    %1119 = vmatpush1.msra.mxu0 %v479
    %1120 = vmatprep.subr.mxu0 %v476
    %1121 = vmatpush1.msra.mxu0 %v475
    %1122 = vmatprep.subr.mxu0 %v472
    %1123 = vmatpush1.msra.mxu0 %v471
    %1124 = vmatprep.subr.mxu0 %v468
    %1125 = vmatpush1.msra.mxu0 %v467
    %1126 = vmatprep.subr.mxu0 %v464
    %1127 = vmatpush1.msra.mxu0 %v463
    %1128 = vmatprep.subr.mxu0 %v460
    %1129 = vmatpush1.msra.mxu0 %v459
    %1130 = vmatprep.subr.mxu0 %v456
    %1131 = vmatpush1.msra.mxu0 %v455
    %1132 = vmatprep.subr.mxu0 %v452
    %1133 = vmatpush1.msra.mxu0 %v451
    %1134 = vmatprep.subr.mxu0 %v448
    %1135 = vmatpush1.msra.mxu0 %v447
    %1136 = vmatprep.subr.mxu0 %v444
    %1137 = vmatpush1.msra.mxu0 %v443
    %1138 = vmatprep.subr.mxu0 %v440
    %1139 = vmatpush1.msra.mxu0 %v439
    %1140 = vmatprep.subr.mxu0 %v436
    %1141 = vmatpush1.msra.mxu0 %v435
    %1142 = vmatprep.subr.mxu0 %v432
    %1143 = vmatpush1.msra.mxu0 %v431
    %1144 = vmatprep.subr.mxu0 0.0
    %1145 = vmatpush2.msra.mxu0 0.0
    %1146 = vmatprep.subr.mxu0 0.0
    %1147 = vmatpush2.msra.mxu0 0.0
    %1148 = vmatprep.subr.mxu0 0.0
    %1149 = vmatpush2.msra.mxu0 0.0
    %1150 = vmatprep.subr.mxu0 0.0
    %1151 = vmatpush2.msra.mxu0 0.0
    %1152 = vmatprep.subr.mxu0 0.0
    %1153 = vmatpush2.msra.mxu0 0.0
    %1154 = vmatprep.subr.mxu0 0.0
    %1155 = vmatpush2.msra.mxu0 0.0
    %1156 = vmatprep.subr.mxu0 0.0
    %1157 = vmatpush2.msra.mxu0 0.0
    %1158 = vmatprep.subr.mxu0 0.0
    %1159 = vmatpush2.msra.mxu0 0.0
    %1160 = vmatprep.subr.mxu0 0.0
    %1161 = vmatpush2.msra.mxu0 0.0
    %1162 = vmatprep.subr.mxu0 0.0
    %1163 = vmatpush2.msra.mxu0 0.0
    %1164 = vmatprep.subr.mxu0 0.0
    %1165 = vmatpush2.msra.mxu0 0.0
    %1166 = vmatprep.subr.mxu0 0.0
    %1167 = vmatpush2.msra.mxu0 0.0
    %1168 = vmatprep.subr.mxu0 0.0
    %1169 = vmatpush2.msra.mxu0 0.0
    %1170 = vmatprep.subr.mxu0 0.0
    %1171 = vmatpush2.msra.mxu0 0.0
    %1172 = vmatprep.subr.mxu0 0.0
    %1173 = vmatpush2.msra.mxu0 0.0
    %1174 = vmatprep.subr.mxu0 0.0
    %1175 = vmatpush2.msra.mxu0 0.0
    %1176 = vmatprep.mubr.f32.mxu0 0.0
    %1177 = vmatmul.mubr.f32.gmra.mxu0 %v1093
    %v1178 = vpop.f32.mrf.mxu0
    %v1179 = vadd.f32 0.0, %v1178
    %v1180 = vpop.f32.mrf.mxu0
    %v1181 = vadd.f32 0.0, %v1180
    %1182 = vdwg.mxu0
    %1183 = vmatprep.subr.mxu0 %v494
    %1184 = vmatpush1.msra.mxu0 %v493
    %1185 = vmatprep.subr.mxu0 %v490
    %1186 = vmatpush1.msra.mxu0 %v489
    %1187 = vmatprep.subr.mxu0 %v486
    %1188 = vmatpush1.msra.mxu0 %v485
    %1189 = vmatprep.subr.mxu0 %v482
    %1190 = vmatpush1.msra.mxu0 %v481
    %1191 = vmatprep.subr.mxu0 %v478
    %1192 = vmatpush1.msra.mxu0 %v477
    %1193 = vmatprep.subr.mxu0 %v474
    %1194 = vmatpush1.msra.mxu0 %v473
    %1195 = vmatprep.subr.mxu0 %v470
    %1196 = vmatpush1.msra.mxu0 %v469
    %1197 = vmatprep.subr.mxu0 %v466
    %1198 = vmatpush1.msra.mxu0 %v465
    %1199 = vmatprep.subr.mxu0 %v462
    %1200 = vmatpush1.msra.mxu0 %v461
    %1201 = vmatprep.subr.mxu0 %v458
    %1202 = vmatpush1.msra.mxu0 %v457
    %1203 = vmatprep.subr.mxu0 %v454
    %1204 = vmatpush1.msra.mxu0 %v453
    %1205 = vmatprep.subr.mxu0 %v450
    %1206 = vmatpush1.msra.mxu0 %v449
    %1207 = vmatprep.subr.mxu0 %v446
    %1208 = vmatpush1.msra.mxu0 %v445
    %1209 = vmatprep.subr.mxu0 %v442
    %1210 = vmatpush1.msra.mxu0 %v441
    %1211 = vmatprep.subr.mxu0 %v438
    %1212 = vmatpush1.msra.mxu0 %v437
    %1213 = vmatprep.subr.mxu0 %v434
    %1214 = vmatpush1.msra.mxu0 %v433
    %1215 = vmatprep.subr.mxu0 0.0
    %1216 = vmatpush2.msra.mxu0 0.0
    %1217 = vmatprep.subr.mxu0 0.0
    %1218 = vmatpush2.msra.mxu0 0.0
    %1219 = vmatprep.subr.mxu0 0.0
    %1220 = vmatpush2.msra.mxu0 0.0
    %1221 = vmatprep.subr.mxu0 0.0
    %1222 = vmatpush2.msra.mxu0 0.0
    %1223 = vmatprep.subr.mxu0 0.0
    %1224 = vmatpush2.msra.mxu0 0.0
    %1225 = vmatprep.subr.mxu0 0.0
    %1226 = vmatpush2.msra.mxu0 0.0
    %1227 = vmatprep.subr.mxu0 0.0
    %1228 = vmatpush2.msra.mxu0 0.0
    %1229 = vmatprep.subr.mxu0 0.0
    %1230 = vmatpush2.msra.mxu0 0.0
    %1231 = vmatprep.subr.mxu0 0.0
    %1232 = vmatpush2.msra.mxu0 0.0
    %1233 = vmatprep.subr.mxu0 0.0
    %1234 = vmatpush2.msra.mxu0 0.0
    %1235 = vmatprep.subr.mxu0 0.0
    %1236 = vmatpush2.msra.mxu0 0.0
    %1237 = vmatprep.subr.mxu0 0.0
    %1238 = vmatpush2.msra.mxu0 0.0
    %1239 = vmatprep.subr.mxu0 0.0
    %1240 = vmatpush2.msra.mxu0 0.0
    %1241 = vmatprep.subr.mxu0 0.0
    %1242 = vmatpush2.msra.mxu0 0.0
    %1243 = vmatprep.subr.mxu0 0.0
    %1244 = vmatpush2.msra.mxu0 0.0
    %1245 = vmatprep.subr.mxu0 0.0
    %1246 = vmatpush2.msra.mxu0 0.0
    %1247 = vmatprep.mubr.f32.mxu0 0.0
    %1248 = vmatmul.mubr.f32.gmra.mxu0 %v1093
    %v1249 = vpop.f32.mrf.mxu0
    %v1250 = vadd.f32 0.0, %v1249
    %v1251 = vpop.f32.mrf.mxu0
    %v1252 = vadd.f32 0.0, %v1251
    %1253 = vdwg.mxu0
    %v1254 = vadd.f32 %v1108, %v1179
    %v1255 = vadd.f32 %v1109, %v1181
    %v1256 = vadd.f32 %v1110, %v1250
    %v1257 = vadd.f32 %v1111, %v1252
    %v1258 = vmul.f32 %v1254, 0.5
    %v1259 = vtanh.pop %v1258
    %v1260 = vmul.f32 %v1259, 0.5
    %v1261 = vadd.f32 %v1260, 0.5
    %v1262 = vmul.f32 %v1255, 0.5
    %v1263 = vtanh.pop %v1262
    %v1264 = vmul.f32 %v1263, 0.5
    %v1265 = vadd.f32 %v1264, 0.5
    %v1266 = vtanh.pop %v1256
    %v1267 = vmul.f32 %v1257, 0.5
    %v1268 = vtanh.pop %v1267
    %v1269 = vmul.f32 %v1268, 0.5
    %v1270 = vadd.f32 %v1269, 0.5
    %v1271 = vmul.f32 %v1265, %v1091
    %v1272 = vmul.f32 %v1261, %v1266
    %v1273 = vadd.f32 %v1271, %v1272
    %v1274 = vtanh.pop %v1273
    %v1275 = vmul.f32 %v1270, %v1274
    %s1276 = scalar_lea.vmem [#allocation3], 24
    %1277 = vst.msk [vmem:[%s1276] sm:$0xff] %vm729, %v1275
    %s1278 = scalar_lea.vmem [#allocation3], 32
    %1279 = vst.msk [vmem:[%s1278] sm:$0xff] %vm732, %v1275
    %v1280 = vld [vmem:[%s1103] sm:$0xff]
    %v1281 = vld [vmem:[%s1103 + $0x8] sm:$0xff]
    %v1282 = vld [vmem:[%s1103 + $0x10] sm:$0xff]
    %v1283 = vld [vmem:[%s1103 + $0x18] sm:$0xff]
    %v1284 = vld [vmem:[%s1098] sm:$0xff]
    %v1285 = vld [vmem:[%s1098 + $0x8] sm:$0xff]
    %v1286 = vld [vmem:[%s1098 + $0x10] sm:$0xff]
    %v1287 = vld [vmem:[%s1098 + $0x18] sm:$0xff]
    %v1288 = vsel %vm548, %v1280, %v1284
    %v1289 = vsel %vm549, %v1281, %v1285
    %v1290 = vsel %vm550, %v1282, %v1286
    %v1291 = vsel %vm551, %v1283, %v1287
    %1292 = vmatprep.subr.mxu0 %v492
    %1293 = vmatpush1.msra.mxu0 %v491
    %1294 = vmatprep.subr.mxu0 %v488
    %1295 = vmatpush1.msra.mxu0 %v487
    %1296 = vmatprep.subr.mxu0 %v484
    %1297 = vmatpush1.msra.mxu0 %v483
    %1298 = vmatprep.subr.mxu0 %v480
    %1299 = vmatpush1.msra.mxu0 %v479
    %1300 = vmatprep.subr.mxu0 %v476
    %1301 = vmatpush1.msra.mxu0 %v475
    %1302 = vmatprep.subr.mxu0 %v472
    %1303 = vmatpush1.msra.mxu0 %v471
    %1304 = vmatprep.subr.mxu0 %v468
    %1305 = vmatpush1.msra.mxu0 %v467
    %1306 = vmatprep.subr.mxu0 %v464
    %1307 = vmatpush1.msra.mxu0 %v463
    %1308 = vmatprep.subr.mxu0 %v460
    %1309 = vmatpush1.msra.mxu0 %v459
    %1310 = vmatprep.subr.mxu0 %v456
    %1311 = vmatpush1.msra.mxu0 %v455
    %1312 = vmatprep.subr.mxu0 %v452
    %1313 = vmatpush1.msra.mxu0 %v451
    %1314 = vmatprep.subr.mxu0 %v448
    %1315 = vmatpush1.msra.mxu0 %v447
    %1316 = vmatprep.subr.mxu0 %v444
    %1317 = vmatpush1.msra.mxu0 %v443
    %1318 = vmatprep.subr.mxu0 %v440
    %1319 = vmatpush1.msra.mxu0 %v439
    %1320 = vmatprep.subr.mxu0 %v436
    %1321 = vmatpush1.msra.mxu0 %v435
    %1322 = vmatprep.subr.mxu0 %v432
    %1323 = vmatpush1.msra.mxu0 %v431
    %1324 = vmatprep.subr.mxu0 0.0
    %1325 = vmatpush2.msra.mxu0 0.0
    %1326 = vmatprep.subr.mxu0 0.0
    %1327 = vmatpush2.msra.mxu0 0.0
    %1328 = vmatprep.subr.mxu0 0.0
    %1329 = vmatpush2.msra.mxu0 0.0
    %1330 = vmatprep.subr.mxu0 0.0
    %1331 = vmatpush2.msra.mxu0 0.0
    %1332 = vmatprep.subr.mxu0 0.0
    %1333 = vmatpush2.msra.mxu0 0.0
    %1334 = vmatprep.subr.mxu0 0.0
    %1335 = vmatpush2.msra.mxu0 0.0
    %1336 = vmatprep.subr.mxu0 0.0
    %1337 = vmatpush2.msra.mxu0 0.0
    %1338 = vmatprep.subr.mxu0 0.0
    %1339 = vmatpush2.msra.mxu0 0.0
    %1340 = vmatprep.subr.mxu0 0.0
    %1341 = vmatpush2.msra.mxu0 0.0
    %1342 = vmatprep.subr.mxu0 0.0
    %1343 = vmatpush2.msra.mxu0 0.0
    %1344 = vmatprep.subr.mxu0 0.0
    %1345 = vmatpush2.msra.mxu0 0.0
    %1346 = vmatprep.subr.mxu0 0.0
    %1347 = vmatpush2.msra.mxu0 0.0
    %1348 = vmatprep.subr.mxu0 0.0
    %1349 = vmatpush2.msra.mxu0 0.0
    %1350 = vmatprep.subr.mxu0 0.0
    %1351 = vmatpush2.msra.mxu0 0.0
    %1352 = vmatprep.subr.mxu0 0.0
    %1353 = vmatpush2.msra.mxu0 0.0
    %1354 = vmatprep.subr.mxu0 0.0
    %1355 = vmatpush2.msra.mxu0 0.0
    %1356 = vmatprep.mubr.f32.mxu0 0.0
    %1357 = vmatmul.mubr.f32.gmra.mxu0 %v1275
    %v1358 = vpop.f32.mrf.mxu0
    %v1359 = vadd.f32 0.0, %v1358
    %v1360 = vpop.f32.mrf.mxu0
    %v1361 = vadd.f32 0.0, %v1360
    %1362 = vdwg.mxu0
    %1363 = vmatprep.subr.mxu0 %v494
    %1364 = vmatpush1.msra.mxu0 %v493
    %1365 = vmatprep.subr.mxu0 %v490
    %1366 = vmatpush1.msra.mxu0 %v489
    %1367 = vmatprep.subr.mxu0 %v486
    %1368 = vmatpush1.msra.mxu0 %v485
    %1369 = vmatprep.subr.mxu0 %v482
    %1370 = vmatpush1.msra.mxu0 %v481
    %1371 = vmatprep.subr.mxu0 %v478
    %1372 = vmatpush1.msra.mxu0 %v477
    %1373 = vmatprep.subr.mxu0 %v474
    %1374 = vmatpush1.msra.mxu0 %v473
    %1375 = vmatprep.subr.mxu0 %v470
    %1376 = vmatpush1.msra.mxu0 %v469
    %1377 = vmatprep.subr.mxu0 %v466
    %1378 = vmatpush1.msra.mxu0 %v465
    %1379 = vmatprep.subr.mxu0 %v462
    %1380 = vmatpush1.msra.mxu0 %v461
    %1381 = vmatprep.subr.mxu0 %v458
    %1382 = vmatpush1.msra.mxu0 %v457
    %1383 = vmatprep.subr.mxu0 %v454
    %1384 = vmatpush1.msra.mxu0 %v453
    %1385 = vmatprep.subr.mxu0 %v450
    %1386 = vmatpush1.msra.mxu0 %v449
    %1387 = vmatprep.subr.mxu0 %v446
    %1388 = vmatpush1.msra.mxu0 %v445
    %1389 = vmatprep.subr.mxu0 %v442
    %1390 = vmatpush1.msra.mxu0 %v441
    %1391 = vmatprep.subr.mxu0 %v438
    %1392 = vmatpush1.msra.mxu0 %v437
    %1393 = vmatprep.subr.mxu0 %v434
    %1394 = vmatpush1.msra.mxu0 %v433
    %1395 = vmatprep.subr.mxu0 0.0
    %1396 = vmatpush2.msra.mxu0 0.0
    %1397 = vmatprep.subr.mxu0 0.0
    %1398 = vmatpush2.msra.mxu0 0.0
    %1399 = vmatprep.subr.mxu0 0.0
    %1400 = vmatpush2.msra.mxu0 0.0
    %1401 = vmatprep.subr.mxu0 0.0
    %1402 = vmatpush2.msra.mxu0 0.0
    %1403 = vmatprep.subr.mxu0 0.0
    %1404 = vmatpush2.msra.mxu0 0.0
    %1405 = vmatprep.subr.mxu0 0.0
    %1406 = vmatpush2.msra.mxu0 0.0
    %1407 = vmatprep.subr.mxu0 0.0
    %1408 = vmatpush2.msra.mxu0 0.0
    %1409 = vmatprep.subr.mxu0 0.0
    %1410 = vmatpush2.msra.mxu0 0.0
    %1411 = vmatprep.subr.mxu0 0.0
    %1412 = vmatpush2.msra.mxu0 0.0
    %1413 = vmatprep.subr.mxu0 0.0
    %1414 = vmatpush2.msra.mxu0 0.0
    %1415 = vmatprep.subr.mxu0 0.0
    %1416 = vmatpush2.msra.mxu0 0.0
    %1417 = vmatprep.subr.mxu0 0.0
    %1418 = vmatpush2.msra.mxu0 0.0
    %1419 = vmatprep.subr.mxu0 0.0
    %1420 = vmatpush2.msra.mxu0 0.0
    %1421 = vmatprep.subr.mxu0 0.0
    %1422 = vmatpush2.msra.mxu0 0.0
    %1423 = vmatprep.subr.mxu0 0.0
    %1424 = vmatpush2.msra.mxu0 0.0
    %1425 = vmatprep.subr.mxu0 0.0
    %1426 = vmatpush2.msra.mxu0 0.0
    %1427 = vmatprep.mubr.f32.mxu0 0.0
    %1428 = vmatmul.mubr.f32.gmra.mxu0 %v1275
    %v1429 = vpop.f32.mrf.mxu0
    %v1430 = vadd.f32 0.0, %v1429
    %v1431 = vpop.f32.mrf.mxu0
    %v1432 = vadd.f32 0.0, %v1431
    %1433 = vdwg.mxu0
    %v1434 = vadd.f32 %v1288, %v1359
    %v1435 = vadd.f32 %v1289, %v1361
    %v1436 = vadd.f32 %v1290, %v1430
    %v1437 = vadd.f32 %v1291, %v1432
    %v1438 = vmul.f32 %v1434, 0.5
    %v1439 = vtanh.pop %v1438
    %v1440 = vmul.f32 %v1439, 0.5
    %v1441 = vadd.f32 %v1440, 0.5
    %v1442 = vmul.f32 %v1435, 0.5
    %v1443 = vtanh.pop %v1442
    %v1444 = vmul.f32 %v1443, 0.5
    %v1445 = vadd.f32 %v1444, 0.5
    %v1446 = vtanh.pop %v1436
    %v1447 = vmul.f32 %v1437, 0.5
    %v1448 = vtanh.pop %v1447
    %v1449 = vmul.f32 %v1448, 0.5
    %v1450 = vadd.f32 %v1449, 0.5
    %v1451 = vmul.f32 %v1445, %v1273
    %v1452 = vmul.f32 %v1441, %v1446
    %v1453 = vadd.f32 %v1451, %v1452
    %v1454 = vtanh.pop %v1453
    %v1455 = vmul.f32 %v1450, %v1454
    %1456 = vst.msk [vmem:[%s1278] sm:$0xff] %vm729, %v1455
    %1457 = vst.msk [vmem:[%s1276] sm:$0xff] %vm732, %v1455
    %v1458 = vld [vmem:[%s921] sm:$0xff]
    %v1459 = vld [vmem:[%s921 + $0x8] sm:$0xff]
    %v1460 = vld [vmem:[%s921 + $0x10] sm:$0xff]
    %v1461 = vld [vmem:[%s921 + $0x18] sm:$0xff]
    %v1462 = vld [vmem:[%s916] sm:$0xff]
    %v1463 = vld [vmem:[%s916 + $0x8] sm:$0xff]
    %v1464 = vld [vmem:[%s916 + $0x10] sm:$0xff]
    %v1465 = vld [vmem:[%s916 + $0x18] sm:$0xff]
    %v1466 = vsel %vm548, %v1458, %v1462
    %v1467 = vsel %vm549, %v1459, %v1463
    %v1468 = vsel %vm550, %v1460, %v1464
    %v1469 = vsel %vm551, %v1461, %v1465
    %1470 = vmatprep.subr.mxu0 %v492
    %1471 = vmatpush1.msra.mxu0 %v491
    %1472 = vmatprep.subr.mxu0 %v488
    %1473 = vmatpush1.msra.mxu0 %v487
    %1474 = vmatprep.subr.mxu0 %v484
    %1475 = vmatpush1.msra.mxu0 %v483
    %1476 = vmatprep.subr.mxu0 %v480
    %1477 = vmatpush1.msra.mxu0 %v479
    %1478 = vmatprep.subr.mxu0 %v476
    %1479 = vmatpush1.msra.mxu0 %v475
    %1480 = vmatprep.subr.mxu0 %v472
    %1481 = vmatpush1.msra.mxu0 %v471
    %1482 = vmatprep.subr.mxu0 %v468
    %1483 = vmatpush1.msra.mxu0 %v467
    %1484 = vmatprep.subr.mxu0 %v464
    %1485 = vmatpush1.msra.mxu0 %v463
    %1486 = vmatprep.subr.mxu0 %v460
    %1487 = vmatpush1.msra.mxu0 %v459
    %1488 = vmatprep.subr.mxu0 %v456
    %1489 = vmatpush1.msra.mxu0 %v455
    %1490 = vmatprep.subr.mxu0 %v452
    %1491 = vmatpush1.msra.mxu0 %v451
    %1492 = vmatprep.subr.mxu0 %v448
    %1493 = vmatpush1.msra.mxu0 %v447
    %1494 = vmatprep.subr.mxu0 %v444
    %1495 = vmatpush1.msra.mxu0 %v443
    %1496 = vmatprep.subr.mxu0 %v440
    %1497 = vmatpush1.msra.mxu0 %v439
    %1498 = vmatprep.subr.mxu0 %v436
    %1499 = vmatpush1.msra.mxu0 %v435
    %1500 = vmatprep.subr.mxu0 %v432
    %1501 = vmatpush1.msra.mxu0 %v431
    %1502 = vmatprep.subr.mxu0 0.0
    %1503 = vmatpush2.msra.mxu0 0.0
    %1504 = vmatprep.subr.mxu0 0.0
    %1505 = vmatpush2.msra.mxu0 0.0
    %1506 = vmatprep.subr.mxu0 0.0
    %1507 = vmatpush2.msra.mxu0 0.0
    %1508 = vmatprep.subr.mxu0 0.0
    %1509 = vmatpush2.msra.mxu0 0.0
    %1510 = vmatprep.subr.mxu0 0.0
    %1511 = vmatpush2.msra.mxu0 0.0
    %1512 = vmatprep.subr.mxu0 0.0
    %1513 = vmatpush2.msra.mxu0 0.0
    %1514 = vmatprep.subr.mxu0 0.0
    %1515 = vmatpush2.msra.mxu0 0.0
    %1516 = vmatprep.subr.mxu0 0.0
    %1517 = vmatpush2.msra.mxu0 0.0
    %1518 = vmatprep.subr.mxu0 0.0
    %1519 = vmatpush2.msra.mxu0 0.0
    %1520 = vmatprep.subr.mxu0 0.0
    %1521 = vmatpush2.msra.mxu0 0.0
    %1522 = vmatprep.subr.mxu0 0.0
    %1523 = vmatpush2.msra.mxu0 0.0
    %1524 = vmatprep.subr.mxu0 0.0
    %1525 = vmatpush2.msra.mxu0 0.0
    %1526 = vmatprep.subr.mxu0 0.0
    %1527 = vmatpush2.msra.mxu0 0.0
    %1528 = vmatprep.subr.mxu0 0.0
    %1529 = vmatpush2.msra.mxu0 0.0
    %1530 = vmatprep.subr.mxu0 0.0
    %1531 = vmatpush2.msra.mxu0 0.0
    %1532 = vmatprep.subr.mxu0 0.0
    %1533 = vmatpush2.msra.mxu0 0.0
    %1534 = vmatprep.mubr.f32.mxu0 0.0
    %1535 = vmatmul.mubr.f32.gmra.mxu0 %v1455
    %v1536 = vpop.f32.mrf.mxu0
    %v1537 = vadd.f32 0.0, %v1536
    %v1538 = vpop.f32.mrf.mxu0
    %v1539 = vadd.f32 0.0, %v1538
    %1540 = vdwg.mxu0
    %1541 = vmatprep.subr.mxu0 %v494
    %1542 = vmatpush1.msra.mxu0 %v493
    %1543 = vmatprep.subr.mxu0 %v490
    %1544 = vmatpush1.msra.mxu0 %v489
    %1545 = vmatprep.subr.mxu0 %v486
    %1546 = vmatpush1.msra.mxu0 %v485
    %1547 = vmatprep.subr.mxu0 %v482
    %1548 = vmatpush1.msra.mxu0 %v481
    %1549 = vmatprep.subr.mxu0 %v478
    %1550 = vmatpush1.msra.mxu0 %v477
    %1551 = vmatprep.subr.mxu0 %v474
    %1552 = vmatpush1.msra.mxu0 %v473
    %1553 = vmatprep.subr.mxu0 %v470
    %1554 = vmatpush1.msra.mxu0 %v469
    %1555 = vmatprep.subr.mxu0 %v466
    %1556 = vmatpush1.msra.mxu0 %v465
    %1557 = vmatprep.subr.mxu0 %v462
    %1558 = vmatpush1.msra.mxu0 %v461
    %1559 = vmatprep.subr.mxu0 %v458
    %1560 = vmatpush1.msra.mxu0 %v457
    %1561 = vmatprep.subr.mxu0 %v454
    %1562 = vmatpush1.msra.mxu0 %v453
    %1563 = vmatprep.subr.mxu0 %v450
    %1564 = vmatpush1.msra.mxu0 %v449
    %1565 = vmatprep.subr.mxu0 %v446
    %1566 = vmatpush1.msra.mxu0 %v445
    %1567 = vmatprep.subr.mxu0 %v442
    %1568 = vmatpush1.msra.mxu0 %v441
    %1569 = vmatprep.subr.mxu0 %v438
    %1570 = vmatpush1.msra.mxu0 %v437
    %1571 = vmatprep.subr.mxu0 %v434
    %1572 = vmatpush1.msra.mxu0 %v433
    %1573 = vmatprep.subr.mxu0 0.0
    %1574 = vmatpush2.msra.mxu0 0.0
    %1575 = vmatprep.subr.mxu0 0.0
    %1576 = vmatpush2.msra.mxu0 0.0
    %1577 = vmatprep.subr.mxu0 0.0
    %1578 = vmatpush2.msra.mxu0 0.0
    %1579 = vmatprep.subr.mxu0 0.0
    %1580 = vmatpush2.msra.mxu0 0.0
    %1581 = vmatprep.subr.mxu0 0.0
    %1582 = vmatpush2.msra.mxu0 0.0
    %1583 = vmatprep.subr.mxu0 0.0
    %1584 = vmatpush2.msra.mxu0 0.0
    %1585 = vmatprep.subr.mxu0 0.0
    %1586 = vmatpush2.msra.mxu0 0.0
    %1587 = vmatprep.subr.mxu0 0.0
    %1588 = vmatpush2.msra.mxu0 0.0
    %1589 = vmatprep.subr.mxu0 0.0
    %1590 = vmatpush2.msra.mxu0 0.0
    %1591 = vmatprep.subr.mxu0 0.0
    %1592 = vmatpush2.msra.mxu0 0.0
    %1593 = vmatprep.subr.mxu0 0.0
    %1594 = vmatpush2.msra.mxu0 0.0
    %1595 = vmatprep.subr.mxu0 0.0
    %1596 = vmatpush2.msra.mxu0 0.0
    %1597 = vmatprep.subr.mxu0 0.0
    %1598 = vmatpush2.msra.mxu0 0.0
    %1599 = vmatprep.subr.mxu0 0.0
    %1600 = vmatpush2.msra.mxu0 0.0
    %1601 = vmatprep.subr.mxu0 0.0
    %1602 = vmatpush2.msra.mxu0 0.0
    %1603 = vmatprep.subr.mxu0 0.0
    %1604 = vmatpush2.msra.mxu0 0.0
    %1605 = vmatprep.mubr.f32.mxu0 0.0
    %1606 = vmatmul.mubr.f32.gmra.mxu0 %v1455
    %v1607 = vpop.f32.mrf.mxu0
    %v1608 = vadd.f32 0.0, %v1607
    %v1609 = vpop.f32.mrf.mxu0
    %v1610 = vadd.f32 0.0, %v1609
    %1611 = vdwg.mxu0
    %v1612 = vadd.f32 %v1466, %v1537
    %v1613 = vadd.f32 %v1467, %v1539
    %v1614 = vadd.f32 %v1468, %v1608
    %v1615 = vadd.f32 %v1469, %v1610
    %v1616 = vmul.f32 %v1612, 0.5
    %v1617 = vtanh.pop %v1616
    %v1618 = vmul.f32 %v1617, 0.5
    %v1619 = vadd.f32 %v1618, 0.5
    %v1620 = vmul.f32 %v1613, 0.5
    %v1621 = vtanh.pop %v1620
    %v1622 = vmul.f32 %v1621, 0.5
    %v1623 = vadd.f32 %v1622, 0.5
    %v1624 = vtanh.pop %v1614
    %v1625 = vmul.f32 %v1615, 0.5
    %v1626 = vtanh.pop %v1625
    %v1627 = vmul.f32 %v1626, 0.5
    %v1628 = vadd.f32 %v1627, 0.5
    %v1629 = vmul.f32 %v1623, %v1453
    %v1630 = vmul.f32 %v1619, %v1624
    %v1631 = vadd.f32 %v1629, %v1630
    %v1632 = vtanh.pop %v1631
    %v1633 = vmul.f32 %v1628, %v1632
    %1634 = vst.msk [vmem:[%s1096] sm:$0xff] %vm729, %v1633
    %1635 = vst.msk [vmem:[%s1094] sm:$0xff] %vm732, %v1633
    %v1636 = vld [vmem:[%s739] sm:$0xff]
    %v1637 = vld [vmem:[%s739 + $0x8] sm:$0xff]
    %v1638 = vld [vmem:[%s739 + $0x10] sm:$0xff]
    %v1639 = vld [vmem:[%s739 + $0x18] sm:$0xff]
    %v1640 = vld [vmem:[%s734] sm:$0xff]
    %v1641 = vld [vmem:[%s734 + $0x8] sm:$0xff]
    %v1642 = vld [vmem:[%s734 + $0x10] sm:$0xff]
    %v1643 = vld [vmem:[%s734 + $0x18] sm:$0xff]
    %v1644 = vsel %vm548, %v1636, %v1640
    %v1645 = vsel %vm549, %v1637, %v1641
    %v1646 = vsel %vm550, %v1638, %v1642
    %v1647 = vsel %vm551, %v1639, %v1643
    %1648 = vmatprep.subr.mxu0 %v492
    %1649 = vmatpush1.msra.mxu0 %v491
    %1650 = vmatprep.subr.mxu0 %v488
    %1651 = vmatpush1.msra.mxu0 %v487
    %1652 = vmatprep.subr.mxu0 %v484
    %1653 = vmatpush1.msra.mxu0 %v483
    %1654 = vmatprep.subr.mxu0 %v480
    %1655 = vmatpush1.msra.mxu0 %v479
    %1656 = vmatprep.subr.mxu0 %v476
    %1657 = vmatpush1.msra.mxu0 %v475
    %1658 = vmatprep.subr.mxu0 %v472
    %1659 = vmatpush1.msra.mxu0 %v471
    %1660 = vmatprep.subr.mxu0 %v468
    %1661 = vmatpush1.msra.mxu0 %v467
    %1662 = vmatprep.subr.mxu0 %v464
    %1663 = vmatpush1.msra.mxu0 %v463
    %1664 = vmatprep.subr.mxu0 %v460
    %1665 = vmatpush1.msra.mxu0 %v459
    %1666 = vmatprep.subr.mxu0 %v456
    %1667 = vmatpush1.msra.mxu0 %v455
    %1668 = vmatprep.subr.mxu0 %v452
    %1669 = vmatpush1.msra.mxu0 %v451
    %1670 = vmatprep.subr.mxu0 %v448
    %1671 = vmatpush1.msra.mxu0 %v447
    %1672 = vmatprep.subr.mxu0 %v444
    %1673 = vmatpush1.msra.mxu0 %v443
    %1674 = vmatprep.subr.mxu0 %v440
    %1675 = vmatpush1.msra.mxu0 %v439
    %1676 = vmatprep.subr.mxu0 %v436
    %1677 = vmatpush1.msra.mxu0 %v435
    %1678 = vmatprep.subr.mxu0 %v432
    %1679 = vmatpush1.msra.mxu0 %v431
    %1680 = vmatprep.subr.mxu0 0.0
    %1681 = vmatpush2.msra.mxu0 0.0
    %1682 = vmatprep.subr.mxu0 0.0
    %1683 = vmatpush2.msra.mxu0 0.0
    %1684 = vmatprep.subr.mxu0 0.0
    %1685 = vmatpush2.msra.mxu0 0.0
    %1686 = vmatprep.subr.mxu0 0.0
    %1687 = vmatpush2.msra.mxu0 0.0
    %1688 = vmatprep.subr.mxu0 0.0
    %1689 = vmatpush2.msra.mxu0 0.0
    %1690 = vmatprep.subr.mxu0 0.0
    %1691 = vmatpush2.msra.mxu0 0.0
    %1692 = vmatprep.subr.mxu0 0.0
    %1693 = vmatpush2.msra.mxu0 0.0
    %1694 = vmatprep.subr.mxu0 0.0
    %1695 = vmatpush2.msra.mxu0 0.0
    %1696 = vmatprep.subr.mxu0 0.0
    %1697 = vmatpush2.msra.mxu0 0.0
    %1698 = vmatprep.subr.mxu0 0.0
    %1699 = vmatpush2.msra.mxu0 0.0
    %1700 = vmatprep.subr.mxu0 0.0
    %1701 = vmatpush2.msra.mxu0 0.0
    %1702 = vmatprep.subr.mxu0 0.0
    %1703 = vmatpush2.msra.mxu0 0.0
    %1704 = vmatprep.subr.mxu0 0.0
    %1705 = vmatpush2.msra.mxu0 0.0
    %1706 = vmatprep.subr.mxu0 0.0
    %1707 = vmatpush2.msra.mxu0 0.0
    %1708 = vmatprep.subr.mxu0 0.0
    %1709 = vmatpush2.msra.mxu0 0.0
    %1710 = vmatprep.subr.mxu0 0.0
    %1711 = vmatpush2.msra.mxu0 0.0
    %1712 = vmatprep.mubr.f32.mxu0 0.0
    %1713 = vmatmul.mubr.f32.gmra.mxu0 %v1633
    %v1714 = vpop.f32.mrf.mxu0
    %v1715 = vadd.f32 0.0, %v1714
    %v1716 = vpop.f32.mrf.mxu0
    %v1717 = vadd.f32 0.0, %v1716
    %1718 = vdwg.mxu0
    %1719 = vmatprep.subr.mxu0 %v494
    %1720 = vmatpush1.msra.mxu0 %v493
    %1721 = vmatprep.subr.mxu0 %v490
    %1722 = vmatpush1.msra.mxu0 %v489
    %1723 = vmatprep.subr.mxu0 %v486
    %1724 = vmatpush1.msra.mxu0 %v485
    %1725 = vmatprep.subr.mxu0 %v482
    %1726 = vmatpush1.msra.mxu0 %v481
    %1727 = vmatprep.subr.mxu0 %v478
    %1728 = vmatpush1.msra.mxu0 %v477
    %1729 = vmatprep.subr.mxu0 %v474
    %1730 = vmatpush1.msra.mxu0 %v473
    %1731 = vmatprep.subr.mxu0 %v470
    %1732 = vmatpush1.msra.mxu0 %v469
    %1733 = vmatprep.subr.mxu0 %v466
    %1734 = vmatpush1.msra.mxu0 %v465
    %1735 = vmatprep.subr.mxu0 %v462
    %1736 = vmatpush1.msra.mxu0 %v461
    %1737 = vmatprep.subr.mxu0 %v458
    %1738 = vmatpush1.msra.mxu0 %v457
    %1739 = vmatprep.subr.mxu0 %v454
    %1740 = vmatpush1.msra.mxu0 %v453
    %1741 = vmatprep.subr.mxu0 %v450
    %1742 = vmatpush1.msra.mxu0 %v449
    %1743 = vmatprep.subr.mxu0 %v446
    %1744 = vmatpush1.msra.mxu0 %v445
    %1745 = vmatprep.subr.mxu0 %v442
    %1746 = vmatpush1.msra.mxu0 %v441
    %1747 = vmatprep.subr.mxu0 %v438
    %1748 = vmatpush1.msra.mxu0 %v437
    %1749 = vmatprep.subr.mxu0 %v434
    %1750 = vmatpush1.msra.mxu0 %v433
    %1751 = vmatprep.subr.mxu0 0.0
    %1752 = vmatpush2.msra.mxu0 0.0
    %1753 = vmatprep.subr.mxu0 0.0
    %1754 = vmatpush2.msra.mxu0 0.0
    %1755 = vmatprep.subr.mxu0 0.0
    %1756 = vmatpush2.msra.mxu0 0.0
    %1757 = vmatprep.subr.mxu0 0.0
    %1758 = vmatpush2.msra.mxu0 0.0
    %1759 = vmatprep.subr.mxu0 0.0
    %1760 = vmatpush2.msra.mxu0 0.0
    %1761 = vmatprep.subr.mxu0 0.0
    %1762 = vmatpush2.msra.mxu0 0.0
    %1763 = vmatprep.subr.mxu0 0.0
    %1764 = vmatpush2.msra.mxu0 0.0
    %1765 = vmatprep.subr.mxu0 0.0
    %1766 = vmatpush2.msra.mxu0 0.0
    %1767 = vmatprep.subr.mxu0 0.0
    %1768 = vmatpush2.msra.mxu0 0.0
    %1769 = vmatprep.subr.mxu0 0.0
    %1770 = vmatpush2.msra.mxu0 0.0
    %1771 = vmatprep.subr.mxu0 0.0
    %1772 = vmatpush2.msra.mxu0 0.0
    %1773 = vmatprep.subr.mxu0 0.0
    %1774 = vmatpush2.msra.mxu0 0.0
    %1775 = vmatprep.subr.mxu0 0.0
    %1776 = vmatpush2.msra.mxu0 0.0
    %1777 = vmatprep.subr.mxu0 0.0
    %1778 = vmatpush2.msra.mxu0 0.0
    %1779 = vmatprep.subr.mxu0 0.0
    %1780 = vmatpush2.msra.mxu0 0.0
    %1781 = vmatprep.subr.mxu0 0.0
    %1782 = vmatpush2.msra.mxu0 0.0
    %1783 = vmatprep.mubr.f32.mxu0 0.0
    %1784 = vmatmul.mubr.f32.gmra.mxu0 %v1633
    %v1785 = vpop.f32.mrf.mxu0
    %v1786 = vadd.f32 0.0, %v1785
    %v1787 = vpop.f32.mrf.mxu0
    %v1788 = vadd.f32 0.0, %v1787
    %1789 = vdwg.mxu0
    %v1790 = vadd.f32 %v1644, %v1715
    %v1791 = vadd.f32 %v1645, %v1717
    %v1792 = vadd.f32 %v1646, %v1786
    %v1793 = vadd.f32 %v1647, %v1788
    %v1794 = vmul.f32 %v1790, 0.5
    %v1795 = vtanh.pop %v1794
    %v1796 = vmul.f32 %v1795, 0.5
    %v1797 = vadd.f32 %v1796, 0.5
    %v1798 = vmul.f32 %v1791, 0.5
    %v1799 = vtanh.pop %v1798
    %v1800 = vmul.f32 %v1799, 0.5
    %v1801 = vadd.f32 %v1800, 0.5
    %v1802 = vtanh.pop %v1792
    %v1803 = vmul.f32 %v1793, 0.5
    %v1804 = vtanh.pop %v1803
    %v1805 = vmul.f32 %v1804, 0.5
    %v1806 = vadd.f32 %v1805, 0.5
    %v1807 = vmul.f32 %v1801, %v1631
    %v1808 = vmul.f32 %v1797, %v1802
    %v1809 = vadd.f32 %v1807, %v1808
    %v1810 = vtanh.pop %v1809
    %v1811 = vmul.f32 %v1806, %v1810
    %1812 = vst.msk [vmem:[%s914] sm:$0xff] %vm729, %v1811
    %1813 = vst.msk [vmem:[%s912] sm:$0xff] %vm732, %v1811
    %v1814 = vld [vmem:[%s556] sm:$0xff]
    %v1815 = vld [vmem:[%s556 + $0x8] sm:$0xff]
    %v1816 = vld [vmem:[%s556 + $0x10] sm:$0xff]
    %v1817 = vld [vmem:[%s556 + $0x18] sm:$0xff]
    %v1818 = vld [vmem:[#allocation2] sm:$0xff]
    %v1819 = vld [vmem:[#allocation2 + $0x8] sm:$0xff]
    %v1820 = vld [vmem:[#allocation2 + $0x10] sm:$0xff]
    %v1821 = vld [vmem:[#allocation2 + $0x18] sm:$0xff]
    %v1822 = vsel %vm548, %v1814, %v1818
    %v1823 = vsel %vm549, %v1815, %v1819
    %v1824 = vsel %vm550, %v1816, %v1820
    %v1825 = vsel %vm551, %v1817, %v1821
    %1826 = vmatprep.subr.mxu0 %v492
    %1827 = vmatpush1.msra.mxu0 %v491
    %1828 = vmatprep.subr.mxu0 %v488
    %1829 = vmatpush1.msra.mxu0 %v487
    %1830 = vmatprep.subr.mxu0 %v484
    %1831 = vmatpush1.msra.mxu0 %v483
    %1832 = vmatprep.subr.mxu0 %v480
    %1833 = vmatpush1.msra.mxu0 %v479
    %1834 = vmatprep.subr.mxu0 %v476
    %1835 = vmatpush1.msra.mxu0 %v475
    %1836 = vmatprep.subr.mxu0 %v472
    %1837 = vmatpush1.msra.mxu0 %v471
    %1838 = vmatprep.subr.mxu0 %v468
    %1839 = vmatpush1.msra.mxu0 %v467
    %1840 = vmatprep.subr.mxu0 %v464
    %1841 = vmatpush1.msra.mxu0 %v463
    %1842 = vmatprep.subr.mxu0 %v460
    %1843 = vmatpush1.msra.mxu0 %v459
    %1844 = vmatprep.subr.mxu0 %v456
    %1845 = vmatpush1.msra.mxu0 %v455
    %1846 = vmatprep.subr.mxu0 %v452
    %1847 = vmatpush1.msra.mxu0 %v451
    %1848 = vmatprep.subr.mxu0 %v448
    %1849 = vmatpush1.msra.mxu0 %v447
    %1850 = vmatprep.subr.mxu0 %v444
    %1851 = vmatpush1.msra.mxu0 %v443
    %1852 = vmatprep.subr.mxu0 %v440
    %1853 = vmatpush1.msra.mxu0 %v439
    %1854 = vmatprep.subr.mxu0 %v436
    %1855 = vmatpush1.msra.mxu0 %v435
    %1856 = vmatprep.subr.mxu0 %v432
    %1857 = vmatpush1.msra.mxu0 %v431
    %1858 = vmatprep.subr.mxu0 0.0
    %1859 = vmatpush2.msra.mxu0 0.0
    %1860 = vmatprep.subr.mxu0 0.0
    %1861 = vmatpush2.msra.mxu0 0.0
    %1862 = vmatprep.subr.mxu0 0.0
    %1863 = vmatpush2.msra.mxu0 0.0
    %1864 = vmatprep.subr.mxu0 0.0
    %1865 = vmatpush2.msra.mxu0 0.0
    %1866 = vmatprep.subr.mxu0 0.0
    %1867 = vmatpush2.msra.mxu0 0.0
    %1868 = vmatprep.subr.mxu0 0.0
    %1869 = vmatpush2.msra.mxu0 0.0
    %1870 = vmatprep.subr.mxu0 0.0
    %1871 = vmatpush2.msra.mxu0 0.0
    %1872 = vmatprep.subr.mxu0 0.0
    %1873 = vmatpush2.msra.mxu0 0.0
    %1874 = vmatprep.subr.mxu0 0.0
    %1875 = vmatpush2.msra.mxu0 0.0
    %1876 = vmatprep.subr.mxu0 0.0
    %1877 = vmatpush2.msra.mxu0 0.0
    %1878 = vmatprep.subr.mxu0 0.0
    %1879 = vmatpush2.msra.mxu0 0.0
    %1880 = vmatprep.subr.mxu0 0.0
    %1881 = vmatpush2.msra.mxu0 0.0
    %1882 = vmatprep.subr.mxu0 0.0
    %1883 = vmatpush2.msra.mxu0 0.0
    %1884 = vmatprep.subr.mxu0 0.0
    %1885 = vmatpush2.msra.mxu0 0.0
    %1886 = vmatprep.subr.mxu0 0.0
    %1887 = vmatpush2.msra.mxu0 0.0
    %1888 = vmatprep.subr.mxu0 0.0
    %1889 = vmatpush2.msra.mxu0 0.0
    %1890 = vmatprep.mubr.f32.mxu0 0.0
    %1891 = vmatmul.mubr.f32.gmra.mxu0 %v1811
    %v1892 = vpop.f32.mrf.mxu0
    %v1893 = vadd.f32 0.0, %v1892
    %v1894 = vpop.f32.mrf.mxu0
    %v1895 = vadd.f32 0.0, %v1894
    %1896 = vdwg.mxu0
    %1897 = vmatprep.subr.mxu0 %v494
    %1898 = vmatpush1.msra.mxu0 %v493
    %1899 = vmatprep.subr.mxu0 %v490
    %1900 = vmatpush1.msra.mxu0 %v489
    %1901 = vmatprep.subr.mxu0 %v486
    %1902 = vmatpush1.msra.mxu0 %v485
    %1903 = vmatprep.subr.mxu0 %v482
    %1904 = vmatpush1.msra.mxu0 %v481
    %1905 = vmatprep.subr.mxu0 %v478
    %1906 = vmatpush1.msra.mxu0 %v477
    %1907 = vmatprep.subr.mxu0 %v474
    %1908 = vmatpush1.msra.mxu0 %v473
    %1909 = vmatprep.subr.mxu0 %v470
    %1910 = vmatpush1.msra.mxu0 %v469
    %1911 = vmatprep.subr.mxu0 %v466
    %1912 = vmatpush1.msra.mxu0 %v465
    %1913 = vmatprep.subr.mxu0 %v462
    %1914 = vmatpush1.msra.mxu0 %v461
    %1915 = vmatprep.subr.mxu0 %v458
    %1916 = vmatpush1.msra.mxu0 %v457
    %1917 = vmatprep.subr.mxu0 %v454
    %1918 = vmatpush1.msra.mxu0 %v453
    %1919 = vmatprep.subr.mxu0 %v450
    %1920 = vmatpush1.msra.mxu0 %v449
    %1921 = vmatprep.subr.mxu0 %v446
    %1922 = vmatpush1.msra.mxu0 %v445
    %1923 = vmatprep.subr.mxu0 %v442
    %1924 = vmatpush1.msra.mxu0 %v441
    %1925 = vmatprep.subr.mxu0 %v438
    %1926 = vmatpush1.msra.mxu0 %v437
    %1927 = vmatprep.subr.mxu0 %v434
    %1928 = vmatpush1.msra.mxu0 %v433
    %1929 = vmatprep.subr.mxu0 0.0
    %1930 = vmatpush2.msra.mxu0 0.0
    %1931 = vmatprep.subr.mxu0 0.0
    %1932 = vmatpush2.msra.mxu0 0.0
    %1933 = vmatprep.subr.mxu0 0.0
    %1934 = vmatpush2.msra.mxu0 0.0
    %1935 = vmatprep.subr.mxu0 0.0
    %1936 = vmatpush2.msra.mxu0 0.0
    %1937 = vmatprep.subr.mxu0 0.0
    %1938 = vmatpush2.msra.mxu0 0.0
    %1939 = vmatprep.subr.mxu0 0.0
    %1940 = vmatpush2.msra.mxu0 0.0
    %1941 = vmatprep.subr.mxu0 0.0
    %1942 = vmatpush2.msra.mxu0 0.0
    %1943 = vmatprep.subr.mxu0 0.0
    %1944 = vmatpush2.msra.mxu0 0.0
    %1945 = vmatprep.subr.mxu0 0.0
    %1946 = vmatpush2.msra.mxu0 0.0
    %1947 = vmatprep.subr.mxu0 0.0
    %1948 = vmatpush2.msra.mxu0 0.0
    %1949 = vmatprep.subr.mxu0 0.0
    %1950 = vmatpush2.msra.mxu0 0.0
    %1951 = vmatprep.subr.mxu0 0.0
    %1952 = vmatpush2.msra.mxu0 0.0
    %1953 = vmatprep.subr.mxu0 0.0
    %1954 = vmatpush2.msra.mxu0 0.0
    %1955 = vmatprep.subr.mxu0 0.0
    %1956 = vmatpush2.msra.mxu0 0.0
    %1957 = vmatprep.subr.mxu0 0.0
    %1958 = vmatpush2.msra.mxu0 0.0
    %1959 = vmatprep.subr.mxu0 0.0
    %1960 = vmatpush2.msra.mxu0 0.0
    %1961 = vmatprep.mubr.f32.mxu0 0.0
    %1962 = vmatmul.mubr.f32.gmra.mxu0 %v1811
    %v1963 = vpop.f32.mrf.mxu0
    %v1964 = vadd.f32 0.0, %v1963
    %v1965 = vpop.f32.mrf.mxu0
    %v1966 = vadd.f32 0.0, %v1965
    %1967 = vdwg.mxu0
    %v1968 = vadd.f32 %v1822, %v1893
    %v1969 = vadd.f32 %v1823, %v1895
    %v1970 = vadd.f32 %v1824, %v1964
    %v1971 = vadd.f32 %v1825, %v1966
    %v1972 = vmul.f32 %v1968, 0.5
    %v1973 = vtanh.pop %v1972
    %v1974 = vmul.f32 %v1973, 0.5
    %v1975 = vadd.f32 %v1974, 0.5
    %v1976 = vmul.f32 %v1969, 0.5
    %v1977 = vtanh.pop %v1976
    %v1978 = vmul.f32 %v1977, 0.5
    %v1979 = vadd.f32 %v1978, 0.5
    %v1980 = vtanh.pop %v1970
    %v1981 = vmul.f32 %v1971, 0.5
    %v1982 = vtanh.pop %v1981
    %v1983 = vmul.f32 %v1982, 0.5
    %v1984 = vadd.f32 %v1983, 0.5
    %v1985 = vmul.f32 %v1979, %v1809
    %v1986 = vmul.f32 %v1975, %v1980
    %v1987 = vadd.f32 %v1985, %v1986
    %v1988 = vtanh.pop %v1987
    %v1989 = vmul.f32 %v1984, %v1988
    %1990 = vst.msk [vmem:[%s731] sm:$0xff] %vm729, %v1989
    %1991 = vst.msk [vmem:[#allocation3] sm:$0xff] %vm732, %v1989
    %v1992 = vld [vmem:[#allocation3] sm:$0xff]
    %v1993 = vld [vmem:[#allocation3 + $0x8] sm:$0xff]
    %v1994 = vld [vmem:[#allocation3 + $0x10] sm:$0xff]
    %v1995 = vld [vmem:[#allocation3 + $0x18] sm:$0xff]
    %v1996 = vld [vmem:[#allocation3 + $0x20] sm:$0xff]
    %v1997 = vld [vmem:[#allocation3 + $0x28] sm:$0xff]
    %v1998 = vld [vmem:[#allocation3 + $0x30] sm:$0xff]
    %v1999 = vld [vmem:[#allocation3 + $0x38] sm:$0xff]
    %v2000 = vld [vmem:[#allocation10] sm:$0xff]
    %v2001 = vld [vmem:[#allocation10 + $0x8] sm:$0xff]
    %v2002 = vld [vmem:[#allocation10 + $0x10] sm:$0xff]
    %v2003 = vld [vmem:[#allocation10 + $0x18] sm:$0xff]
    %v2004 = vld [vmem:[#allocation10 + $0x20] sm:$0xff]
    %v2005 = vld [vmem:[#allocation10 + $0x28] sm:$0xff]
    %v2006 = vld [vmem:[#allocation10 + $0x30] sm:$0xff]
    %v2007 = vld [vmem:[#allocation10 + $0x38] sm:$0xff]
    %v2008 = vld [vmem:[#allocation10 + $0x40] sm:$0xff]
    %v2009 = vld [vmem:[#allocation10 + $0x48] sm:$0xff]
    %v2010 = vld [vmem:[#allocation10 + $0x50] sm:$0xff]
    %v2011 = vld [vmem:[#allocation10 + $0x58] sm:$0xff]
    %v2012 = vld [vmem:[#allocation10 + $0x60] sm:$0xff]
    %v2013 = vld [vmem:[#allocation10 + $0x68] sm:$0xff]
    %v2014 = vld [vmem:[#allocation10 + $0x70] sm:$0xff]
    %v2015 = vld [vmem:[#allocation10 + $0x78] sm:$0xff]
    %v2016 = vld [vmem:[%s5] sm:$0x1]
    %v2018 = vlaneseq
    %v2019 = vshrl.u32 %v2018, 7
    %v2020 = vsub.s32 0, %v2019
    %v2021 = vrot.slane %v2016, %v2020
    %2023 = vmatprep.subr.mxu0 0.0
    %2024 = vmatpush1.msra.mxu0 %v2015
    %2025 = vmatprep.subr.mxu0 0.0
    %2026 = vmatpush1.msra.mxu0 %v2014
    %2027 = vmatprep.subr.mxu0 0.0
    %2028 = vmatpush1.msra.mxu0 %v2013
    %2029 = vmatprep.subr.mxu0 0.0
    %2030 = vmatpush1.msra.mxu0 %v2012
    %2031 = vmatprep.subr.mxu0 0.0
    %2032 = vmatpush1.msra.mxu0 %v2011
    %2033 = vmatprep.subr.mxu0 0.0
    %2034 = vmatpush1.msra.mxu0 %v2010
    %2035 = vmatprep.subr.mxu0 0.0
    %2036 = vmatpush1.msra.mxu0 %v2009
    %2037 = vmatprep.subr.mxu0 0.0
    %2038 = vmatpush1.msra.mxu0 %v2008
    %2039 = vmatprep.subr.mxu0 0.0
    %2040 = vmatpush1.msra.mxu0 %v2007
    %2041 = vmatprep.subr.mxu0 0.0
    %2042 = vmatpush1.msra.mxu0 %v2006
    %2043 = vmatprep.subr.mxu0 0.0
    %2044 = vmatpush1.msra.mxu0 %v2005
    %2045 = vmatprep.subr.mxu0 0.0
    %2046 = vmatpush1.msra.mxu0 %v2004
    %2047 = vmatprep.subr.mxu0 0.0
    %2048 = vmatpush1.msra.mxu0 %v2003
    %2049 = vmatprep.subr.mxu0 0.0
    %2050 = vmatpush1.msra.mxu0 %v2002
    %2051 = vmatprep.subr.mxu0 0.0
    %2052 = vmatpush1.msra.mxu0 %v2001
    %2053 = vmatprep.subr.mxu0 0.0
    %2054 = vmatpush1.msra.mxu0 %v2000
    %2055 = vmatprep.subr.mxu0 0.0
    %2056 = vmatpush2.msra.mxu0 0.0
    %2057 = vmatprep.subr.mxu0 0.0
    %2058 = vmatpush2.msra.mxu0 0.0
    %2059 = vmatprep.subr.mxu0 0.0
    %2060 = vmatpush2.msra.mxu0 0.0
    %2061 = vmatprep.subr.mxu0 0.0
    %2062 = vmatpush2.msra.mxu0 0.0
    %2063 = vmatprep.subr.mxu0 0.0
    %2064 = vmatpush2.msra.mxu0 0.0
    %2065 = vmatprep.subr.mxu0 0.0
    %2066 = vmatpush2.msra.mxu0 0.0
    %2067 = vmatprep.subr.mxu0 0.0
    %2068 = vmatpush2.msra.mxu0 0.0
    %2069 = vmatprep.subr.mxu0 0.0
    %2070 = vmatpush2.msra.mxu0 0.0
    %2071 = vmatprep.subr.mxu0 0.0
    %2072 = vmatpush2.msra.mxu0 0.0
    %2073 = vmatprep.subr.mxu0 0.0
    %2074 = vmatpush2.msra.mxu0 0.0
    %2075 = vmatprep.subr.mxu0 0.0
    %2076 = vmatpush2.msra.mxu0 0.0
    %2077 = vmatprep.subr.mxu0 0.0
    %2078 = vmatpush2.msra.mxu0 0.0
    %2079 = vmatprep.subr.mxu0 0.0
    %2080 = vmatpush2.msra.mxu0 0.0
    %2081 = vmatprep.subr.mxu0 0.0
    %2082 = vmatpush2.msra.mxu0 0.0
    %2083 = vmatprep.subr.mxu0 0.0
    %2084 = vmatpush2.msra.mxu0 0.0
    %2085 = vmatprep.subr.mxu0 0.0
    %2086 = vmatpush2.msra.mxu0 0.0
    %2087 = vmatprep.mubr.f32.mxu0 0.0
    %2088 = vmatmul.mubr.f32.gmra.mxu0 %v1992
    %v2089 = vpop.f32.mrf.mxu0
    %v2090 = vadd.f32 %v2021, %v2089
    %v2091 = vpop.f32.mrf.mxu0
    %2092 = vmatprep.mubr.f32.mxu0 0.0
    %2093 = vmatmul.mubr.f32.gmra.mxu0 %v1993
    %v2094 = vpop.f32.mrf.mxu0
    %v2095 = vadd.f32 %v2021, %v2094
    %v2096 = vpop.f32.mrf.mxu0
    %2097 = vmatprep.mubr.f32.mxu0 0.0
    %2098 = vmatmul.mubr.f32.gmra.mxu0 %v1994
    %v2099 = vpop.f32.mrf.mxu0
    %v2100 = vadd.f32 %v2021, %v2099
    %v2101 = vpop.f32.mrf.mxu0
    %2102 = vmatprep.mubr.f32.mxu0 0.0
    %2103 = vmatmul.mubr.f32.gmra.mxu0 %v1995
    %v2104 = vpop.f32.mrf.mxu0
    %v2105 = vadd.f32 %v2021, %v2104
    %v2106 = vpop.f32.mrf.mxu0
    %2107 = vmatprep.mubr.f32.mxu0 0.0
    %2108 = vmatmul.mubr.f32.gmra.mxu0 %v1996
    %v2109 = vpop.f32.mrf.mxu0
    %v2110 = vadd.f32 %v2021, %v2109
    %v2111 = vpop.f32.mrf.mxu0
    %2112 = vmatprep.mubr.f32.mxu0 0.0
    %2113 = vmatmul.mubr.f32.gmra.mxu0 %v1997
    %v2114 = vpop.f32.mrf.mxu0
    %v2115 = vadd.f32 %v2021, %v2114
    %v2116 = vpop.f32.mrf.mxu0
    %2117 = vmatprep.mubr.f32.mxu0 0.0
    %2118 = vmatmul.mubr.f32.gmra.mxu0 %v1998
    %v2119 = vpop.f32.mrf.mxu0
    %v2120 = vadd.f32 %v2021, %v2119
    %v2121 = vpop.f32.mrf.mxu0
    %2122 = vmatprep.mubr.f32.mxu0 0.0
    %2123 = vmatmul.mubr.f32.gmra.mxu0 %v1999
    %v2124 = vpop.f32.mrf.mxu0
    %v2125 = vadd.f32 %v2021, %v2124
    %v2126 = vpop.f32.mrf.mxu0
    %2127 = vdwg.mxu0
    %2128 = vst [vmem:[#allocation12] sm:$0xff] %v2090
    %2129 = vst [vmem:[#allocation12 + $0x8] sm:$0xff] %v2095
    %2130 = vst [vmem:[#allocation12 + $0x10] sm:$0xff] %v2100
    %2131 = vst [vmem:[#allocation12 + $0x18] sm:$0xff] %v2105
    %2132 = vst [vmem:[#allocation12 + $0x20] sm:$0xff] %v2110
    %2133 = vst [vmem:[#allocation12 + $0x28] sm:$0xff] %v2115
    %2134 = vst [vmem:[#allocation12 + $0x30] sm:$0xff] %v2120
    %2135 = vst [vmem:[#allocation12 + $0x38] sm:$0xff] %v2125
    // Predicated region
    $region42: #{tpu_custom_call.1} parent=1 // pred_check
      _
    $region43: #{tpu_custom_call.1} parent=1 // pred_check_branch
      %2137 = sbr.rel (0) target = $region45
    $region44: #{tpu_custom_call.1} parent=1 // pred_region
      %s2139 = ssub.s32 1024, 1024
      %2140 = vsyncadd [#allocation6], %s2139
      %s2141 = sshll.u32 [#allocation12], 4
      %s2142 = int_to_ptr.vmem [resolvable:$true] %s2141
      %2147 = dma.vmem_to_hbm [thread:$0]  %s2142, 1024, %s6, [#allocation6], 128, 128, 8
    $region45: #{tpu_custom_call.1} parent=1 // pred_fallthru
      _
    // Predicated region
    $region46: #{tpu_custom_call.1} parent=1 // pred_check
      _
    $region47: #{tpu_custom_call.1} parent=1 // pred_check_branch
      %2149 = sbr.rel (0) target = $region49
    $region48: #{tpu_custom_call.1} parent=1 // pred_region
      %2150 = dma.done [#allocation6], 1024
    $region49: #{tpu_custom_call.1} parent=1 // pred_fallthru
      _
    %2151 = vsyncpa [#allocation5], 1
    %2152 = vsyncpa [#allocation8], 1
    %2153 = vsyncpa [#allocation11], 1
    %2154 = vsyncpa [#allocation6], 1

</llo_original>
